<compile_context>
chip_gen: v6e
topology: v6e:2x2x1
jax: 0.10.0
libtpu: 0.0.40
codegen_flags: <defaults>
</compile_context>

<pallas_src>
import functools
import math

import jax
import jax.numpy as jnp
from jax import lax
from jax.experimental import pallas as pl
from jax.experimental.pallas import tpu as pltpu

_EPS = 1e-5
_NEG_INF = -1e9            # finite mask constant (scores kept in f32)


# ---------------------------------------------------------------------------
# Chip-aware knobs
# ---------------------------------------------------------------------------

@functools.lru_cache(maxsize=None)
def _vmem_limit():
    """~75% of physical VMEM: ~96 MiB on v5e/v6e (128 MiB), ~48 MiB on v7x (64 MiB)."""
    try:
        cap = int(pltpu.get_tpu_info().vmem_capacity_bytes)
    except Exception:
        cap = 64 * 1024 * 1024          # conservative fallback (v7x-sized)
    return min(cap * 3 // 4, 100 * 1024 * 1024)


def _cparams(*dimension_semantics):
    return pltpu.CompilerParams(
        dimension_semantics=dimension_semantics,
        vmem_limit_bytes=_vmem_limit(),
    )


def _probe_kernel(x_ref, o_ref):
    o_ref[...] = x_ref[...]


@functools.lru_cache(maxsize=None)
def _single_buffer_mode():
    """pl.Buffered(1): keep constant-index resident weights single-buffered
    (halves their VMEM footprint — matters on v7x's 64 MiB).  Probed once via
    lower+compile; falls back to default double-buffering if unsupported."""
    try:
        mode = pl.Buffered(1)
        fn = pl.pallas_call(
            _probe_kernel,
            grid=(2,),
            in_specs=[pl.BlockSpec((8, 128), lambda i: (0, 0), pipeline_mode=mode)],
            out_specs=pl.BlockSpec((8, 128), lambda i: (i, 0)),
            out_shape=jax.ShapeDtypeStruct((16, 128), jnp.float32),
        )
        jax.jit(fn).lower(jax.ShapeDtypeStruct((8, 128), jnp.float32)).compile()
        return mode
    except Exception:
        return None


def _resident_spec(shape):
    """BlockSpec for a weight/bias resident across the whole grid (constant index)."""
    idx = lambda *args: tuple(0 for _ in shape)
    mode = _single_buffer_mode()
    if mode is None:
        return pl.BlockSpec(shape, idx)
    return pl.BlockSpec(shape, idx, pipeline_mode=mode)


def _pick_tile(dim, target):
    """Largest tile <= target that divides dim (multiple of 8 when possible)."""
    # TODO(synk): for awkward T (no multiple-of-8 divisor) this falls back to the
    # full dim; pad T to a multiple of 128 + mask the tail for long sequences.
    if dim <= target:
        return dim
    for t in range(target, 7, -8):
        if dim % t == 0:
            return t
    return dim


# ---------------------------------------------------------------------------
# Kernel 1: fused LayerNorm + QKV projection -> lane-dense (B, T, D) Q/K/V
# ---------------------------------------------------------------------------

def _ln_qkv_kernel(x_ref, g_ref, b_ref, w_ref, bias_ref, q_ref, k_ref, v_ref, *, d):
    x = x_ref[0]                                                   # (tq, D) f32
    mu = jnp.mean(x, axis=-1, keepdims=True)
    var = jnp.mean(jnp.square(x - mu), axis=-1, keepdims=True)
    h = (x - mu) * lax.rsqrt(var + _EPS) * g_ref[...] + b_ref[...]
    qkv = jnp.dot(h.astype(jnp.bfloat16), w_ref[...],
                  preferred_element_type=jnp.float32) + bias_ref[...]   # (tq, 3D) f32
    # Full-D lane slabs (no per-head masked stores).  The 1/sqrt(dh) softmax
    # scale is pre-folded into the Q columns of w_qkv / b_qkv.
    q_ref[0] = qkv[:, :d].astype(q_ref.dtype)
    k_ref[0] = qkv[:, d:2 * d].astype(k_ref.dtype)
    v_ref[0] = qkv[:, 2 * d:].astype(v_ref.dtype)


def ln_qkv(x, blk, *, tq):
    b, t, d = x.shape
    grid = (b, t // tq)
    out_spec = pl.BlockSpec((1, tq, d), lambda bi, ti: (bi, ti, 0))
    ce = pl.CostEstimate(
        flops=2 * b * t * d * 3 * d,
        transcendentals=b * t,
        bytes_accessed=4 * b * t * d + 2 * d * 3 * d + 3 * 2 * b * t * d,
    )
    return pl.pallas_call(
        functools.partial(_ln_qkv_kernel, d=d),
        grid=grid,
        in_specs=[
            pl.BlockSpec((1, tq, d), lambda bi, ti: (bi, ti, 0)),   # x rows (pipelined)
            _resident_spec((1, d)),                                  # ln1 gamma
            _resident_spec((1, d)),                                  # ln1 beta
            _resident_spec((d, 3 * d)),                              # w_qkv (resident)
            _resident_spec((1, 3 * d)),                              # b_qkv
        ],
        out_specs=[out_spec, out_spec, out_spec],
        out_shape=[jax.ShapeDtypeStruct((b, t, d), jnp.bfloat16)] * 3,
        compiler_params=_cparams("parallel", "parallel"),
        cost_estimate=ce,
    )(x, blk["ln1_g"].reshape(1, d), blk["ln1_b"].reshape(1, d),
      blk["w_qkv"], blk["b_qkv"].reshape(1, 3 * d))


# ---------------------------------------------------------------------------
# Kernel 2: flash attention — flattened causal tile schedule, heads in-kernel
# ---------------------------------------------------------------------------

def _flash_kernel(qi_tbl, ki_tbl, last_tbl, kvfull_tbl,
                  q_ref, k_ref, v_ref, mask_ref, o_ref,
                  m_scr, l_scr, acc_scr,
                  *, num_heads, dh, tq, tk, n_kv):
    b = pl.program_id(0)
    s = pl.program_id(1)
    qi = qi_tbl[s]
    ki = ki_tbl[s]

    @pl.when(ki == 0)
    def _init():
        m_scr[...] = jnp.full(m_scr.shape, -jnp.inf, jnp.float32)
        l_scr[...] = jnp.zeros(l_scr.shape, jnp.float32)
        acc_scr[...] = jnp.zeros(acc_scr.shape, jnp.float32)

    # Fast path: kv tile fully below the causal diagonal AND every key valid
    # -> skip iota / compare / select mask construction entirely.
    interior = ((ki * tk + (tk - 1)) <= qi * tq) & (kvfull_tbl[b * n_kv + ki] == 1)

    def update(masked):
        q = q_ref[0]                                               # (tq, D) bf16
        k = k_ref[0]                                               # (tk, D) bf16
        v = v_ref[0]                                               # (tk, D) bf16
        if masked:
            row = qi * tq + lax.broadcasted_iota(jnp.int32, (tq, tk), 0)
            col = ki * tk + lax.broadcasted_iota(jnp.int32, (tq, tk), 1)
            keep = (col <= row) & (mask_ref[0] > 0.5)              # causal & key padding
        for h in range(num_heads):
            lo, hi = h * dh, (h + 1) * dh
            sc = lax.dot_general(q[:, lo:hi], k[:, lo:hi],
                                 (((1,), (1,)), ((), ())),
                                 preferred_element_type=jnp.float32)     # (tq, tk) f32
            if masked:
                sc = jnp.where(keep, sc, _NEG_INF)
            m_prev = m_scr[h]
            m_new = jnp.maximum(m_prev, jnp.max(sc, axis=-1, keepdims=True))
            alpha = jnp.exp(m_prev - m_new)
            p = jnp.exp(sc - m_new)
            l_scr[h] = alpha * l_scr[h] + jnp.sum(p, axis=-1, keepdims=True)
            acc_scr[h] = alpha * acc_scr[h] + jnp.dot(
                p.astype(jnp.bfloat16), v[:, lo:hi],
                preferred_element_type=jnp.float32)
            m_scr[h] = m_new

    @pl.when(interior)
    def _fast():
        update(masked=False)

    @pl.when(jnp.logical_not(interior))
    def _masked():
        update(masked=True)

    @pl.when(last_tbl[s] == 1)
    def _finalize():
        # Head re-assembly happens once per q tile (epilogue), then one
        # lane-dense (tq, D) store.
        outs = [acc_scr[h] / l_scr[h] for h in range(num_heads)]
        o_ref[0] = jnp.concatenate(outs, axis=-1).astype(o_ref.dtype)


def flash_attention(q, k, v, mask_keys, kv_full, *, num_heads, tq, tk):
    b, t, d = q.shape
    dh = d // num_heads
    n_q, n_kv = t // tq, t // tk

    # Static lower-triangular (q-tile, kv-tile) schedule: causally-dead kv tiles
    # are never DMA'd.  last_tbl marks the final kv step of each q tile.
    qi_l, ki_l, last_l = [], [], []
    for qi in range(n_q):
        k_last = min(n_kv - 1, (qi * tq + tq - 1) // tk)
        for kj in range(k_last + 1):
            qi_l.append(qi)
            ki_l.append(kj)
            last_l.append(1 if kj == k_last else 0)
    n_pairs = len(qi_l)
    qi_tbl = jnp.asarray(qi_l, jnp.int32)
    ki_tbl = jnp.asarray(ki_l, jnp.int32)
    last_tbl = jnp.asarray(last_l, jnp.int32)

    ce = pl.CostEstimate(
        flops=4 * b * num_heads * tq * tk * dh * n_pairs,
        transcendentals=b * num_heads * tq * tk * n_pairs,
        bytes_accessed=(2 * 2 * b * t * d                 # q in + o out (bf16)
                        + 2 * 2 * b * n_pairs * tk * d    # k, v DMAs (bf16)
                        + 4 * b * n_pairs * tk),          # mask
    )

    grid_spec = pltpu.PrefetchScalarGridSpec(
        num_scalar_prefetch=4,
        grid=(b, n_pairs),
        in_specs=[
            pl.BlockSpec((1, tq, d), lambda bi, s, qt, kt, lt, kf: (bi, qt[s], 0)),
            pl.BlockSpec((1, tk, d), lambda bi, s, qt, kt, lt, kf: (bi, kt[s], 0)),
            pl.BlockSpec((1, tk, d), lambda bi, s, qt, kt, lt, kf: (bi, kt[s], 0)),
            pl.BlockSpec((1, 1, tk), lambda bi, s, qt, kt, lt, kf: (bi, 0, kt[s])),
        ],
        out_specs=pl.BlockSpec((1, tq, d), lambda bi, s, qt, kt, lt, kf: (bi, qt[s], 0)),
        scratch_shapes=[
            pltpu.VMEM((num_heads, tq, 1), jnp.float32),    # running max (per head)
            pltpu.VMEM((num_heads, tq, 1), jnp.float32),    # running denom
            pltpu.VMEM((num_heads, tq, dh), jnp.float32),   # output accumulator
        ],
    )
    return pl.pallas_call(
        functools.partial(_flash_kernel, num_heads=num_heads, dh=dh,
                          tq=tq, tk=tk, n_kv=n_kv),
        grid_spec=grid_spec,
        out_shape=jax.ShapeDtypeStruct((b, t, d), jnp.bfloat16),
        compiler_params=_cparams("parallel", "arbitrary"),
        cost_estimate=ce,
    )(qi_tbl, ki_tbl, last_tbl, kv_full, q, k, v, mask_keys)


# ---------------------------------------------------------------------------
# Kernel 3: fused attention out-proj + residual + LN2 + MLP (fc/GELU/proj) + residual
# ---------------------------------------------------------------------------

def _attn_mlp_kernel(a_ref, x_ref, wo_ref, bo_ref, g_ref, b_ref,
                     wfc_ref, bfc_ref, wpr_ref, bpr_ref, o_ref):
    # Attention output projection + residual (single lane-dense (tq,D)@(D,D) dot;
    # no head concatenate — attention output is already (B,T,D)).
    y = jnp.dot(a_ref[0], wo_ref[...], preferred_element_type=jnp.float32) + bo_ref[...]
    x1 = x_ref[0] + y                                              # f32 residual
    # LayerNorm 2 (f32 statistics)
    mu = jnp.mean(x1, axis=-1, keepdims=True)
    var = jnp.mean(jnp.square(x1 - mu), axis=-1, keepdims=True)
    h = (x1 - mu) * lax.rsqrt(var + _EPS) * g_ref[...] + b_ref[...]
    # MLP: fc -> gelu_new (tanh approx, GPT-2) -> proj, bf16 MXU, f32 accum
    f = jnp.dot(h.astype(jnp.bfloat16), wfc_ref[...],
                preferred_element_type=jnp.float32) + bfc_ref[...]
    f = jax.nn.gelu(f, approximate=True)
    y2 = jnp.dot(f.astype(jnp.bfloat16), wpr_ref[...],
                 preferred_element_type=jnp.float32) + bpr_ref[...]
    o_ref[0] = x1 + y2


def attn_mlp_residual(a, x, blk, *, tq):
    b, t, d = x.shape
    d_ff = blk["w_fc"].shape[1]
    grid = (b, t // tq)
    ce = pl.CostEstimate(
        flops=2 * b * t * d * (d + 2 * d_ff),
        transcendentals=b * t * (d_ff + 1),
        bytes_accessed=(2 * b * t * d + 4 * b * t * d + 4 * b * t * d
                        + 2 * (d * d + 2 * d * d_ff)),
    )
    return pl.pallas_call(
        _attn_mlp_kernel,
        grid=grid,
        in_specs=[
            pl.BlockSpec((1, tq, d), lambda bi, ti: (bi, ti, 0)),   # attn out (bf16)
            pl.BlockSpec((1, tq, d), lambda bi, ti: (bi, ti, 0)),   # residual x (f32)
            _resident_spec((d, d)),                                  # w_o
            _resident_spec((1, d)),                                  # b_o
            _resident_spec((1, d)),                                  # ln2 gamma
            _resident_spec((1, d)),                                  # ln2 beta
            _resident_spec((d, d_ff)),                               # w_fc
            _resident_spec((1, d_ff)),                               # b_fc
            _resident_spec((d_ff, d)),                               # w_proj
            _resident_spec((1, d)),                                  # b_proj
        ],
        out_specs=pl.BlockSpec((1, tq, d), lambda bi, ti: (bi, ti, 0)),
        out_shape=jax.ShapeDtypeStruct((b, t, d), jnp.float32),
        compiler_params=_cparams("parallel", "parallel"),
        cost_estimate=ce,
    )(a, x, blk["w_o"], blk["b_o"].reshape(1, d),
      blk["ln2_g"].reshape(1, d), blk["ln2_b"].reshape(1, d),
      blk["w_fc"], blk["b_fc"].reshape(1, d_ff),
      blk["w_proj"], blk["b_proj"].reshape(1, d))


# ---------------------------------------------------------------------------
# Kernel 4: final LayerNorm + masked mean pooling + 2-way head (accumulator)
# ---------------------------------------------------------------------------

def _ln_pool_head_kernel(x_ref, mask_ref, g_ref, b_ref, w_ref, bias_ref, o_ref,
                         sum_ref, cnt_ref):
    ti = pl.program_id(1)

    @pl.when(ti == 0)
    def _():
        sum_ref[...] = jnp.zeros(sum_ref.shape, jnp.float32)
        cnt_ref[...] = jnp.zeros(cnt_ref.shape, jnp.float32)

    x = x_ref[0]                                                   # (tq, D) f32
    mu = jnp.mean(x, axis=-1, keepdims=True)
    var = jnp.mean(jnp.square(x - mu), axis=-1, keepdims=True)
    h = (x - mu) * lax.rsqrt(var + _EPS) * g_ref[...] + b_ref[...]
    m = mask_ref[0]                                                # (tq, 1)
    sum_ref[...] += jnp.sum(h * m, axis=0, keepdims=True)          # (1, D)
    cnt_ref[...] += jnp.sum(m, axis=0, keepdims=True)              # (1, 1)

    @pl.when(ti == pl.num_programs(1) - 1)
    def _():
        denom = jnp.where(cnt_ref[...] == 0.0, 1e-8, cnt_ref[...])  # mask_sum==0 -> 1e-8
        mean = sum_ref[...] / denom
        # Five dropout(p=0.3)+Linear passes averaged == single Linear at inference.
        # TODO(synk): training-mode stochastic dropout over the 5 passes not modeled.
        o_ref[0] = jnp.dot(mean.astype(jnp.bfloat16), w_ref[...],
                           preferred_element_type=jnp.float32) + bias_ref[...]


def ln_pool_head(x, mask_pool, params, *, tq):
    b, t, d = x.shape
    grid = (b, t // tq)
    out = pl.pallas_call(
        _ln_pool_head_kernel,
        grid=grid,
        in_specs=[
            pl.BlockSpec((1, tq, d), lambda bi, ti: (bi, ti, 0)),
            pl.BlockSpec((1, tq, 1), lambda bi, ti: (bi, ti, 0)),
            _resident_spec((1, d)),
            _resident_spec((1, d)),
            _resident_spec((d, 2)),
            _resident_spec((1, 2)),
        ],
        out_specs=pl.BlockSpec((1, 1, 2), lambda bi, ti: (bi, 0, 0)),
        out_shape=jax.ShapeDtypeStruct((b, 1, 2), jnp.float32),
        scratch_shapes=[
            pltpu.VMEM((1, d), jnp.float32),    # masked hidden-state sum
            pltpu.VMEM((1, 1), jnp.float32),    # mask count
        ],
        compiler_params=_cparams("parallel", "arbitrary"),
    )(x, mask_pool, params["lnf_g"].reshape(1, d), params["lnf_b"].reshape(1, d),
      params["head_w"], params["head_b"].reshape(1, 2))
    return out.reshape(b, 2)


# ---------------------------------------------------------------------------
# Parameters (deterministic, synthetic)
# ---------------------------------------------------------------------------

def init_params(key, *, vocab, max_pos, d, l, num_heads):
    del num_heads
    std = 0.02
    keys = jax.random.split(key, 3 + l)
    params = {
        "wte": jax.random.normal(keys[0], (vocab, d), jnp.float32) * std,
        "wpe": jax.random.normal(keys[1], (max_pos, d), jnp.float32) * std,
        "lnf_g": jnp.ones((d,), jnp.float32),
        "lnf_b": jnp.zeros((d,), jnp.float32),
        "head_w": jax.random.normal(keys[2], (d, 2), jnp.float32) * std,
        "head_b": jnp.zeros((2,), jnp.float32),
        "blocks": [],
    }
    for i in range(l):
        bk = jax.random.split(keys[3 + i], 4)
        params["blocks"].append({
            "ln1_g": jnp.ones((d,), jnp.float32), "ln1_b": jnp.zeros((d,), jnp.float32),
            "w_qkv": jax.random.normal(bk[0], (d, 3 * d), jnp.float32) * std,
            "b_qkv": jnp.zeros((3 * d,), jnp.float32),
            "w_o": jax.random.normal(bk[1], (d, d), jnp.float32) * std,
            "b_o": jnp.zeros((d,), jnp.float32),
            "ln2_g": jnp.ones((d,), jnp.float32), "ln2_b": jnp.zeros((d,), jnp.float32),
            "w_fc": jax.random.normal(bk[2], (d, 4 * d), jnp.float32) * std,
            "b_fc": jnp.zeros((4 * d,), jnp.float32),
            "w_proj": jax.random.normal(bk[3], (4 * d, d), jnp.float32) * std,
            "b_proj": jnp.zeros((d,), jnp.float32),
        })
    return params


def prepare_params(params, *, num_heads):
    """One-time: fold 1/sqrt(dh) into the Q projection, cast matmul weights to bf16."""
    _single_buffer_mode()    # warm chip probes eagerly (outside any jit trace)
    _vmem_limit()
    d = params["wte"].shape[1]
    dh = d // num_heads
    scale = 1.0 / math.sqrt(dh)
    p = dict(params)
    p["head_w"] = params["head_w"].astype(jnp.bfloat16)
    blocks = []
    for blk in params["blocks"]:
        nb = dict(blk)
        w_qkv = blk["w_qkv"].at[:, :d].multiply(scale)       # scale Q columns
        b_qkv = blk["b_qkv"].at[:d].multiply(scale)
        nb["w_qkv"] = w_qkv.astype(jnp.bfloat16)
        nb["b_qkv"] = b_qkv
        for name in ("w_o", "w_fc", "w_proj"):
            nb[name] = blk[name].astype(jnp.bfloat16)
        blocks.append(nb)
    p["blocks"] = blocks
    return p


# ---------------------------------------------------------------------------
# Forward pass (embedding gather is glue; everything else is fused Pallas)
# ---------------------------------------------------------------------------

def paraphrase_gpt_forward(params, input_ids, attention_mask, *, num_heads):
    b, t = input_ids.shape
    d = params["wte"].shape[1]
    mask_f = attention_mask.astype(jnp.float32)

    # Embeddings (gather done in plain JAX).
    x = params["wte"][input_ids] + params["wpe"][jnp.arange(t)][None, :, :]   # (B,T,D) f32

    tq = _pick_tile(t, 256)      # row tile for row-tiled kernels / flash q tile
    tk = _pick_tile(t, 512)      # kv tile for flash attention
    n_kv = t // tk

    mask_keys = mask_f.reshape(b, 1, t)       # key padding mask for attention
    mask_pool = mask_f.reshape(b, t, 1)       # token mask for mean pooling
    # Per-(batch, kv-tile) "all keys valid" flag (flattened for SMEM) -> enables
    # the flash kernel's unmasked fast path on interior tiles.
    kv_full = (jnp.min(mask_f.reshape(b, n_kv, tk), axis=-1) > 0.5).astype(
        jnp.int32).reshape(-1)

    for blk in params["blocks"]:
        q, k, v = ln_qkv(x, blk, tq=tq)
        a = flash_attention(q, k, v, mask_keys, kv_full,
                            num_heads=num_heads, tq=tq, tk=tk)
        x = attn_mlp_residual(a, x, blk, tq=tq)

    return ln_pool_head(x, mask_pool, params, tq=tq)


# ---------------------------------------------------------------------------

if __name__ == "__main__":
    B, T, D, H, L = 2, 8, 32, 2, 2
    VOCAB, MAX_POS = 64, 32

    root = jax.random.PRNGKey(0)
    k_params, k_ids = jax.random.split(root)

    params = prepare_params(
        init_params(k_params, vocab=VOCAB, max_pos=MAX_POS, d=D, l=L, num_heads=H),
        num_heads=H)

    input_ids = jax.random.randint(k_ids, (B, T), 0, VOCAB, dtype=jnp.int32)
    attention_mask = jnp.array(
        [[1, 1, 1, 1, 1, 1, 0, 0],
         [1, 1, 1, 1, 1, 1, 1, 1]], dtype=jnp.int32)

    fwd = jax.jit(functools.partial(paraphrase_gpt_forward, num_heads=H))
    logits = jax.block_until_ready(fwd(params, input_ids, attention_mask))

    assert logits.shape == (B, 2) and logits.dtype == jnp.float32
    assert bool(jnp.all(jnp.isfinite(logits)))
    print("KERNEL_OK")
</pallas_src>

<mosaic_0001>
module attributes {stable_mosaic.version = 11 : i64} {
  func.func @_ln_qkv_kernel(%arg0: i32, %arg1: i32, %arg2: memref<1x8x32xf32, #tpu.memory_space<vmem>>, %arg3: memref<1x32xf32, #tpu.memory_space<vmem>>, %arg4: memref<1x32xf32, #tpu.memory_space<vmem>>, %arg5: memref<32x96xbf16, #tpu.memory_space<vmem>>, %arg6: memref<1x96xf32, #tpu.memory_space<vmem>>, %arg7: memref<1x8x32xbf16, #tpu.memory_space<vmem>>, %arg8: memref<1x8x32xbf16, #tpu.memory_space<vmem>>, %arg9: memref<1x8x32xbf16, #tpu.memory_space<vmem>>) attributes {dimension_semantics = [#tpu.dimension_semantics<parallel>, #tpu.dimension_semantics<parallel>], iteration_bounds = array<i64: 2, 1>, scalar_prefetch = 0 : i64, scratch_operands = 0 : i64, tpu.core_type = #tpu.core_type<tc>, window_params = [{transform_indices = @transform_0, window_bounds = array<i64: 1, 8, 32>}, {pipeline_mode = #tpu.pipeline_mode<synchronous>, transform_indices = @transform_1, window_bounds = array<i64: 1, 32>}, {pipeline_mode = #tpu.pipeline_mode<synchronous>, transform_indices = @transform_2, window_bounds = array<i64: 1, 32>}, {pipeline_mode = #tpu.pipeline_mode<synchronous>, transform_indices = @transform_3, window_bounds = array<i64: 32, 96>}, {pipeline_mode = #tpu.pipeline_mode<synchronous>, transform_indices = @transform_4, window_bounds = array<i64: 1, 96>}, {transform_indices = @transform_5, window_bounds = array<i64: 1, 8, 32>}, {transform_indices = @transform_6, window_bounds = array<i64: 1, 8, 32>}, {transform_indices = @transform_7, window_bounds = array<i64: 1, 8, 32>}]} {
    %c0 = arith.constant 0 : index
    %c0_0 = arith.constant 0 : index
    %c0_1 = arith.constant 0 : index
    %0 = vector.load %arg2[%c0, %c0_0, %c0_1] : memref<1x8x32xf32, #tpu.memory_space<vmem>>, vector<1x8x32xf32>
    %1 = vector.shape_cast %0 : vector<1x8x32xf32> to vector<8x32xf32>
    %cst = arith.constant dense<0.000000e+00> : vector<8xf32>
    %2 = vector.multi_reduction <add>, %1, %cst [1] : vector<8x32xf32> to vector<8xf32>
    %3 = vector.shape_cast %2 : vector<8xf32> to vector<8x1xf32>
    %cst_2 = arith.constant 3.200000e+01 : f32
    %4 = vector.broadcast %cst_2 : f32 to vector<8x1xf32>
    %5 = arith.divf %3, %4 : vector<8x1xf32>
    %6 = vector.broadcast %5 : vector<8x1xf32> to vector<8x32xf32>
    %7 = arith.subf %1, %6 : vector<8x32xf32>
    %8 = arith.mulf %7, %7 : vector<8x32xf32>
    %cst_3 = arith.constant dense<0.000000e+00> : vector<8xf32>
    %9 = vector.multi_reduction <add>, %8, %cst_3 [1] : vector<8x32xf32> to vector<8xf32>
    %10 = vector.shape_cast %9 : vector<8xf32> to vector<8x1xf32>
    %cst_4 = arith.constant 3.200000e+01 : f32
    %11 = vector.broadcast %cst_4 : f32 to vector<8x1xf32>
    %12 = arith.divf %10, %11 : vector<8x1xf32>
    %13 = vector.broadcast %5 : vector<8x1xf32> to vector<8x32xf32>
    %14 = arith.subf %1, %13 : vector<8x32xf32>
    %cst_5 = arith.constant 9.99999974E-6 : f32
    %15 = vector.broadcast %cst_5 : f32 to vector<8x1xf32>
    %16 = arith.addf %12, %15 : vector<8x1xf32>
    %17 = math.rsqrt %16 : vector<8x1xf32>
    %18 = vector.broadcast %17 : vector<8x1xf32> to vector<8x32xf32>
    %19 = arith.mulf %14, %18 : vector<8x32xf32>
    %c0_6 = arith.constant 0 : index
    %c0_7 = arith.constant 0 : index
    %20 = vector.load %arg3[%c0_6, %c0_7] : memref<1x32xf32, #tpu.memory_space<vmem>>, vector<1x32xf32>
    %21 = vector.broadcast %20 : vector<1x32xf32> to vector<8x32xf32>
    %22 = arith.mulf %19, %21 : vector<8x32xf32>
    %c0_8 = arith.constant 0 : index
    %c0_9 = arith.constant 0 : index
    %23 = vector.load %arg4[%c0_8, %c0_9] : memref<1x32xf32, #tpu.memory_space<vmem>>, vector<1x32xf32>
    %24 = vector.broadcast %23 : vector<1x32xf32> to vector<8x32xf32>
    %25 = arith.addf %22, %24 : vector<8x32xf32>
    %26 = arith.truncf %25 : vector<8x32xf32> to vector<8x32xbf16>
    %c0_10 = arith.constant 0 : index
    %c0_11 = arith.constant 0 : index
    %27 = vector.load %arg5[%c0_10, %c0_11] : memref<32x96xbf16, #tpu.memory_space<vmem>>, vector<32x96xbf16>
    %cst_12 = arith.constant dense<0.000000e+00> : vector<8x96xf32>
    %28 = tpu.matmul %26, %27, %cst_12 {dimension_numbers = #tpu.dot_dimension_numbers<[1], [0], [0], [1], [0, 0, 1, 1], [], []>} : vector<8x32xbf16>, vector<32x96xbf16>, vector<8x96xf32> -> vector<8x96xf32>
    %c0_13 = arith.constant 0 : index
    %c0_14 = arith.constant 0 : index
    %29 = vector.load %arg6[%c0_13, %c0_14] : memref<1x96xf32, #tpu.memory_space<vmem>>, vector<1x96xf32>
    %30 = vector.broadcast %29 : vector<1x96xf32> to vector<8x96xf32>
    %31 = arith.addf %28, %30 : vector<8x96xf32>
    %32 = vector.extract_strided_slice %31 {offsets = [0, 0], sizes = [8, 32], strides = [1, 1]} : vector<8x96xf32> to vector<8x32xf32>
    %33 = arith.truncf %32 : vector<8x32xf32> to vector<8x32xbf16>
    %c0_15 = arith.constant 0 : index
    %c0_16 = arith.constant 0 : index
    %c0_17 = arith.constant 0 : index
    %34 = vector.load %arg7[%c0_15, %c0_16, %c0_17] : memref<1x8x32xbf16, #tpu.memory_space<vmem>>, vector<1x8x32xbf16>
    %35 = vector.shape_cast %34 : vector<1x8x32xbf16> to vector<8x32xbf16>
    %36 = vector.shape_cast %33 : vector<8x32xbf16> to vector<1x8x32xbf16>
    tpu.vector_store %arg7[%c0_15, %c0_16, %c0_17], %36 {strides = array<i32>} : memref<1x8x32xbf16, #tpu.memory_space<vmem>>, vector<1x8x32xbf16>,
    %37 = vector.extract_strided_slice %31 {offsets = [0, 32], sizes = [8, 32], strides = [1, 1]} : vector<8x96xf32> to vector<8x32xf32>
    %38 = arith.truncf %37 : vector<8x32xf32> to vector<8x32xbf16>
    %c0_18 = arith.constant 0 : index
    %c0_19 = arith.constant 0 : index
    %c0_20 = arith.constant 0 : index
    %39 = vector.load %arg8[%c0_18, %c0_19, %c0_20] : memref<1x8x32xbf16, #tpu.memory_space<vmem>>, vector<1x8x32xbf16>
    %40 = vector.shape_cast %39 : vector<1x8x32xbf16> to vector<8x32xbf16>
    %41 = vector.shape_cast %38 : vector<8x32xbf16> to vector<1x8x32xbf16>
    tpu.vector_store %arg8[%c0_18, %c0_19, %c0_20], %41 {strides = array<i32>} : memref<1x8x32xbf16, #tpu.memory_space<vmem>>, vector<1x8x32xbf16>,
    %42 = vector.extract_strided_slice %31 {offsets = [0, 64], sizes = [8, 32], strides = [1, 1]} : vector<8x96xf32> to vector<8x32xf32>
    %43 = arith.truncf %42 : vector<8x32xf32> to vector<8x32xbf16>
    %c0_21 = arith.constant 0 : index
    %c0_22 = arith.constant 0 : index
    %c0_23 = arith.constant 0 : index
    %44 = vector.load %arg9[%c0_21, %c0_22, %c0_23] : memref<1x8x32xbf16, #tpu.memory_space<vmem>>, vector<1x8x32xbf16>
    %45 = vector.shape_cast %44 : vector<1x8x32xbf16> to vector<8x32xbf16>
    %46 = vector.shape_cast %43 : vector<8x32xbf16> to vector<1x8x32xbf16>
    tpu.vector_store %arg9[%c0_21, %c0_22, %c0_23], %46 {strides = array<i32>} : memref<1x8x32xbf16, #tpu.memory_space<vmem>>, vector<1x8x32xbf16>,
    return
  }
  func.func @transform_0(%arg0: i32, %arg1: i32) -> (i32, i32, i32) {
    %c0_i32 = arith.constant 0 : i32
    %c0_i32_0 = arith.constant 0 : i32
    return %arg0, %arg1, %c0_i32 : i32, i32, i32
  }
  func.func @transform_1(%arg0: i32, %arg1: i32) -> (i32, i32) {
    %c0_i32 = arith.constant 0 : i32
    %c0_i32_0 = arith.constant 0 : i32
    %c0_i32_1 = arith.constant 0 : i32
    return %c0_i32, %c0_i32_0 : i32, i32
  }
  func.func @transform_2(%arg0: i32, %arg1: i32) -> (i32, i32) {
    %c0_i32 = arith.constant 0 : i32
    %c0_i32_0 = arith.constant 0 : i32
    %c0_i32_1 = arith.constant 0 : i32
    return %c0_i32, %c0_i32_0 : i32, i32
  }
  func.func @transform_3(%arg0: i32, %arg1: i32) -> (i32, i32) {
    %c0_i32 = arith.constant 0 : i32
    %c0_i32_0 = arith.constant 0 : i32
    %c0_i32_1 = arith.constant 0 : i32
    return %c0_i32, %c0_i32_0 : i32, i32
  }
  func.func @transform_4(%arg0: i32, %arg1: i32) -> (i32, i32) {
    %c0_i32 = arith.constant 0 : i32
    %c0_i32_0 = arith.constant 0 : i32
    %c0_i32_1 = arith.constant 0 : i32
    return %c0_i32, %c0_i32_0 : i32, i32
  }
  func.func @transform_5(%arg0: i32, %arg1: i32) -> (i32, i32, i32) {
    %c0_i32 = arith.constant 0 : i32
    %c0_i32_0 = arith.constant 0 : i32
    return %arg0, %arg1, %c0_i32 : i32, i32, i32
  }
  func.func @transform_6(%arg0: i32, %arg1: i32) -> (i32, i32, i32) {
    %c0_i32 = arith.constant 0 : i32
    %c0_i32_0 = arith.constant 0 : i32
    return %arg0, %arg1, %c0_i32 : i32, i32, i32
  }
  func.func @transform_7(%arg0: i32, %arg1: i32) -> (i32, i32, i32) {
    %c0_i32 = arith.constant 0 : i32
    %c0_i32_0 = arith.constant 0 : i32
    return %arg0, %arg1, %c0_i32 : i32, i32, i32
  }
}

module attributes {stable_mosaic.version = 11 : i64} {
  func.func @_flash_kernel(%arg0: i32, %arg1: i32, %arg2: memref<1xi32, #tpu.memory_space<smem>>, %arg3: memref<1xi32, #tpu.memory_space<smem>>, %arg4: memref<1xi32, #tpu.memory_space<smem>>, %arg5: memref<2xi32, #tpu.memory_space<smem>>, %arg6: memref<1x8x32xbf16, #tpu.memory_space<vmem>>, %arg7: memref<1x8x32xbf16, #tpu.memory_space<vmem>>, %arg8: memref<1x8x32xbf16, #tpu.memory_space<vmem>>, %arg9: memref<1x1x8xf32, #tpu.memory_space<vmem>>, %arg10: memref<1x8x32xbf16, #tpu.memory_space<vmem>>, %arg11: memref<2x8x1xf32, #tpu.memory_space<vmem>>, %arg12: memref<2x8x1xf32, #tpu.memory_space<vmem>>, %arg13: memref<2x8x16xf32, #tpu.memory_space<vmem>>) attributes {dimension_semantics = [#tpu.dimension_semantics<parallel>, #tpu.dimension_semantics<arbitrary>], iteration_bounds = array<i64: 2, 1>, scalar_prefetch = 4 : i64, scratch_operands = 3 : i64, tpu.core_type = #tpu.core_type<tc>, window_params = [{transform_indices = @transform_0, window_bounds = array<i64: 1, 8, 32>}, {transform_indices = @transform_1, window_bounds = array<i64: 1, 8, 32>}, {transform_indices = @transform_2, window_bounds = array<i64: 1, 8, 32>}, {transform_indices = @transform_3, window_bounds = array<i64: 1, 1, 8>}, {transform_indices = @transform_4, window_bounds = array<i64: 1, 8, 32>}]} {
    %0 = arith.index_cast %arg1 : i32 to index
    %1 = memref.load %arg2[%0] : memref<1xi32, #tpu.memory_space<smem>>
    %2 = arith.index_cast %arg1 : i32 to index
    %3 = memref.load %arg3[%2] : memref<1xi32, #tpu.memory_space<smem>>
    %c0_i32 = arith.constant 0 : i32
    %4 = arith.cmpi eq, %3, %c0_i32 : i32
    %5 = arith.extui %4 : i1 to i32
    %c0_i32_0 = arith.constant 0 : i32
    %6 = arith.cmpi ne, %5, %c0_i32_0 : i32
    scf.if %6 {
      %cst = arith.constant 0xFF800000 : f32
      %27 = vector.broadcast %cst : f32 to vector<2x8x1xf32>
      %c0 = arith.constant 0 : index
      %c0_7 = arith.constant 0 : index
      %c0_8 = arith.constant 0 : index
      %28 = vector.load %arg11[%c0, %c0_7, %c0_8] : memref<2x8x1xf32, #tpu.memory_space<vmem>>, vector<2x8x1xf32>
      tpu.vector_store %arg11[%c0, %c0_7, %c0_8], %27 {strides = array<i32>} : memref<2x8x1xf32, #tpu.memory_space<vmem>>, vector<2x8x1xf32>,
      %cst_9 = arith.constant 0.000000e+00 : f32
      %29 = vector.broadcast %cst_9 : f32 to vector<2x8x1xf32>
      %c0_10 = arith.constant 0 : index
      %c0_11 = arith.constant 0 : index
      %c0_12 = arith.constant 0 : index
      %30 = vector.load %arg12[%c0_10, %c0_11, %c0_12] : memref<2x8x1xf32, #tpu.memory_space<vmem>>, vector<2x8x1xf32>
      tpu.vector_store %arg12[%c0_10, %c0_11, %c0_12], %29 {strides = array<i32>} : memref<2x8x1xf32, #tpu.memory_space<vmem>>, vector<2x8x1xf32>,
      %cst_13 = arith.constant 0.000000e+00 : f32
      %31 = vector.broadcast %cst_13 : f32 to vector<2x8x16xf32>
      %c0_14 = arith.constant 0 : index
      %c0_15 = arith.constant 0 : index
      %c0_16 = arith.constant 0 : index
      %32 = vector.load %arg13[%c0_14, %c0_15, %c0_16] : memref<2x8x16xf32, #tpu.memory_space<vmem>>, vector<2x8x16xf32>
      tpu.vector_store %arg13[%c0_14, %c0_15, %c0_16], %31 {strides = array<i32>} : memref<2x8x16xf32, #tpu.memory_space<vmem>>, vector<2x8x16xf32>,
    } else {
    }
    %c8_i32 = arith.constant 8 : i32
    %7 = arith.muli %3, %c8_i32 : i32
    %c7_i32 = arith.constant 7 : i32
    %8 = arith.addi %7, %c7_i32 : i32
    %c8_i32_1 = arith.constant 8 : i32
    %9 = arith.muli %1, %c8_i32_1 : i32
    %10 = arith.cmpi sle, %8, %9 : i32
    %c1_i32 = arith.constant 1 : i32
    %11 = arith.muli %arg0, %c1_i32 : i32
    %12 = arith.addi %11, %3 : i32
    %13 = arith.index_cast %12 : i32 to index
    %14 = memref.load %arg5[%13] : memref<2xi32, #tpu.memory_space<smem>>
    %c1_i32_2 = arith.constant 1 : i32
    %15 = arith.cmpi eq, %14, %c1_i32_2 : i32
    %16 = arith.andi %10, %15 : i1
    %17 = arith.extui %16 : i1 to i32
    %c0_i32_3 = arith.constant 0 : i32
    %18 = arith.cmpi ne, %17, %c0_i32_3 : i32
    scf.if %18 {
      %c0 = arith.constant 0 : index
      %c0_7 = arith.constant 0 : index
      %c0_8 = arith.constant 0 : index
      %27 = vector.load %arg6[%c0, %c0_7, %c0_8] : memref<1x8x32xbf16, #tpu.memory_space<vmem>>, vector<1x8x32xbf16>
      %28 = vector.shape_cast %27 : vector<1x8x32xbf16> to vector<8x32xbf16>
      %c0_9 = arith.constant 0 : index
      %c0_10 = arith.constant 0 : index
      %c0_11 = arith.constant 0 : index
      %29 = vector.load %arg7[%c0_9, %c0_10, %c0_11] : memref<1x8x32xbf16, #tpu.memory_space<vmem>>, vector<1x8x32xbf16>
      %30 = vector.shape_cast %29 : vector<1x8x32xbf16> to vector<8x32xbf16>
      %c0_12 = arith.constant 0 : index
      %c0_13 = arith.constant 0 : index
      %c0_14 = arith.constant 0 : index
      %31 = vector.load %arg8[%c0_12, %c0_13, %c0_14] : memref<1x8x32xbf16, #tpu.memory_space<vmem>>, vector<1x8x32xbf16>
      %32 = vector.shape_cast %31 : vector<1x8x32xbf16> to vector<8x32xbf16>
      %33 = vector.extract_strided_slice %28 {offsets = [0, 0], sizes = [8, 16], strides = [1, 1]} : vector<8x32xbf16> to vector<8x16xbf16>
      %34 = vector.extract_strided_slice %30 {offsets = [0, 0], sizes = [8, 16], strides = [1, 1]} : vector<8x32xbf16> to vector<8x16xbf16>
      %cst = arith.constant dense<0.000000e+00> : vector<8x8xf32>
      %35 = tpu.matmul %33, %34, %cst {dimension_numbers = #tpu.dot_dimension_numbers<[1], [1], [0], [0], [0, 0, 1, 0], [], []>} : vector<8x16xbf16>, vector<8x16xbf16>, vector<8x8xf32> -> vector<8x8xf32>
      %c0_15 = arith.constant 0 : index
      %c0_16 = arith.constant 0 : index
      %c0_17 = arith.constant 0 : index
      %36 = vector.load %arg11[%c0_15, %c0_16, %c0_17] : memref<2x8x1xf32, #tpu.memory_space<vmem>>, vector<1x8x1xf32>
      %37 = vector.shape_cast %36 : vector<1x8x1xf32> to vector<8x1xf32>
      %cst_18 = arith.constant dense<0xFF800000> : vector<8xf32>
      %38 = vector.multi_reduction <maximumf>, %35, %cst_18 [1] : vector<8x8xf32> to vector<8xf32>
      %39 = vector.shape_cast %38 : vector<8xf32> to vector<8x1xf32>
      %40 = arith.maximumf %37, %39 : vector<8x1xf32>
      %41 = arith.subf %37, %40 : vector<8x1xf32>
      %42 = math.exp %41 : vector<8x1xf32>
      %43 = vector.broadcast %40 : vector<8x1xf32> to vector<8x8xf32>
      %44 = arith.subf %35, %43 : vector<8x8xf32>
      %45 = math.exp %44 : vector<8x8xf32>
      %c0_19 = arith.constant 0 : index
      %c0_20 = arith.constant 0 : index
      %c0_21 = arith.constant 0 : index
      %46 = vector.load %arg12[%c0_19, %c0_20, %c0_21] : memref<2x8x1xf32, #tpu.memory_space<vmem>>, vector<1x8x1xf32>
      %47 = vector.shape_cast %46 : vector<1x8x1xf32> to vector<8x1xf32>
      %48 = arith.mulf %42, %47 : vector<8x1xf32>
      %cst_22 = arith.constant dense<0.000000e+00> : vector<8xf32>
      %49 = vector.multi_reduction <add>, %45, %cst_22 [1] : vector<8x8xf32> to vector<8xf32>
      %50 = vector.shape_cast %49 : vector<8xf32> to vector<8x1xf32>
      %51 = arith.addf %48, %50 : vector<8x1xf32>
      %c0_23 = arith.constant 0 : index
      %c0_24 = arith.constant 0 : index
      %c0_25 = arith.constant 0 : index
      %52 = vector.load %arg12[%c0_23, %c0_24, %c0_25] : memref<2x8x1xf32, #tpu.memory_space<vmem>>, vector<1x8x1xf32>
      %53 = vector.shape_cast %52 : vector<1x8x1xf32> to vector<8x1xf32>
      %54 = vector.shape_cast %51 : vector<8x1xf32> to vector<1x8x1xf32>
      tpu.vector_store %arg12[%c0_23, %c0_24, %c0_25], %54 {strides = array<i32>} : memref<2x8x1xf32, #tpu.memory_space<vmem>>, vector<1x8x1xf32>,
      %c0_26 = arith.constant 0 : index
      %c0_27 = arith.constant 0 : index
      %c0_28 = arith.constant 0 : index
      %55 = vector.load %arg13[%c0_26, %c0_27, %c0_28] : memref<2x8x16xf32, #tpu.memory_space<vmem>>, vector<1x8x16xf32>
      %56 = vector.shape_cast %55 : vector<1x8x16xf32> to vector<8x16xf32>
      %57 = vector.broadcast %42 : vector<8x1xf32> to vector<8x16xf32>
      %58 = arith.mulf %57, %56 : vector<8x16xf32>
      %59 = arith.truncf %45 : vector<8x8xf32> to vector<8x8xbf16>
      %60 = vector.extract_strided_slice %32 {offsets = [0, 0], sizes = [8, 16], strides = [1, 1]} : vector<8x32xbf16> to vector<8x16xbf16>
      %cst_29 = arith.constant dense<0.000000e+00> : vector<8x16xf32>
      %61 = tpu.matmul %59, %60, %cst_29 {dimension_numbers = #tpu.dot_dimension_numbers<[1], [0], [0], [1], [0, 0, 1, 1], [], []>} : vector<8x8xbf16>, vector<8x16xbf16>, vector<8x16xf32> -> vector<8x16xf32>
      %62 = arith.addf %58, %61 : vector<8x16xf32>
      %c0_30 = arith.constant 0 : index
      %c0_31 = arith.constant 0 : index
      %c0_32 = arith.constant 0 : index
      %63 = vector.load %arg13[%c0_30, %c0_31, %c0_32] : memref<2x8x16xf32, #tpu.memory_space<vmem>>, vector<1x8x16xf32>
      %64 = vector.shape_cast %63 : vector<1x8x16xf32> to vector<8x16xf32>
      %65 = vector.shape_cast %62 : vector<8x16xf32> to vector<1x8x16xf32>
      tpu.vector_store %arg13[%c0_30, %c0_31, %c0_32], %65 {strides = array<i32>} : memref<2x8x16xf32, #tpu.memory_space<vmem>>, vector<1x8x16xf32>,
      %c0_33 = arith.constant 0 : index
      %c0_34 = arith.constant 0 : index
      %c0_35 = arith.constant 0 : index
      %66 = vector.load %arg11[%c0_33, %c0_34, %c0_35] : memref<2x8x1xf32, #tpu.memory_space<vmem>>, vector<1x8x1xf32>
      %67 = vector.shape_cast %66 : vector<1x8x1xf32> to vector<8x1xf32>
      %68 = vector.shape_cast %40 : vector<8x1xf32> to vector<1x8x1xf32>
      tpu.vector_store %arg11[%c0_33, %c0_34, %c0_35], %68 {strides = array<i32>} : memref<2x8x1xf32, #tpu.memory_space<vmem>>, vector<1x8x1xf32>,
      %69 = vector.extract_strided_slice %28 {offsets = [0, 16], sizes = [8, 16], strides = [1, 1]} : vector<8x32xbf16> to vector<8x16xbf16>
      %70 = vector.extract_strided_slice %30 {offsets = [0, 16], sizes = [8, 16], strides = [1, 1]} : vector<8x32xbf16> to vector<8x16xbf16>
      %cst_36 = arith.constant dense<0.000000e+00> : vector<8x8xf32>
      %71 = tpu.matmul %69, %70, %cst_36 {dimension_numbers = #tpu.dot_dimension_numbers<[1], [1], [0], [0], [0, 0, 1, 0], [], []>} : vector<8x16xbf16>, vector<8x16xbf16>, vector<8x8xf32> -> vector<8x8xf32>
      %c1 = arith.constant 1 : index
      %c0_37 = arith.constant 0 : index
      %c0_38 = arith.constant 0 : index
      %72 = vector.load %arg11[%c1, %c0_37, %c0_38] : memref<2x8x1xf32, #tpu.memory_space<vmem>>, vector<1x8x1xf32>
      %73 = vector.shape_cast %72 : vector<1x8x1xf32> to vector<8x1xf32>
      %cst_39 = arith.constant dense<0xFF800000> : vector<8xf32>
      %74 = vector.multi_reduction <maximumf>, %71, %cst_39 [1] : vector<8x8xf32> to vector<8xf32>
      %75 = vector.shape_cast %74 : vector<8xf32> to vector<8x1xf32>
      %76 = arith.maximumf %73, %75 : vector<8x1xf32>
      %77 = arith.subf %73, %76 : vector<8x1xf32>
      %78 = math.exp %77 : vector<8x1xf32>
      %79 = vector.broadcast %76 : vector<8x1xf32> to vector<8x8xf32>
      %80 = arith.subf %71, %79 : vector<8x8xf32>
      %81 = math.exp %80 : vector<8x8xf32>
      %c1_40 = arith.constant 1 : index
      %c0_41 = arith.constant 0 : index
      %c0_42 = arith.constant 0 : index
      %82 = vector.load %arg12[%c1_40, %c0_41, %c0_42] : memref<2x8x1xf32, #tpu.memory_space<vmem>>, vector<1x8x1xf32>
      %83 = vector.shape_cast %82 : vector<1x8x1xf32> to vector<8x1xf32>
      %84 = arith.mulf %78, %83 : vector<8x1xf32>
      %cst_43 = arith.constant dense<0.000000e+00> : vector<8xf32>
      %85 = vector.multi_reduction <add>, %81, %cst_43 [1] : vector<8x8xf32> to vector<8xf32>
      %86 = vector.shape_cast %85 : vector<8xf32> to vector<8x1xf32>
      %87 = arith.addf %84, %86 : vector<8x1xf32>
      %c1_44 = arith.constant 1 : index
      %c0_45 = arith.constant 0 : index
      %c0_46 = arith.constant 0 : index
      %88 = vector.load %arg12[%c1_44, %c0_45, %c0_46] : memref<2x8x1xf32, #tpu.memory_space<vmem>>, vector<1x8x1xf32>
      %89 = vector.shape_cast %88 : vector<1x8x1xf32> to vector<8x1xf32>
      %90 = vector.shape_cast %87 : vector<8x1xf32> to vector<1x8x1xf32>
      tpu.vector_store %arg12[%c1_44, %c0_45, %c0_46], %90 {strides = array<i32>} : memref<2x8x1xf32, #tpu.memory_space<vmem>>, vector<1x8x1xf32>,
      %c1_47 = arith.constant 1 : index
      %c0_48 = arith.constant 0 : index
      %c0_49 = arith.constant 0 : index
      %91 = vector.load %arg13[%c1_47, %c0_48, %c0_49] : memref<2x8x16xf32, #tpu.memory_space<vmem>>, vector<1x8x16xf32>
      %92 = vector.shape_cast %91 : vector<1x8x16xf32> to vector<8x16xf32>
      %93 = vector.broadcast %78 : vector<8x1xf32> to vector<8x16xf32>
      %94 = arith.mulf %93, %92 : vector<8x16xf32>
      %95 = arith.truncf %81 : vector<8x8xf32> to vector<8x8xbf16>
      %96 = vector.extract_strided_slice %32 {offsets = [0, 16], sizes = [8, 16], strides = [1, 1]} : vector<8x32xbf16> to vector<8x16xbf16>
      %cst_50 = arith.constant dense<0.000000e+00> : vector<8x16xf32>
      %97 = tpu.matmul %95, %96, %cst_50 {dimension_numbers = #tpu.dot_dimension_numbers<[1], [0], [0], [1], [0, 0, 1, 1], [], []>} : vector<8x8xbf16>, vector<8x16xbf16>, vector<8x16xf32> -> vector<8x16xf32>
      %98 = arith.addf %94, %97 : vector<8x16xf32>
      %c1_51 = arith.constant 1 : index
      %c0_52 = arith.constant 0 : index
      %c0_53 = arith.constant 0 : index
      %99 = vector.load %arg13[%c1_51, %c0_52, %c0_53] : memref<2x8x16xf32, #tpu.memory_space<vmem>>, vector<1x8x16xf32>
      %100 = vector.shape_cast %99 : vector<1x8x16xf32> to vector<8x16xf32>
      %101 = vector.shape_cast %98 : vector<8x16xf32> to vector<1x8x16xf32>
      tpu.vector_store %arg13[%c1_51, %c0_52, %c0_53], %101 {strides = array<i32>} : memref<2x8x16xf32, #tpu.memory_space<vmem>>, vector<1x8x16xf32>,
      %c1_54 = arith.constant 1 : index
      %c0_55 = arith.constant 0 : index
      %c0_56 = arith.constant 0 : index
      %102 = vector.load %arg11[%c1_54, %c0_55, %c0_56] : memref<2x8x1xf32, #tpu.memory_space<vmem>>, vector<1x8x1xf32>
      %103 = vector.shape_cast %102 : vector<1x8x1xf32> to vector<8x1xf32>
      %104 = vector.shape_cast %76 : vector<8x1xf32> to vector<1x8x1xf32>
      tpu.vector_store %arg11[%c1_54, %c0_55, %c0_56], %104 {strides = array<i32>} : memref<2x8x1xf32, #tpu.memory_space<vmem>>, vector<1x8x1xf32>,
    } else {
    }
    %true = arith.constant true
    %19 = arith.xori %16, %true : i1
    %20 = arith.extui %19 : i1 to i32
    %c0_i32_4 = arith.constant 0 : i32
    %21 = arith.cmpi ne, %20, %c0_i32_4 : i32
    scf.if %21 {
      %c0 = arith.constant 0 : index
      %c0_7 = arith.constant 0 : index
      %c0_8 = arith.constant 0 : index
      %27 = vector.load %arg6[%c0, %c0_7, %c0_8] : memref<1x8x32xbf16, #tpu.memory_space<vmem>>, vector<1x8x32xbf16>
      %28 = vector.shape_cast %27 : vector<1x8x32xbf16> to vector<8x32xbf16>
      %c0_9 = arith.constant 0 : index
      %c0_10 = arith.constant 0 : index
      %c0_11 = arith.constant 0 : index
      %29 = vector.load %arg7[%c0_9, %c0_10, %c0_11] : memref<1x8x32xbf16, #tpu.memory_space<vmem>>, vector<1x8x32xbf16>
      %30 = vector.shape_cast %29 : vector<1x8x32xbf16> to vector<8x32xbf16>
      %c0_12 = arith.constant 0 : index
      %c0_13 = arith.constant 0 : index
      %c0_14 = arith.constant 0 : index
      %31 = vector.load %arg8[%c0_12, %c0_13, %c0_14] : memref<1x8x32xbf16, #tpu.memory_space<vmem>>, vector<1x8x32xbf16>
      %32 = vector.shape_cast %31 : vector<1x8x32xbf16> to vector<8x32xbf16>
      %c8_i32_15 = arith.constant 8 : i32
      %33 = arith.muli %1, %c8_i32_15 : i32
      %34 = tpu.iota {dimensions = array<i32: 0>} : vector<8x8xi32>
      %35 = vector.broadcast %33 : i32 to vector<8x8xi32>
      %36 = arith.addi %35, %34 : vector<8x8xi32>
      %c8_i32_16 = arith.constant 8 : i32
      %37 = arith.muli %3, %c8_i32_16 : i32
      %38 = tpu.iota {dimensions = array<i32: 1>} : vector<8x8xi32>
      %39 = vector.broadcast %37 : i32 to vector<8x8xi32>
      %40 = arith.addi %39, %38 : vector<8x8xi32>
      %41 = arith.cmpi sle, %40, %36 : vector<8x8xi32>
      %c0_17 = arith.constant 0 : index
      %c0_18 = arith.constant 0 : index
      %c0_19 = arith.constant 0 : index
      %42 = vector.load %arg9[%c0_17, %c0_18, %c0_19] : memref<1x1x8xf32, #tpu.memory_space<vmem>>, vector<1x1x8xf32>
      %43 = vector.shape_cast %42 : vector<1x1x8xf32> to vector<1x8xf32>
      %cst = arith.constant 5.000000e-01 : f32
      %44 = vector.broadcast %cst : f32 to vector<1x8xf32>
      %45 = arith.cmpf ogt, %43, %44 : vector<1x8xf32>
      %46 = vector.broadcast %45 : vector<1x8xi1> to vector<8x8xi1>
      %47 = arith.andi %41, %46 : vector<8x8xi1>
      %48 = vector.extract_strided_slice %28 {offsets = [0, 0], sizes = [8, 16], strides = [1, 1]} : vector<8x32xbf16> to vector<8x16xbf16>
      %49 = vector.extract_strided_slice %30 {offsets = [0, 0], sizes = [8, 16], strides = [1, 1]} : vector<8x32xbf16> to vector<8x16xbf16>
      %cst_20 = arith.constant dense<0.000000e+00> : vector<8x8xf32>
      %50 = tpu.matmul %48, %49, %cst_20 {dimension_numbers = #tpu.dot_dimension_numbers<[1], [1], [0], [0], [0, 0, 1, 0], [], []>} : vector<8x16xbf16>, vector<8x16xbf16>, vector<8x8xf32> -> vector<8x8xf32>
      %cst_21 = arith.constant -1.000000e+09 : f32
      %51 = vector.broadcast %cst_21 : f32 to vector<8x8xf32>
      %52 = arith.select %47, %50, %51 : vector<8x8xi1>, vector<8x8xf32>
      %c0_22 = arith.constant 0 : index
      %c0_23 = arith.constant 0 : index
      %c0_24 = arith.constant 0 : index
      %53 = vector.load %arg11[%c0_22, %c0_23, %c0_24] : memref<2x8x1xf32, #tpu.memory_space<vmem>>, vector<1x8x1xf32>
      %54 = vector.shape_cast %53 : vector<1x8x1xf32> to vector<8x1xf32>
      %cst_25 = arith.constant dense<0xFF800000> : vector<8xf32>
      %55 = vector.multi_reduction <maximumf>, %52, %cst_25 [1] : vector<8x8xf32> to vector<8xf32>
      %56 = vector.shape_cast %55 : vector<8xf32> to vector<8x1xf32>
      %57 = arith.maximumf %54, %56 : vector<8x1xf32>
      %58 = arith.subf %54, %57 : vector<8x1xf32>
      %59 = math.exp %58 : vector<8x1xf32>
      %60 = vector.broadcast %57 : vector<8x1xf32> to vector<8x8xf32>
      %61 = arith.subf %52, %60 : vector<8x8xf32>
      %62 = math.exp %61 : vector<8x8xf32>
      %c0_26 = arith.constant 0 : index
      %c0_27 = arith.constant 0 : index
      %c0_28 = arith.constant 0 : index
      %63 = vector.load %arg12[%c0_26, %c0_27, %c0_28] : memref<2x8x1xf32, #tpu.memory_space<vmem>>, vector<1x8x1xf32>
      %64 = vector.shape_cast %63 : vector<1x8x1xf32> to vector<8x1xf32>
      %65 = arith.mulf %59, %64 : vector<8x1xf32>
      %cst_29 = arith.constant dense<0.000000e+00> : vector<8xf32>
      %66 = vector.multi_reduction <add>, %62, %cst_29 [1] : vector<8x8xf32> to vector<8xf32>
      %67 = vector.shape_cast %66 : vector<8xf32> to vector<8x1xf32>
      %68 = arith.addf %65, %67 : vector<8x1xf32>
      %c0_30 = arith.constant 0 : index
      %c0_31 = arith.constant 0 : index
      %c0_32 = arith.constant 0 : index
      %69 = vector.load %arg12[%c0_30, %c0_31, %c0_32] : memref<2x8x1xf32, #tpu.memory_space<vmem>>, vector<1x8x1xf32>
      %70 = vector.shape_cast %69 : vector<1x8x1xf32> to vector<8x1xf32>
      %71 = vector.shape_cast %68 : vector<8x1xf32> to vector<1x8x1xf32>
      tpu.vector_store %arg12[%c0_30, %c0_31, %c0_32], %71 {strides = array<i32>} : memref<2x8x1xf32, #tpu.memory_space<vmem>>, vector<1x8x1xf32>,
      %c0_33 = arith.constant 0 : index
      %c0_34 = arith.constant 0 : index
      %c0_35 = arith.constant 0 : index
      %72 = vector.load %arg13[%c0_33, %c0_34, %c0_35] : memref<2x8x16xf32, #tpu.memory_space<vmem>>, vector<1x8x16xf32>
      %73 = vector.shape_cast %72 : vector<1x8x16xf32> to vector<8x16xf32>
      %74 = vector.broadcast %59 : vector<8x1xf32> to vector<8x16xf32>
      %75 = arith.mulf %74, %73 : vector<8x16xf32>
      %76 = arith.truncf %62 : vector<8x8xf32> to vector<8x8xbf16>
      %77 = vector.extract_strided_slice %32 {offsets = [0, 0], sizes = [8, 16], strides = [1, 1]} : vector<8x32xbf16> to vector<8x16xbf16>
      %cst_36 = arith.constant dense<0.000000e+00> : vector<8x16xf32>
      %78 = tpu.matmul %76, %77, %cst_36 {dimension_numbers = #tpu.dot_dimension_numbers<[1], [0], [0], [1], [0, 0, 1, 1], [], []>} : vector<8x8xbf16>, vector<8x16xbf16>, vector<8x16xf32> -> vector<8x16xf32>
      %79 = arith.addf %75, %78 : vector<8x16xf32>
      %c0_37 = arith.constant 0 : index
      %c0_38 = arith.constant 0 : index
      %c0_39 = arith.constant 0 : index
      %80 = vector.load %arg13[%c0_37, %c0_38, %c0_39] : memref<2x8x16xf32, #tpu.memory_space<vmem>>, vector<1x8x16xf32>
      %81 = vector.shape_cast %80 : vector<1x8x16xf32> to vector<8x16xf32>
      %82 = vector.shape_cast %79 : vector<8x16xf32> to vector<1x8x16xf32>
      tpu.vector_store %arg13[%c0_37, %c0_38, %c0_39], %82 {strides = array<i32>} : memref<2x8x16xf32, #tpu.memory_space<vmem>>, vector<1x8x16xf32>,
      %c0_40 = arith.constant 0 : index
      %c0_41 = arith.constant 0 : index
      %c0_42 = arith.constant 0 : index
      %83 = vector.load %arg11[%c0_40, %c0_41, %c0_42] : memref<2x8x1xf32, #tpu.memory_space<vmem>>, vector<1x8x1xf32>
      %84 = vector.shape_cast %83 : vector<1x8x1xf32> to vector<8x1xf32>
      %85 = vector.shape_cast %57 : vector<8x1xf32> to vector<1x8x1xf32>
      tpu.vector_store %arg11[%c0_40, %c0_41, %c0_42], %85 {strides = array<i32>} : memref<2x8x1xf32, #tpu.memory_space<vmem>>, vector<1x8x1xf32>,
      %86 = vector.extract_strided_slice %28 {offsets = [0, 16], sizes = [8, 16], strides = [1, 1]} : vector<8x32xbf16> to vector<8x16xbf16>
      %87 = vector.extract_strided_slice %30 {offsets = [0, 16], sizes = [8, 16], strides = [1, 1]} : vector<8x32xbf16> to vector<8x16xbf16>
      %cst_43 = arith.constant dense<0.000000e+00> : vector<8x8xf32>
      %88 = tpu.matmul %86, %87, %cst_43 {dimension_numbers = #tpu.dot_dimension_numbers<[1], [1], [0], [0], [0, 0, 1, 0], [], []>} : vector<8x16xbf16>, vector<8x16xbf16>, vector<8x8xf32> -> vector<8x8xf32>
      %cst_44 = arith.constant -1.000000e+09 : f32
      %89 = vector.broadcast %cst_44 : f32 to vector<8x8xf32>
      %90 = arith.select %47, %88, %89 : vector<8x8xi1>, vector<8x8xf32>
      %c1 = arith.constant 1 : index
      %c0_45 = arith.constant 0 : index
      %c0_46 = arith.constant 0 : index
      %91 = vector.load %arg11[%c1, %c0_45, %c0_46] : memref<2x8x1xf32, #tpu.memory_space<vmem>>, vector<1x8x1xf32>
      %92 = vector.shape_cast %91 : vector<1x8x1xf32> to vector<8x1xf32>
      %cst_47 = arith.constant dense<0xFF800000> : vector<8xf32>
      %93 = vector.multi_reduction <maximumf>, %90, %cst_47 [1] : vector<8x8xf32> to vector<8xf32>
      %94 = vector.shape_cast %93 : vector<8xf32> to vector<8x1xf32>
      %95 = arith.maximumf %92, %94 : vector<8x1xf32>
      %96 = arith.subf %92, %95 : vector<8x1xf32>
      %97 = math.exp %96 : vector<8x1xf32>
      %98 = vector.broadcast %95 : vector<8x1xf32> to vector<8x8xf32>
      %99 = arith.subf %90, %98 : vector<8x8xf32>
      %100 = math.exp %99 : vector<8x8xf32>
      %c1_48 = arith.constant 1 : index
      %c0_49 = arith.constant 0 : index
      %c0_50 = arith.constant 0 : index
      %101 = vector.load %arg12[%c1_48, %c0_49, %c0_50] : memref<2x8x1xf32, #tpu.memory_space<vmem>>, vector<1x8x1xf32>
      %102 = vector.shape_cast %101 : vector<1x8x1xf32> to vector<8x1xf32>
      %103 = arith.mulf %97, %102 : vector<8x1xf32>
      %cst_51 = arith.constant dense<0.000000e+00> : vector<8xf32>
      %104 = vector.multi_reduction <add>, %100, %cst_51 [1] : vector<8x8xf32> to vector<8xf32>
      %105 = vector.shape_cast %104 : vector<8xf32> to vector<8x1xf32>
      %106 = arith.addf %103, %105 : vector<8x1xf32>
      %c1_52 = arith.constant 1 : index
      %c0_53 = arith.constant 0 : index
      %c0_54 = arith.constant 0 : index
      %107 = vector.load %arg12[%c1_52, %c0_53, %c0_54] : memref<2x8x1xf32, #tpu.memory_space<vmem>>, vector<1x8x1xf32>
      %108 = vector.shape_cast %107 : vector<1x8x1xf32> to vector<8x1xf32>
      %109 = vector.shape_cast %106 : vector<8x1xf32> to vector<1x8x1xf32>
      tpu.vector_store %arg12[%c1_52, %c0_53, %c0_54], %109 {strides = array<i32>} : memref<2x8x1xf32, #tpu.memory_space<vmem>>, vector<1x8x1xf32>,
      %c1_55 = arith.constant 1 : index
      %c0_56 = arith.constant 0 : index
      %c0_57 = arith.constant 0 : index
      %110 = vector.load %arg13[%c1_55, %c0_56, %c0_57] : memref<2x8x16xf32, #tpu.memory_space<vmem>>, vector<1x8x16xf32>
      %111 = vector.shape_cast %110 : vector<1x8x16xf32> to vector<8x16xf32>
      %112 = vector.broadcast %97 : vector<8x1xf32> to vector<8x16xf32>
      %113 = arith.mulf %112, %111 : vector<8x16xf32>
      %114 = arith.truncf %100 : vector<8x8xf32> to vector<8x8xbf16>
      %115 = vector.extract_strided_slice %32 {offsets = [0, 16], sizes = [8, 16], strides = [1, 1]} : vector<8x32xbf16> to vector<8x16xbf16>
      %cst_58 = arith.constant dense<0.000000e+00> : vector<8x16xf32>
      %116 = tpu.matmul %114, %115, %cst_58 {dimension_numbers = #tpu.dot_dimension_numbers<[1], [0], [0], [1], [0, 0, 1, 1], [], []>} : vector<8x8xbf16>, vector<8x16xbf16>, vector<8x16xf32> -> vector<8x16xf32>
      %117 = arith.addf %113, %116 : vector<8x16xf32>
      %c1_59 = arith.constant 1 : index
      %c0_60 = arith.constant 0 : index
      %c0_61 = arith.constant 0 : index
      %118 = vector.load %arg13[%c1_59, %c0_60, %c0_61] : memref<2x8x16xf32, #tpu.memory_space<vmem>>, vector<1x8x16xf32>
      %119 = vector.shape_cast %118 : vector<1x8x16xf32> to vector<8x16xf32>
      %120 = vector.shape_cast %117 : vector<8x16xf32> to vector<1x8x16xf32>
      tpu.vector_store %arg13[%c1_59, %c0_60, %c0_61], %120 {strides = array<i32>} : memref<2x8x16xf32, #tpu.memory_space<vmem>>, vector<1x8x16xf32>,
      %c1_62 = arith.constant 1 : index
      %c0_63 = arith.constant 0 : index
      %c0_64 = arith.constant 0 : index
      %121 = vector.load %arg11[%c1_62, %c0_63, %c0_64] : memref<2x8x1xf32, #tpu.memory_space<vmem>>, vector<1x8x1xf32>
      %122 = vector.shape_cast %121 : vector<1x8x1xf32> to vector<8x1xf32>
      %123 = vector.shape_cast %95 : vector<8x1xf32> to vector<1x8x1xf32>
      tpu.vector_store %arg11[%c1_62, %c0_63, %c0_64], %123 {strides = array<i32>} : memref<2x8x1xf32, #tpu.memory_space<vmem>>, vector<1x8x1xf32>,
    } else {
    }
    %22 = arith.index_cast %arg1 : i32 to index
    %23 = memref.load %arg4[%22] : memref<1xi32, #tpu.memory_space<smem>>
    %c1_i32_5 = arith.constant 1 : i32
    %24 = arith.cmpi eq, %23, %c1_i32_5 : i32
    %25 = arith.extui %24 : i1 to i32
    %c0_i32_6 = arith.constant 0 : i32
    %26 = arith.cmpi ne, %25, %c0_i32_6 : i32
    scf.if %26 {
      %c0 = arith.constant 0 : index
      %c0_7 = arith.constant 0 : index
      %c0_8 = arith.constant 0 : index
      %27 = vector.load %arg13[%c0, %c0_7, %c0_8] : memref<2x8x16xf32, #tpu.memory_space<vmem>>, vector<1x8x16xf32>
      %28 = vector.shape_cast %27 : vector<1x8x16xf32> to vector<8x16xf32>
      %c0_9 = arith.constant 0 : index
      %c0_10 = arith.constant 0 : index
      %c0_11 = arith.constant 0 : index
      %29 = vector.load %arg12[%c0_9, %c0_10, %c0_11] : memref<2x8x1xf32, #tpu.memory_space<vmem>>, vector<1x8x1xf32>
      %30 = vector.shape_cast %29 : vector<1x8x1xf32> to vector<8x1xf32>
      %31 = vector.broadcast %30 : vector<8x1xf32> to vector<8x16xf32>
      %32 = arith.divf %28, %31 : vector<8x16xf32>
      %c1 = arith.constant 1 : index
      %c0_12 = arith.constant 0 : index
      %c0_13 = arith.constant 0 : index
      %33 = vector.load %arg13[%c1, %c0_12, %c0_13] : memref<2x8x16xf32, #tpu.memory_space<vmem>>, vector<1x8x16xf32>
      %34 = vector.shape_cast %33 : vector<1x8x16xf32> to vector<8x16xf32>
      %c1_14 = arith.constant 1 : index
      %c0_15 = arith.constant 0 : index
      %c0_16 = arith.constant 0 : index
      %35 = vector.load %arg12[%c1_14, %c0_15, %c0_16] : memref<2x8x1xf32, #tpu.memory_space<vmem>>, vector<1x8x1xf32>
      %36 = vector.shape_cast %35 : vector<1x8x1xf32> to vector<8x1xf32>
      %37 = vector.broadcast %36 : vector<8x1xf32> to vector<8x16xf32>
      %38 = arith.divf %34, %37 : vector<8x16xf32>
      %39 = tpu.concatenate %32, %38 in 1 : vector<8x16xf32>, vector<8x16xf32> -> vector<8x32xf32>
      %40 = arith.truncf %39 : vector<8x32xf32> to vector<8x32xbf16>
      %c0_17 = arith.constant 0 : index
      %c0_18 = arith.constant 0 : index
      %c0_19 = arith.constant 0 : index
      %41 = vector.load %arg10[%c0_17, %c0_18, %c0_19] : memref<1x8x32xbf16, #tpu.memory_space<vmem>>, vector<1x8x32xbf16>
      %42 = vector.shape_cast %41 : vector<1x8x32xbf16> to vector<8x32xbf16>
      %43 = vector.shape_cast %40 : vector<8x32xbf16> to vector<1x8x32xbf16>
      tpu.vector_store %arg10[%c0_17, %c0_18, %c0_19], %43 {strides = array<i32>} : memref<1x8x32xbf16, #tpu.memory_space<vmem>>, vector<1x8x32xbf16>,
    } else {
    }
    return
  }
  func.func @transform_0(%arg0: i32, %arg1: i32, %arg2: memref<1xi32, #tpu.memory_space<smem>>, %arg3: memref<1xi32, #tpu.memory_space<smem>>, %arg4: memref<1xi32, #tpu.memory_space<smem>>, %arg5: memref<2xi32, #tpu.memory_space<smem>>) -> (i32, i32, i32) {
    %0 = arith.index_cast %arg1 : i32 to index
    %1 = memref.load %arg2[%0] : memref<1xi32, #tpu.memory_space<smem>>
    %c0_i32 = arith.constant 0 : i32
    %c0_i32_0 = arith.constant 0 : i32
    return %arg0, %1, %c0_i32 : i32, i32, i32
  }
  func.func @transform_1(%arg0: i32, %arg1: i32, %arg2: memref<1xi32, #tpu.memory_space<smem>>, %arg3: memref<1xi32, #tpu.memory_space<smem>>, %arg4: memref<1xi32, #tpu.memory_space<smem>>, %arg5: memref<2xi32, #tpu.memory_space<smem>>) -> (i32, i32, i32) {
    %0 = arith.index_cast %arg1 : i32 to index
    %1 = memref.load %arg3[%0] : memref<1xi32, #tpu.memory_space<smem>>
    %c0_i32 = arith.constant 0 : i32
    %c0_i32_0 = arith.constant 0 : i32
    return %arg0, %1, %c0_i32 : i32, i32, i32
  }
  func.func @transform_2(%arg0: i32, %arg1: i32, %arg2: memref<1xi32, #tpu.memory_space<smem>>, %arg3: memref<1xi32, #tpu.memory_space<smem>>, %arg4: memref<1xi32, #tpu.memory_space<smem>>, %arg5: memref<2xi32, #tpu.memory_space<smem>>) -> (i32, i32, i32) {
    %0 = arith.index_cast %arg1 : i32 to index
    %1 = memref.load %arg3[%0] : memref<1xi32, #tpu.memory_space<smem>>
    %c0_i32 = arith.constant 0 : i32
    %c0_i32_0 = arith.constant 0 : i32
    return %arg0, %1, %c0_i32 : i32, i32, i32
  }
  func.func @transform_3(%arg0: i32, %arg1: i32, %arg2: memref<1xi32, #tpu.memory_space<smem>>, %arg3: memref<1xi32, #tpu.memory_space<smem>>, %arg4: memref<1xi32, #tpu.memory_space<smem>>, %arg5: memref<2xi32, #tpu.memory_space<smem>>) -> (i32, i32, i32) {
    %0 = arith.index_cast %arg1 : i32 to index
    %1 = memref.load %arg3[%0] : memref<1xi32, #tpu.memory_space<smem>>
    %c0_i32 = arith.constant 0 : i32
    %c0_i32_0 = arith.constant 0 : i32
    return %arg0, %c0_i32, %1 : i32, i32, i32
  }
  func.func @transform_4(%arg0: i32, %arg1: i32, %arg2: memref<1xi32, #tpu.memory_space<smem>>, %arg3: memref<1xi32, #tpu.memory_space<smem>>, %arg4: memref<1xi32, #tpu.memory_space<smem>>, %arg5: memref<2xi32, #tpu.memory_space<smem>>) -> (i32, i32, i32) {
    %0 = arith.index_cast %arg1 : i32 to index
    %1 = memref.load %arg2[%0] : memref<1xi32, #tpu.memory_space<smem>>
    %c0_i32 = arith.constant 0 : i32
    %c0_i32_0 = arith.constant 0 : i32
    return %arg0, %1, %c0_i32 : i32, i32, i32
  }
}

module attributes {stable_mosaic.version = 11 : i64} {
  func.func @_attn_mlp_kernel(%arg0: i32, %arg1: i32, %arg2: memref<1x8x32xbf16, #tpu.memory_space<vmem>>, %arg3: memref<1x8x32xf32, #tpu.memory_space<vmem>>, %arg4: memref<32x32xbf16, #tpu.memory_space<vmem>>, %arg5: memref<1x32xf32, #tpu.memory_space<vmem>>, %arg6: memref<1x32xf32, #tpu.memory_space<vmem>>, %arg7: memref<1x32xf32, #tpu.memory_space<vmem>>, %arg8: memref<32x128xbf16, #tpu.memory_space<vmem>>, %arg9: memref<1x128xf32, #tpu.memory_space<vmem>>, %arg10: memref<128x32xbf16, #tpu.memory_space<vmem>>, %arg11: memref<1x32xf32, #tpu.memory_space<vmem>>, %arg12: memref<1x8x32xf32, #tpu.memory_space<vmem>>) attributes {dimension_semantics = [#tpu.dimension_semantics<parallel>, #tpu.dimension_semantics<parallel>], iteration_bounds = array<i64: 2, 1>, scalar_prefetch = 0 : i64, scratch_operands = 0 : i64, tpu.core_type = #tpu.core_type<tc>, window_params = [{transform_indices = @transform_0, window_bounds = array<i64: 1, 8, 32>}, {transform_indices = @transform_1, window_bounds = array<i64: 1, 8, 32>}, {pipeline_mode = #tpu.pipeline_mode<synchronous>, transform_indices = @transform_2, window_bounds = array<i64: 32, 32>}, {pipeline_mode = #tpu.pipeline_mode<synchronous>, transform_indices = @transform_3, window_bounds = array<i64: 1, 32>}, {pipeline_mode = #tpu.pipeline_mode<synchronous>, transform_indices = @transform_4, window_bounds = array<i64: 1, 32>}, {pipeline_mode = #tpu.pipeline_mode<synchronous>, transform_indices = @transform_5, window_bounds = array<i64: 1, 32>}, {pipeline_mode = #tpu.pipeline_mode<synchronous>, transform_indices = @transform_6, window_bounds = array<i64: 32, 128>}, {pipeline_mode = #tpu.pipeline_mode<synchronous>, transform_indices = @transform_7, window_bounds = array<i64: 1, 128>}, {pipeline_mode = #tpu.pipeline_mode<synchronous>, transform_indices = @transform_8, window_bounds = array<i64: 128, 32>}, {pipeline_mode = #tpu.pipeline_mode<synchronous>, transform_indices = @transform_9, window_bounds = array<i64: 1, 32>}, {transform_indices = @transform_10, window_bounds = array<i64: 1, 8, 32>}]} {
    %c0 = arith.constant 0 : index
    %c0_0 = arith.constant 0 : index
    %c0_1 = arith.constant 0 : index
    %0 = vector.load %arg2[%c0, %c0_0, %c0_1] : memref<1x8x32xbf16, #tpu.memory_space<vmem>>, vector<1x8x32xbf16>
    %1 = vector.shape_cast %0 : vector<1x8x32xbf16> to vector<8x32xbf16>
    %c0_2 = arith.constant 0 : index
    %c0_3 = arith.constant 0 : index
    %2 = vector.load %arg4[%c0_2, %c0_3] : memref<32x32xbf16, #tpu.memory_space<vmem>>, vector<32x32xbf16>
    %cst = arith.constant dense<0.000000e+00> : vector<8x32xf32>
    %3 = tpu.matmul %1, %2, %cst {dimension_numbers = #tpu.dot_dimension_numbers<[1], [0], [0], [1], [0, 0, 1, 1], [], []>} : vector<8x32xbf16>, vector<32x32xbf16>, vector<8x32xf32> -> vector<8x32xf32>
    %c0_4 = arith.constant 0 : index
    %c0_5 = arith.constant 0 : index
    %4 = vector.load %arg5[%c0_4, %c0_5] : memref<1x32xf32, #tpu.memory_space<vmem>>, vector<1x32xf32>
    %5 = vector.broadcast %4 : vector<1x32xf32> to vector<8x32xf32>
    %6 = arith.addf %3, %5 : vector<8x32xf32>
    %c0_6 = arith.constant 0 : index
    %c0_7 = arith.constant 0 : index
    %c0_8 = arith.constant 0 : index
    %7 = vector.load %arg3[%c0_6, %c0_7, %c0_8] : memref<1x8x32xf32, #tpu.memory_space<vmem>>, vector<1x8x32xf32>
    %8 = vector.shape_cast %7 : vector<1x8x32xf32> to vector<8x32xf32>
    %9 = arith.addf %8, %6 : vector<8x32xf32>
    %cst_9 = arith.constant dense<0.000000e+00> : vector<8xf32>
    %10 = vector.multi_reduction <add>, %9, %cst_9 [1] : vector<8x32xf32> to vector<8xf32>
    %11 = vector.shape_cast %10 : vector<8xf32> to vector<8x1xf32>
    %cst_10 = arith.constant 3.200000e+01 : f32
    %12 = vector.broadcast %cst_10 : f32 to vector<8x1xf32>
    %13 = arith.divf %11, %12 : vector<8x1xf32>
    %14 = vector.broadcast %13 : vector<8x1xf32> to vector<8x32xf32>
    %15 = arith.subf %9, %14 : vector<8x32xf32>
    %16 = arith.mulf %15, %15 : vector<8x32xf32>
    %cst_11 = arith.constant dense<0.000000e+00> : vector<8xf32>
    %17 = vector.multi_reduction <add>, %16, %cst_11 [1] : vector<8x32xf32> to vector<8xf32>
    %18 = vector.shape_cast %17 : vector<8xf32> to vector<8x1xf32>
    %cst_12 = arith.constant 3.200000e+01 : f32
    %19 = vector.broadcast %cst_12 : f32 to vector<8x1xf32>
    %20 = arith.divf %18, %19 : vector<8x1xf32>
    %21 = vector.broadcast %13 : vector<8x1xf32> to vector<8x32xf32>
    %22 = arith.subf %9, %21 : vector<8x32xf32>
    %cst_13 = arith.constant 9.99999974E-6 : f32
    %23 = vector.broadcast %cst_13 : f32 to vector<8x1xf32>
    %24 = arith.addf %20, %23 : vector<8x1xf32>
    %25 = math.rsqrt %24 : vector<8x1xf32>
    %26 = vector.broadcast %25 : vector<8x1xf32> to vector<8x32xf32>
    %27 = arith.mulf %22, %26 : vector<8x32xf32>
    %c0_14 = arith.constant 0 : index
    %c0_15 = arith.constant 0 : index
    %28 = vector.load %arg6[%c0_14, %c0_15] : memref<1x32xf32, #tpu.memory_space<vmem>>, vector<1x32xf32>
    %29 = vector.broadcast %28 : vector<1x32xf32> to vector<8x32xf32>
    %30 = arith.mulf %27, %29 : vector<8x32xf32>
    %c0_16 = arith.constant 0 : index
    %c0_17 = arith.constant 0 : index
    %31 = vector.load %arg7[%c0_16, %c0_17] : memref<1x32xf32, #tpu.memory_space<vmem>>, vector<1x32xf32>
    %32 = vector.broadcast %31 : vector<1x32xf32> to vector<8x32xf32>
    %33 = arith.addf %30, %32 : vector<8x32xf32>
    %34 = arith.truncf %33 : vector<8x32xf32> to vector<8x32xbf16>
    %c0_18 = arith.constant 0 : index
    %c0_19 = arith.constant 0 : index
    %35 = vector.load %arg8[%c0_18, %c0_19] : memref<32x128xbf16, #tpu.memory_space<vmem>>, vector<32x128xbf16>
    %cst_20 = arith.constant dense<0.000000e+00> : vector<8x128xf32>
    %36 = tpu.matmul %34, %35, %cst_20 {dimension_numbers = #tpu.dot_dimension_numbers<[1], [0], [0], [1], [0, 0, 1, 1], [], []>} : vector<8x32xbf16>, vector<32x128xbf16>, vector<8x128xf32> -> vector<8x128xf32>
    %c0_21 = arith.constant 0 : index
    %c0_22 = arith.constant 0 : index
    %37 = vector.load %arg9[%c0_21, %c0_22] : memref<1x128xf32, #tpu.memory_space<vmem>>, vector<1x128xf32>
    %38 = vector.broadcast %37 : vector<1x128xf32> to vector<8x128xf32>
    %39 = arith.addf %36, %38 : vector<8x128xf32>
    %40 = arith.mulf %39, %39 : vector<8x128xf32>
    %41 = arith.mulf %39, %40 : vector<8x128xf32>
    %cst_23 = arith.constant 4.471500e-02 : f32
    %42 = vector.broadcast %cst_23 : f32 to vector<8x128xf32>
    %43 = arith.mulf %42, %41 : vector<8x128xf32>
    %44 = arith.addf %39, %43 : vector<8x128xf32>
    %cst_24 = arith.constant 0.797884583 : f32
    %45 = vector.broadcast %cst_24 : f32 to vector<8x128xf32>
    %46 = arith.mulf %45, %44 : vector<8x128xf32>
    %47 = math.tanh %46 : vector<8x128xf32>
    %cst_25 = arith.constant 1.000000e+00 : f32
    %48 = vector.broadcast %cst_25 : f32 to vector<8x128xf32>
    %49 = arith.addf %48, %47 : vector<8x128xf32>
    %cst_26 = arith.constant 5.000000e-01 : f32
    %50 = vector.broadcast %cst_26 : f32 to vector<8x128xf32>
    %51 = arith.mulf %50, %49 : vector<8x128xf32>
    %52 = arith.mulf %39, %51 : vector<8x128xf32>
    %53 = arith.truncf %52 : vector<8x128xf32> to vector<8x128xbf16>
    %c0_27 = arith.constant 0 : index
    %c0_28 = arith.constant 0 : index
    %54 = vector.load %arg10[%c0_27, %c0_28] : memref<128x32xbf16, #tpu.memory_space<vmem>>, vector<128x32xbf16>
    %cst_29 = arith.constant dense<0.000000e+00> : vector<8x32xf32>
    %55 = tpu.matmul %53, %54, %cst_29 {dimension_numbers = #tpu.dot_dimension_numbers<[1], [0], [0], [1], [0, 0, 1, 1], [], []>} : vector<8x128xbf16>, vector<128x32xbf16>, vector<8x32xf32> -> vector<8x32xf32>
    %c0_30 = arith.constant 0 : index
    %c0_31 = arith.constant 0 : index
    %56 = vector.load %arg11[%c0_30, %c0_31] : memref<1x32xf32, #tpu.memory_space<vmem>>, vector<1x32xf32>
    %57 = vector.broadcast %56 : vector<1x32xf32> to vector<8x32xf32>
    %58 = arith.addf %55, %57 : vector<8x32xf32>
    %59 = arith.addf %9, %58 : vector<8x32xf32>
    %c0_32 = arith.constant 0 : index
    %c0_33 = arith.constant 0 : index
    %c0_34 = arith.constant 0 : index
    %60 = vector.load %arg12[%c0_32, %c0_33, %c0_34] : memref<1x8x32xf32, #tpu.memory_space<vmem>>, vector<1x8x32xf32>
    %61 = vector.shape_cast %60 : vector<1x8x32xf32> to vector<8x32xf32>
    %62 = vector.shape_cast %59 : vector<8x32xf32> to vector<1x8x32xf32>
    tpu.vector_store %arg12[%c0_32, %c0_33, %c0_34], %62 {strides = array<i32>} : memref<1x8x32xf32, #tpu.memory_space<vmem>>, vector<1x8x32xf32>,
    return
  }
  func.func @transform_0(%arg0: i32, %arg1: i32) -> (i32, i32, i32) {
    %c0_i32 = arith.constant 0 : i32
    %c0_i32_0 = arith.constant 0 : i32
    return %arg0, %arg1, %c0_i32 : i32, i32, i32
  }
  func.func @transform_1(%arg0: i32, %arg1: i32) -> (i32, i32, i32) {
    %c0_i32 = arith.constant 0 : i32
    %c0_i32_0 = arith.constant 0 : i32
    return %arg0, %arg1, %c0_i32 : i32, i32, i32
  }
  func.func @transform_2(%arg0: i32, %arg1: i32) -> (i32, i32) {
    %c0_i32 = arith.constant 0 : i32
    %c0_i32_0 = arith.constant 0 : i32
    %c0_i32_1 = arith.constant 0 : i32
    return %c0_i32, %c0_i32_0 : i32, i32
  }
  func.func @transform_3(%arg0: i32, %arg1: i32) -> (i32, i32) {
    %c0_i32 = arith.constant 0 : i32
    %c0_i32_0 = arith.constant 0 : i32
    %c0_i32_1 = arith.constant 0 : i32
    return %c0_i32, %c0_i32_0 : i32, i32
  }
  func.func @transform_4(%arg0: i32, %arg1: i32) -> (i32, i32) {
    %c0_i32 = arith.constant 0 : i32
    %c0_i32_0 = arith.constant 0 : i32
    %c0_i32_1 = arith.constant 0 : i32
    return %c0_i32, %c0_i32_0 : i32, i32
  }
  func.func @transform_5(%arg0: i32, %arg1: i32) -> (i32, i32) {
    %c0_i32 = arith.constant 0 : i32
    %c0_i32_0 = arith.constant 0 : i32
    %c0_i32_1 = arith.constant 0 : i32
    return %c0_i32, %c0_i32_0 : i32, i32
  }
  func.func @transform_6(%arg0: i32, %arg1: i32) -> (i32, i32) {
    %c0_i32 = arith.constant 0 : i32
    %c0_i32_0 = arith.constant 0 : i32
    %c0_i32_1 = arith.constant 0 : i32
    return %c0_i32, %c0_i32_0 : i32, i32
  }
  func.func @transform_7(%arg0: i32, %arg1: i32) -> (i32, i32) {
    %c0_i32 = arith.constant 0 : i32
    %c0_i32_0 = arith.constant 0 : i32
    %c0_i32_1 = arith.constant 0 : i32
    return %c0_i32, %c0_i32_0 : i32, i32
  }
  func.func @transform_8(%arg0: i32, %arg1: i32) -> (i32, i32) {
    %c0_i32 = arith.constant 0 : i32
    %c0_i32_0 = arith.constant 0 : i32
    %c0_i32_1 = arith.constant 0 : i32
    return %c0_i32, %c0_i32_0 : i32, i32
  }
  func.func @transform_9(%arg0: i32, %arg1: i32) -> (i32, i32) {
    %c0_i32 = arith.constant 0 : i32
    %c0_i32_0 = arith.constant 0 : i32
    %c0_i32_1 = arith.constant 0 : i32
    return %c0_i32, %c0_i32_0 : i32, i32
  }
  func.func @transform_10(%arg0: i32, %arg1: i32) -> (i32, i32, i32) {
    %c0_i32 = arith.constant 0 : i32
    %c0_i32_0 = arith.constant 0 : i32
    return %arg0, %arg1, %c0_i32 : i32, i32, i32
  }
}

module attributes {stable_mosaic.version = 11 : i64} {
  func.func @_ln_pool_head_kernel(%arg0: i32, %arg1: i32, %arg2: memref<1x8x32xf32, #tpu.memory_space<vmem>>, %arg3: memref<1x8x1xf32, #tpu.memory_space<vmem>>, %arg4: memref<1x32xf32, #tpu.memory_space<vmem>>, %arg5: memref<1x32xf32, #tpu.memory_space<vmem>>, %arg6: memref<32x2xbf16, #tpu.memory_space<vmem>>, %arg7: memref<1x2xf32, #tpu.memory_space<vmem>>, %arg8: memref<1x1x2xf32, #tpu.memory_space<vmem>>, %arg9: memref<1x32xf32, #tpu.memory_space<vmem>>, %arg10: memref<1x1xf32, #tpu.memory_space<vmem>>) attributes {dimension_semantics = [#tpu.dimension_semantics<parallel>, #tpu.dimension_semantics<arbitrary>], iteration_bounds = array<i64: 2, 1>, scalar_prefetch = 0 : i64, scratch_operands = 2 : i64, tpu.core_type = #tpu.core_type<tc>, window_params = [{transform_indices = @transform_0, window_bounds = array<i64: 1, 8, 32>}, {transform_indices = @transform_1, window_bounds = array<i64: 1, 8, 1>}, {pipeline_mode = #tpu.pipeline_mode<synchronous>, transform_indices = @transform_2, window_bounds = array<i64: 1, 32>}, {pipeline_mode = #tpu.pipeline_mode<synchronous>, transform_indices = @transform_3, window_bounds = array<i64: 1, 32>}, {pipeline_mode = #tpu.pipeline_mode<synchronous>, transform_indices = @transform_4, window_bounds = array<i64: 32, 2>}, {pipeline_mode = #tpu.pipeline_mode<synchronous>, transform_indices = @transform_5, window_bounds = array<i64: 1, 2>}, {transform_indices = @transform_6, window_bounds = array<i64: 1, 1, 2>}]} {
    %c0_i32 = arith.constant 0 : i32
    %0 = arith.cmpi eq, %arg1, %c0_i32 : i32
    %1 = arith.extui %0 : i1 to i32
    %c0_i32_0 = arith.constant 0 : i32
    %2 = arith.cmpi ne, %1, %c0_i32_0 : i32
    scf.if %2 {
      %cst_26 = arith.constant 0.000000e+00 : f32
      %46 = vector.broadcast %cst_26 : f32 to vector<1x32xf32>
      %c0_27 = arith.constant 0 : index
      %c0_28 = arith.constant 0 : index
      %47 = vector.load %arg9[%c0_27, %c0_28] : memref<1x32xf32, #tpu.memory_space<vmem>>, vector<1x32xf32>
      tpu.vector_store %arg9[%c0_27, %c0_28], %46 {strides = array<i32>} : memref<1x32xf32, #tpu.memory_space<vmem>>, vector<1x32xf32>,
      %cst_29 = arith.constant 0.000000e+00 : f32
      %48 = vector.broadcast %cst_29 : f32 to vector<1x1xf32>
      %c0_30 = arith.constant 0 : index
      %c0_31 = arith.constant 0 : index
      %49 = vector.load %arg10[%c0_30, %c0_31] : memref<1x1xf32, #tpu.memory_space<vmem>>, vector<1x1xf32>
      tpu.vector_store %arg10[%c0_30, %c0_31], %48 {strides = array<i32>} : memref<1x1xf32, #tpu.memory_space<vmem>>, vector<1x1xf32>,
    } else {
    }
    %c0 = arith.constant 0 : index
    %c0_1 = arith.constant 0 : index
    %c0_2 = arith.constant 0 : index
    %3 = vector.load %arg2[%c0, %c0_1, %c0_2] : memref<1x8x32xf32, #tpu.memory_space<vmem>>, vector<1x8x32xf32>
    %4 = vector.shape_cast %3 : vector<1x8x32xf32> to vector<8x32xf32>
    %cst = arith.constant dense<0.000000e+00> : vector<8xf32>
    %5 = vector.multi_reduction <add>, %4, %cst [1] : vector<8x32xf32> to vector<8xf32>
    %6 = vector.shape_cast %5 : vector<8xf32> to vector<8x1xf32>
    %cst_3 = arith.constant 3.200000e+01 : f32
    %7 = vector.broadcast %cst_3 : f32 to vector<8x1xf32>
    %8 = arith.divf %6, %7 : vector<8x1xf32>
    %9 = vector.broadcast %8 : vector<8x1xf32> to vector<8x32xf32>
    %10 = arith.subf %4, %9 : vector<8x32xf32>
    %11 = arith.mulf %10, %10 : vector<8x32xf32>
    %cst_4 = arith.constant dense<0.000000e+00> : vector<8xf32>
    %12 = vector.multi_reduction <add>, %11, %cst_4 [1] : vector<8x32xf32> to vector<8xf32>
    %13 = vector.shape_cast %12 : vector<8xf32> to vector<8x1xf32>
    %cst_5 = arith.constant 3.200000e+01 : f32
    %14 = vector.broadcast %cst_5 : f32 to vector<8x1xf32>
    %15 = arith.divf %13, %14 : vector<8x1xf32>
    %16 = vector.broadcast %8 : vector<8x1xf32> to vector<8x32xf32>
    %17 = arith.subf %4, %16 : vector<8x32xf32>
    %cst_6 = arith.constant 9.99999974E-6 : f32
    %18 = vector.broadcast %cst_6 : f32 to vector<8x1xf32>
    %19 = arith.addf %15, %18 : vector<8x1xf32>
    %20 = math.rsqrt %19 : vector<8x1xf32>
    %21 = vector.broadcast %20 : vector<8x1xf32> to vector<8x32xf32>
    %22 = arith.mulf %17, %21 : vector<8x32xf32>
    %c0_7 = arith.constant 0 : index
    %c0_8 = arith.constant 0 : index
    %23 = vector.load %arg4[%c0_7, %c0_8] : memref<1x32xf32, #tpu.memory_space<vmem>>, vector<1x32xf32>
    %24 = vector.broadcast %23 : vector<1x32xf32> to vector<8x32xf32>
    %25 = arith.mulf %22, %24 : vector<8x32xf32>
    %c0_9 = arith.constant 0 : index
    %c0_10 = arith.constant 0 : index
    %26 = vector.load %arg5[%c0_9, %c0_10] : memref<1x32xf32, #tpu.memory_space<vmem>>, vector<1x32xf32>
    %27 = vector.broadcast %26 : vector<1x32xf32> to vector<8x32xf32>
    %28 = arith.addf %25, %27 : vector<8x32xf32>
    %c0_11 = arith.constant 0 : index
    %c0_12 = arith.constant 0 : index
    %c0_13 = arith.constant 0 : index
    %29 = vector.load %arg3[%c0_11, %c0_12, %c0_13] : memref<1x8x1xf32, #tpu.memory_space<vmem>>, vector<1x8x1xf32>
    %30 = vector.shape_cast %29 : vector<1x8x1xf32> to vector<8x1xf32>
    %c0_14 = arith.constant 0 : index
    %c0_15 = arith.constant 0 : index
    %31 = vector.load %arg9[%c0_14, %c0_15] : memref<1x32xf32, #tpu.memory_space<vmem>>, vector<1x32xf32>
    %32 = vector.broadcast %30 : vector<8x1xf32> to vector<8x32xf32>
    %33 = arith.mulf %28, %32 : vector<8x32xf32>
    %cst_16 = arith.constant dense<0.000000e+00> : vector<32xf32>
    %34 = vector.multi_reduction <add>, %33, %cst_16 [0] : vector<8x32xf32> to vector<32xf32>
    %35 = vector.shape_cast %34 : vector<32xf32> to vector<1x32xf32>
    %36 = arith.addf %31, %35 : vector<1x32xf32>
    %c0_17 = arith.constant 0 : index
    %c0_18 = arith.constant 0 : index
    %37 = vector.load %arg9[%c0_17, %c0_18] : memref<1x32xf32, #tpu.memory_space<vmem>>, vector<1x32xf32>
    tpu.vector_store %arg9[%c0_17, %c0_18], %36 {strides = array<i32>} : memref<1x32xf32, #tpu.memory_space<vmem>>, vector<1x32xf32>,
    %c0_19 = arith.constant 0 : index
    %c0_20 = arith.constant 0 : index
    %38 = vector.load %arg10[%c0_19, %c0_20] : memref<1x1xf32, #tpu.memory_space<vmem>>, vector<1x1xf32>
    %cst_21 = arith.constant dense<0.000000e+00> : vector<1xf32>
    %39 = vector.multi_reduction <add>, %30, %cst_21 [0] : vector<8x1xf32> to vector<1xf32>
    %40 = vector.shape_cast %39 : vector<1xf32> to vector<1x1xf32>
    %41 = arith.addf %38, %40 : vector<1x1xf32>
    %c0_22 = arith.constant 0 : index
    %c0_23 = arith.constant 0 : index
    %42 = vector.load %arg10[%c0_22, %c0_23] : memref<1x1xf32, #tpu.memory_space<vmem>>, vector<1x1xf32>
    tpu.vector_store %arg10[%c0_22, %c0_23], %41 {strides = array<i32>} : memref<1x1xf32, #tpu.memory_space<vmem>>, vector<1x1xf32>,
    %c0_i32_24 = arith.constant 0 : i32
    %43 = arith.cmpi eq, %arg1, %c0_i32_24 : i32
    %44 = arith.extui %43 : i1 to i32
    %c0_i32_25 = arith.constant 0 : i32
    %45 = arith.cmpi ne, %44, %c0_i32_25 : i32
    scf.if %45 {
      %c0_26 = arith.constant 0 : index
      %c0_27 = arith.constant 0 : index
      %46 = vector.load %arg10[%c0_26, %c0_27] : memref<1x1xf32, #tpu.memory_space<vmem>>, vector<1x1xf32>
      %cst_28 = arith.constant 0.000000e+00 : f32
      %47 = vector.broadcast %cst_28 : f32 to vector<1x1xf32>
      %48 = arith.cmpf oeq, %46, %47 : vector<1x1xf32>
      %c0_29 = arith.constant 0 : index
      %c0_30 = arith.constant 0 : index
      %49 = vector.load %arg10[%c0_29, %c0_30] : memref<1x1xf32, #tpu.memory_space<vmem>>, vector<1x1xf32>
      %cst_31 = arith.constant 9.99999993E-9 : f32
      %50 = vector.broadcast %cst_31 : f32 to vector<1x1xf32>
      %51 = arith.select %48, %50, %49 : vector<1x1xi1>, vector<1x1xf32>
      %c0_32 = arith.constant 0 : index
      %c0_33 = arith.constant 0 : index
      %52 = vector.load %arg9[%c0_32, %c0_33] : memref<1x32xf32, #tpu.memory_space<vmem>>, vector<1x32xf32>
      %53 = vector.broadcast %51 : vector<1x1xf32> to vector<1x32xf32>
      %54 = arith.divf %52, %53 : vector<1x32xf32>
      %55 = arith.truncf %54 : vector<1x32xf32> to vector<1x32xbf16>
      %c0_34 = arith.constant 0 : index
      %c0_35 = arith.constant 0 : index
      %56 = vector.load %arg6[%c0_34, %c0_35] : memref<32x2xbf16, #tpu.memory_space<vmem>>, vector<32x2xbf16>
      %cst_36 = arith.constant dense<0.000000e+00> : vector<1x2xf32>
      %57 = tpu.matmul %55, %56, %cst_36 {dimension_numbers = #tpu.dot_dimension_numbers<[1], [0], [0], [1], [0, 0, 1, 1], [], []>} : vector<1x32xbf16>, vector<32x2xbf16>, vector<1x2xf32> -> vector<1x2xf32>
      %c0_37 = arith.constant 0 : index
      %c0_38 = arith.constant 0 : index
      %58 = vector.load %arg7[%c0_37, %c0_38] : memref<1x2xf32, #tpu.memory_space<vmem>>, vector<1x2xf32>
      %59 = arith.addf %57, %58 : vector<1x2xf32>
      %c0_39 = arith.constant 0 : index
      %c0_40 = arith.constant 0 : index
      %c0_41 = arith.constant 0 : index
      %60 = vector.load %arg8[%c0_39, %c0_40, %c0_41] : memref<1x1x2xf32, #tpu.memory_space<vmem>>, vector<1x1x2xf32>
      %61 = vector.shape_cast %60 : vector<1x1x2xf32> to vector<1x2xf32>
      %62 = vector.shape_cast %59 : vector<1x2xf32> to vector<1x1x2xf32>
      tpu.vector_store %arg8[%c0_39, %c0_40, %c0_41], %62 {strides = array<i32>} : memref<1x1x2xf32, #tpu.memory_space<vmem>>, vector<1x1x2xf32>,
    } else {
    }
    return
  }
  func.func @transform_0(%arg0: i32, %arg1: i32) -> (i32, i32, i32) {
    %c0_i32 = arith.constant 0 : i32
    %c0_i32_0 = arith.constant 0 : i32
    return %arg0, %arg1, %c0_i32 : i32, i32, i32
  }
  func.func @transform_1(%arg0: i32, %arg1: i32) -> (i32, i32, i32) {
    %c0_i32 = arith.constant 0 : i32
    %c0_i32_0 = arith.constant 0 : i32
    return %arg0, %arg1, %c0_i32 : i32, i32, i32
  }
  func.func @transform_2(%arg0: i32, %arg1: i32) -> (i32, i32) {
    %c0_i32 = arith.constant 0 : i32
    %c0_i32_0 = arith.constant 0 : i32
    %c0_i32_1 = arith.constant 0 : i32
    return %c0_i32, %c0_i32_0 : i32, i32
  }
  func.func @transform_3(%arg0: i32, %arg1: i32) -> (i32, i32) {
    %c0_i32 = arith.constant 0 : i32
    %c0_i32_0 = arith.constant 0 : i32
    %c0_i32_1 = arith.constant 0 : i32
    return %c0_i32, %c0_i32_0 : i32, i32
  }
  func.func @transform_4(%arg0: i32, %arg1: i32) -> (i32, i32) {
    %c0_i32 = arith.constant 0 : i32
    %c0_i32_0 = arith.constant 0 : i32
    %c0_i32_1 = arith.constant 0 : i32
    return %c0_i32, %c0_i32_0 : i32, i32
  }
  func.func @transform_5(%arg0: i32, %arg1: i32) -> (i32, i32) {
    %c0_i32 = arith.constant 0 : i32
    %c0_i32_0 = arith.constant 0 : i32
    %c0_i32_1 = arith.constant 0 : i32
    return %c0_i32, %c0_i32_0 : i32, i32
  }
  func.func @transform_6(%arg0: i32, %arg1: i32) -> (i32, i32, i32) {
    %c0_i32 = arith.constant 0 : i32
    %c0_i32_0 = arith.constant 0 : i32
    %c0_i32_1 = arith.constant 0 : i32
    return %arg0, %c0_i32, %c0_i32_0 : i32, i32, i32
  }
}

</mosaic_0001>

<llo_original>
// kernel: paraphrase_gpt_forward.7
$region0: #{paraphrase_gpt_forward.7}
  #allocation0 [shape = 'u32[]', space=smem, size = 0x4, offset = 0x4, fixed_abs, tag = 'smem constant byte address 0x4 - core index']
  #allocation1 [shape = 'u32[144,128]{1,0:T(1,128)}', space=vmem, size = 0x12000, scoped, tag = 'internal scratch']
  %s0 = inlined_call_operand.vmem [shape: f32[2,8,32], index: 0, kind: input, shape index: {}]
  %s1 = inlined_call_operand.vmem [shape: f32[1,32], index: 1, kind: input, shape index: {}]
  %s2 = inlined_call_operand.vmem [shape: f32[1,32], index: 2, kind: input, shape index: {}]
  %s3 = inlined_call_operand.vmem [shape: bf16[32,96], index: 3, kind: input, shape index: {}]
  %s4 = inlined_call_operand.vmem [shape: f32[1,96], index: 4, kind: input, shape index: {}]
  %s5 = inlined_call_operand.vmem [shape: bf16[2,8,32], index: 5, kind: output, shape index: {0}]
  %s6 = inlined_call_operand.vmem [shape: bf16[2,8,32], index: 6, kind: output, shape index: {1}]
  %s7 = inlined_call_operand.vmem [shape: bf16[2,8,32], index: 7, kind: output, shape index: {2}]
  %8 = xla_tuple %s5, %s6, %s7
  %s9 = sld [smem:[#allocation0]]
  $region69: #{paraphrase_gpt_forward.7} parent=0
    _
  %s11 = ssub.s32 1, %s9
  %s12 = scalar_select 0, %s11, %s9
  loop: start=0, step=1, limit=4
  $region2: #{paraphrase_gpt_forward.7} parent=0 // loop_pre_header
    _
  $region3: #{paraphrase_gpt_forward.7} parent=0 // loop_header
    %s14 = sphi 0, %s18
    %p15 = scmp.ge.s32.totalorder %s14, 4
    %s21 = sphi 0, %s33
    %s22 = sphi 0, %s29
    %s23 = sphi 0, %s21
    %s24 = sphi 0, %s22
    %s25 = sphi 0, %s23
    %s26 = sphi 0, %s24
    %s38 = sphi 0, %s40
    %s41 = sphi 0, %s38
    %s42 = sphi 0, %s41
    %s58 = sphi 0, %s42
    %s62 = sphi 0, %s62
    %s64 = sphi 0, %s62
    %s65 = sphi 0, %s64
    %s79 = sphi 0, %s65
    %s83 = sphi 0, %s83
    %s85 = sphi 0, %s83
    %s86 = sphi 0, %s85
    %s100 = sphi 0, %s86
    %s104 = sphi 0, %s104
    %s106 = sphi 0, %s104
    %s107 = sphi 0, %s106
    %s121 = sphi 0, %s107
    %s125 = sphi 0, %s125
    %s127 = sphi 0, %s125
    %s128 = sphi 0, %s127
    %s142 = sphi 0, %s128
    %s150 = sphi 0, %s152
    %s153 = sphi 0, %s150
    %s154 = sphi 0, %s153
    %s170 = sphi 0, %s154
    %s178 = sphi 0, %s180
    %s181 = sphi 0, %s178
    %s182 = sphi 0, %s181
    %s198 = sphi 0, %s182
    %s206 = sphi 0, %s208
    %s209 = sphi 0, %s206
    %s210 = sphi 0, %s209
    %s226 = sphi 0, %s210
  $region4: #{paraphrase_gpt_forward.7} parent=0 // loop_header_branch
    %17 = sbr.rel (%p15) target = $region8
  $region5: #{paraphrase_gpt_forward.7} parent=0 // loop_body
    %s19 = ssub.s32 %s14, 1
    %s20 = ssub.s32 %s14, 2
    %s27 = sadd.s32 1, %s22
    %p28 = scmp.ge.s32.totalorder %s27, 1
    %s29 = scalar_select %p28, 0, %s27
    %s30 = sadd.s32 1, %s21
    %s31 = scalar_select %p28, %s30, %s21
    %p32 = scmp.ge.s32.totalorder %s31, 2
    %s33 = scalar_select %p32, 0, %s31
    %s34 = ssub.s32 %s21, %s33
    %s35 = ssub.s32 %s22, %s29
    %s36 = sor.u32 %s34, %s35
    %p37 = scmp.eq.s32.totalorder %s36, 0
    %s39 = sadd.s32 %s38, 1
    %s40 = scalar_select %p37, %s38, %s39
    %p43 = pneg %p37
    %p44 = scmp.eq.s32.totalorder %s14, 1
    %p45 = por %p43, %p44
    %p46 = scmp.ne.s32.totalorder %s38, %s41
    %p47 = scmp.eq.s32.totalorder %s14, 0
    %p48 = por %p46, %p47
    %p49 = scmp.ne.s32.totalorder %s38, %s41
    %p50 = scmp.eq.s32.totalorder %s19, 1
    %p51 = por %p49, %p50
    %p52 = scmp.ne.s32.totalorder %s41, %s42
    %p53 = scmp.eq.s32.totalorder %s19, 0
    %p54 = por %p52, %p53
    %p55 = scmp.ne.s32.totalorder %s41, %s42
    %p56 = scmp.eq.s32.totalorder %s20, 1
    %p57 = por %p55, %p56
    %p59 = scmp.ne.s32.totalorder %s42, %s58
    %p60 = scmp.eq.s32.totalorder %s20, 0
    %p61 = por %p59, %p60
    %s63 = sadd.s32 %s62, 1
    %p66 = scmp.eq.s32.totalorder %s14, 1
    %p67 = scmp.ne.s32.totalorder %s62, %s64
    %p68 = scmp.eq.s32.totalorder %s14, 0
    %p69 = por %p67, %p68
    %p70 = scmp.ne.s32.totalorder %s62, %s64
    %p71 = scmp.eq.s32.totalorder %s19, 1
    %p72 = por %p70, %p71
    %p73 = scmp.ne.s32.totalorder %s64, %s65
    %p74 = scmp.eq.s32.totalorder %s19, 0
    %p75 = por %p73, %p74
    %p76 = scmp.ne.s32.totalorder %s64, %s65
    %p77 = scmp.eq.s32.totalorder %s20, 1
    %p78 = por %p76, %p77
    %p80 = scmp.ne.s32.totalorder %s65, %s79
    %p81 = scmp.eq.s32.totalorder %s20, 0
    %p82 = por %p80, %p81
    %s84 = sadd.s32 %s83, 1
    %p87 = scmp.eq.s32.totalorder %s14, 1
    %p88 = scmp.ne.s32.totalorder %s83, %s85
    %p89 = scmp.eq.s32.totalorder %s14, 0
    %p90 = por %p88, %p89
    %p91 = scmp.ne.s32.totalorder %s83, %s85
    %p92 = scmp.eq.s32.totalorder %s19, 1
    %p93 = por %p91, %p92
    %p94 = scmp.ne.s32.totalorder %s85, %s86
    %p95 = scmp.eq.s32.totalorder %s19, 0
    %p96 = por %p94, %p95
    %p97 = scmp.ne.s32.totalorder %s85, %s86
    %p98 = scmp.eq.s32.totalorder %s20, 1
    %p99 = por %p97, %p98
    %p101 = scmp.ne.s32.totalorder %s86, %s100
    %p102 = scmp.eq.s32.totalorder %s20, 0
    %p103 = por %p101, %p102
    %s105 = sadd.s32 %s104, 1
    %p108 = scmp.eq.s32.totalorder %s14, 1
    %p109 = scmp.ne.s32.totalorder %s104, %s106
    %p110 = scmp.eq.s32.totalorder %s14, 0
    %p111 = por %p109, %p110
    %p112 = scmp.ne.s32.totalorder %s104, %s106
    %p113 = scmp.eq.s32.totalorder %s19, 1
    %p114 = por %p112, %p113
    %p115 = scmp.ne.s32.totalorder %s106, %s107
    %p116 = scmp.eq.s32.totalorder %s19, 0
    %p117 = por %p115, %p116
    %p118 = scmp.ne.s32.totalorder %s106, %s107
    %p119 = scmp.eq.s32.totalorder %s20, 1
    %p120 = por %p118, %p119
    %p122 = scmp.ne.s32.totalorder %s107, %s121
    %p123 = scmp.eq.s32.totalorder %s20, 0
    %p124 = por %p122, %p123
    %s126 = sadd.s32 %s125, 1
    %p129 = scmp.eq.s32.totalorder %s14, 1
    %p130 = scmp.ne.s32.totalorder %s125, %s127
    %p131 = scmp.eq.s32.totalorder %s14, 0
    %p132 = por %p130, %p131
    %p133 = scmp.ne.s32.totalorder %s125, %s127
    %p134 = scmp.eq.s32.totalorder %s19, 1
    %p135 = por %p133, %p134
    %p136 = scmp.ne.s32.totalorder %s127, %s128
    %p137 = scmp.eq.s32.totalorder %s19, 0
    %p138 = por %p136, %p137
    %p139 = scmp.ne.s32.totalorder %s127, %s128
    %p140 = scmp.eq.s32.totalorder %s20, 1
    %p141 = por %p139, %p140
    %p143 = scmp.ne.s32.totalorder %s128, %s142
    %p144 = scmp.eq.s32.totalorder %s20, 0
    %p145 = por %p143, %p144
    %s146 = ssub.s32 %s21, %s33
    %s147 = ssub.s32 %s22, %s29
    %s148 = sor.u32 %s146, %s147
    %p149 = scmp.eq.s32.totalorder %s148, 0
    %s151 = sadd.s32 %s150, 1
    %s152 = scalar_select %p149, %s150, %s151
    %p155 = pneg %p149
    %p156 = scmp.eq.s32.totalorder %s14, 1
    %p157 = por %p155, %p156
    %p158 = scmp.ne.s32.totalorder %s150, %s153
    %p159 = scmp.eq.s32.totalorder %s14, 0
    %p160 = por %p158, %p159
    %p161 = scmp.ne.s32.totalorder %s150, %s153
    %p162 = scmp.eq.s32.totalorder %s19, 1
    %p163 = por %p161, %p162
    %p164 = scmp.ne.s32.totalorder %s153, %s154
    %p165 = scmp.eq.s32.totalorder %s19, 0
    %p166 = por %p164, %p165
    %p167 = scmp.ne.s32.totalorder %s153, %s154
    %p168 = scmp.eq.s32.totalorder %s20, 1
    %p169 = por %p167, %p168
    %p171 = scmp.ne.s32.totalorder %s154, %s170
    %p172 = scmp.eq.s32.totalorder %s20, 0
    %p173 = por %p171, %p172
    %s174 = ssub.s32 %s21, %s33
    %s175 = ssub.s32 %s22, %s29
    %s176 = sor.u32 %s174, %s175
    %p177 = scmp.eq.s32.totalorder %s176, 0
    %s179 = sadd.s32 %s178, 1
    %s180 = scalar_select %p177, %s178, %s179
    %p183 = pneg %p177
    %p184 = scmp.eq.s32.totalorder %s14, 1
    %p185 = por %p183, %p184
    %p186 = scmp.ne.s32.totalorder %s178, %s181
    %p187 = scmp.eq.s32.totalorder %s14, 0
    %p188 = por %p186, %p187
    %p189 = scmp.ne.s32.totalorder %s178, %s181
    %p190 = scmp.eq.s32.totalorder %s19, 1
    %p191 = por %p189, %p190
    %p192 = scmp.ne.s32.totalorder %s181, %s182
    %p193 = scmp.eq.s32.totalorder %s19, 0
    %p194 = por %p192, %p193
    %p195 = scmp.ne.s32.totalorder %s181, %s182
    %p196 = scmp.eq.s32.totalorder %s20, 1
    %p197 = por %p195, %p196
    %p199 = scmp.ne.s32.totalorder %s182, %s198
    %p200 = scmp.eq.s32.totalorder %s20, 0
    %p201 = por %p199, %p200
    %s202 = ssub.s32 %s21, %s33
    %s203 = ssub.s32 %s22, %s29
    %s204 = sor.u32 %s202, %s203
    %p205 = scmp.eq.s32.totalorder %s204, 0
    %s207 = sadd.s32 %s206, 1
    %s208 = scalar_select %p205, %s206, %s207
    %p211 = pneg %p205
    %p212 = scmp.eq.s32.totalorder %s14, 1
    %p213 = por %p211, %p212
    %p214 = scmp.ne.s32.totalorder %s206, %s209
    %p215 = scmp.eq.s32.totalorder %s14, 0
    %p216 = por %p214, %p215
    %p217 = scmp.ne.s32.totalorder %s206, %s209
    %p218 = scmp.eq.s32.totalorder %s19, 1
    %p219 = por %p217, %p218
    %p220 = scmp.ne.s32.totalorder %s209, %s210
    %p221 = scmp.eq.s32.totalorder %s19, 0
    %p222 = por %p220, %p221
    %p223 = scmp.ne.s32.totalorder %s209, %s210
    %p224 = scmp.eq.s32.totalorder %s20, 1
    %p225 = por %p223, %p224
    %p227 = scmp.ne.s32.totalorder %s210, %s226
    %p228 = scmp.eq.s32.totalorder %s20, 0
    %p229 = por %p227, %p228
    %p230 = scmp.le.s32.totalorder 1, %s14
    %p231 = scmp.lt.s32.totalorder %s14, 3
    %p232 = pnand %p230, %p231
    %p233 = pneg %p232
    // Predicated region
    $region9: #{paraphrase_gpt_forward.7} parent=5 // pred_check
      _
    $region10: #{paraphrase_gpt_forward.7} parent=5 // pred_check_branch
      %235 = sbr.rel (%p232) target = $region12
    $region11: #{paraphrase_gpt_forward.7} parent=5 // pred_region
      %s236 = ssub.s32 %s14, 1
      // Predicated region
      $region13: #{paraphrase_gpt_forward.7} parent=11 // pred_check
        %p237 = pneg %p75
      $region14: #{paraphrase_gpt_forward.7} parent=11 // pred_check_branch
        %239 = sbr.rel (%p237) target = $region16
      $region15: #{paraphrase_gpt_forward.7} parent=11 // pred_region
        _
      $region16: #{paraphrase_gpt_forward.7} parent=11 // pred_fallthru
        _
      // Predicated region
      $region17: #{paraphrase_gpt_forward.7} parent=11 // pred_check
        %p240 = pneg %p96
      $region18: #{paraphrase_gpt_forward.7} parent=11 // pred_check_branch
        %242 = sbr.rel (%p240) target = $region20
      $region19: #{paraphrase_gpt_forward.7} parent=11 // pred_region
        _
      $region20: #{paraphrase_gpt_forward.7} parent=11 // pred_fallthru
        _
      // Predicated region
      $region21: #{paraphrase_gpt_forward.7} parent=11 // pred_check
        %p243 = pneg %p117
      $region22: #{paraphrase_gpt_forward.7} parent=11 // pred_check_branch
        %245 = sbr.rel (%p243) target = $region24
      $region23: #{paraphrase_gpt_forward.7} parent=11 // pred_region
        _
      $region24: #{paraphrase_gpt_forward.7} parent=11 // pred_fallthru
        _
      // Predicated region
      $region25: #{paraphrase_gpt_forward.7} parent=11 // pred_check
        %p246 = pneg %p138
      $region26: #{paraphrase_gpt_forward.7} parent=11 // pred_check_branch
        %248 = sbr.rel (%p246) target = $region28
      $region27: #{paraphrase_gpt_forward.7} parent=11 // pred_region
        _
      $region28: #{paraphrase_gpt_forward.7} parent=11 // pred_fallthru
        _
    $region12: #{paraphrase_gpt_forward.7} parent=5 // pred_fallthru
      _
    %p249 = scmp.lt.s32.totalorder %s14, 2
    // Predicated region
    $region29: #{paraphrase_gpt_forward.7} parent=5 // pred_check
      %p250 = pneg %p249
    $region30: #{paraphrase_gpt_forward.7} parent=5 // pred_check_branch
      %252 = sbr.rel (%p250) target = $region32
    $region31: #{paraphrase_gpt_forward.7} parent=5 // pred_region
      // Predicated region
      $region33: #{paraphrase_gpt_forward.7} parent=31 // pred_check
        %p253 = pneg %p48
      $region34: #{paraphrase_gpt_forward.7} parent=31 // pred_check_branch
        %255 = sbr.rel (%p253) target = $region36
      $region35: #{paraphrase_gpt_forward.7} parent=31 // pred_region
        %p256 = scmp.lt.s32.totalorder %s21, 1
        %s257 = scalar_select %p256, %s21, 1
        %p258 = scmp.lt.s32.totalorder %s22, 0
        %s259 = scalar_select %p258, %s22, 0
        %s260 = sadd.s32 %s259, %s257
        %s261 = smul.addr %s260, 8
        %s262 = scalar_lea.vmem %s0, %s261
      $region36: #{paraphrase_gpt_forward.7} parent=31 // pred_fallthru
        _
    $region32: #{paraphrase_gpt_forward.7} parent=5 // pred_fallthru
      _
    %p263 = scmp.le.s32.totalorder 1, %s14
    %p264 = scmp.lt.s32.totalorder %s14, 3
    %p265 = pnand %p263, %p264
    %p266 = pneg %p265
    // Predicated region
    $region37: #{paraphrase_gpt_forward.7} parent=5 // pred_check
      _
    $region38: #{paraphrase_gpt_forward.7} parent=5 // pred_check_branch
      %268 = sbr.rel (%p265) target = $region40
    $region39: #{paraphrase_gpt_forward.7} parent=5 // pred_region
      %s269 = ssub.s32 %s14, 1
      %p270 = scmp.lt.s32.totalorder %s23, 1
      %s271 = scalar_select %p270, %s23, 1
      %p272 = scmp.lt.s32.totalorder %s24, 0
      %s273 = scalar_select %p272, %s24, 0
      %s274 = sadd.s32 %s273, %s271
      %s275 = smul.addr %s274, 8
      %s276 = scalar_lea.vmem %s0, %s275
      %p277 = pneg %p54
      %p278 = pneg %p51
      %p279 = pneg %p75
      %p280 = pneg %p72
      %p281 = pneg %p96
      %p282 = pneg %p93
      %p283 = pneg %p117
      %p284 = pneg %p114
      %p285 = pneg %p138
      %p286 = pneg %p135
      %p287 = pneg %p166
      %p288 = pneg %p163
      %p289 = scmp.lt.s32.totalorder %s23, 1
      %s290 = scalar_select %p289, %s23, 1
      %p291 = scmp.lt.s32.totalorder %s24, 0
      %s292 = scalar_select %p291, %s24, 0
      %s293 = sadd.s32 %s292, %s290
      %s294 = smul.addr %s293, 4
      %s295 = scalar_lea.vmem %s5, %s294
      %p296 = pneg %p194
      %p297 = pneg %p191
      %p298 = scmp.lt.s32.totalorder %s23, 1
      %s299 = scalar_select %p298, %s23, 1
      %p300 = scmp.lt.s32.totalorder %s24, 0
      %s301 = scalar_select %p300, %s24, 0
      %s302 = sadd.s32 %s301, %s299
      %s303 = smul.addr %s302, 4
      %s304 = scalar_lea.vmem %s6, %s303
      %p305 = pneg %p222
      %p306 = pneg %p219
      %p307 = scmp.lt.s32.totalorder %s23, 1
      %s308 = scalar_select %p307, %s23, 1
      %p309 = scmp.lt.s32.totalorder %s24, 0
      %s310 = scalar_select %p309, %s24, 0
      %s311 = sadd.s32 %s310, %s308
      %s312 = smul.addr %s311, 4
      %s313 = scalar_lea.vmem %s7, %s312
      %p314 = scmp.lt.s32.totalorder %s23, 1
      %s315 = scalar_select %p314, %s23, 1
      %p316 = scmp.lt.s32.totalorder %s24, 0
      %s317 = scalar_select %p316, %s24, 0
      %s318 = sadd.s32 %s317, %s315
      %s319 = smul.addr %s318, 8
      %s320 = scalar_lea.vmem %s0, %s319
      %p321 = scmp.lt.s32.totalorder %s23, 1
      %s322 = scalar_select %p321, %s23, 1
      %p323 = scmp.lt.s32.totalorder %s24, 0
      %s324 = scalar_select %p323, %s24, 0
      %s325 = sadd.s32 %s324, %s322
      %s326 = smul.addr %s325, 4
      %s327 = scalar_lea.vmem %s5, %s326
      %p328 = scmp.lt.s32.totalorder %s23, 1
      %s329 = scalar_select %p328, %s23, 1
      %p330 = scmp.lt.s32.totalorder %s24, 0
      %s331 = scalar_select %p330, %s24, 0
      %s332 = sadd.s32 %s331, %s329
      %s333 = smul.addr %s332, 4
      %s334 = scalar_lea.vmem %s6, %s333
      %p335 = scmp.lt.s32.totalorder %s23, 1
      %s336 = scalar_select %p335, %s23, 1
      %p337 = scmp.lt.s32.totalorder %s24, 0
      %s338 = scalar_select %p337, %s24, 0
      %s339 = sadd.s32 %s338, %s336
      %s340 = smul.addr %s339, 4
      %s341 = scalar_lea.vmem %s7, %s340
      %v343 = vld [vmem:[%s320] sm:$0xff]
      %vm344 = vcmask 261120
      %v345 = vsel %vm344, %v343, 0.0
      %346 = vadd.xlane.f32.xlu0 %v345
      %v347 = vpop.xlane.xlu0 %346
      %v348 = vrcp.pop 32.0
      %v349 = vmul.f32 %v347, %v348
      %v350 = vsub.f32 %v343, %v349
      %v351 = vmul.f32 %v350, %v350
      %v352 = vsel %vm344, %v351, 0.0
      %353 = vadd.xlane.f32.xlu0 %v352
      %v354 = vpop.xlane.xlu0 %353
      %v355 = vmul.f32 %v354, %v348
      %v356 = vadd.f32 %v355, 1e-05
      %v357 = vrsqrt.pop %v356
      %v358 = vmul.f32 %v350, %v357
      %v359 = vld [vmem:[%s1] sm:$0x1]
      %v361 = vlaneseq
      %v362 = vshrl.u32 %v361, 7
      %v363 = vsub.s32 0, %v362
      %v364 = vrot.slane %v359, %v363
      %v366 = vmul.f32 %v358, %v364
      %v367 = vld [vmem:[%s2] sm:$0x1]
      %v369 = vlaneseq
      %v370 = vshrl.u32 %v369, 7
      %v371 = vsub.s32 0, %v370
      %v372 = vrot.slane %v367, %v371
      %v374 = vadd.f32 %v366, %v372
      %v375 = vpack.c.bf16 %v374, %v374
      %v376 = vld [vmem:[%s3] sm:$0xf]
      %v377 = vld [vmem:[%s3 + $0x4] sm:$0xf]
      %v378 = vld [vmem:[%s3 + $0x8] sm:$0xf]
      %v379 = vld [vmem:[%s3 + $0xc] sm:$0xf]
      %v380 = vld [vmem:[%s4] sm:$0x1]
      %v382 = vlaneseq
      %v383 = vshrl.u32 %v382, 7
      %v384 = vsub.s32 0, %v383
      %v385 = vrot.slane %v380, %v384
      %v391 = vunpack.c.l.b16 %v376
      %v392 = vunpack.c.l.b16 %v377
      %v393 = vunpack.c.l.b16 %v378
      %v394 = vunpack.c.l.b16 %v379
      %v395 = vpack.c.b16 %v392, %v391
      %v396 = vpack.c.b16 %v394, %v393
      %v400 = vsel %vm344, %v375, 0
      %402 = vmatprep.subr.bf16.mxu0 0
      %403 = vmatpush1.bf16.msra.mxu0 0
      %404 = vmatprep.subr.bf16.mxu0 0
      %405 = vmatpush1.bf16.msra.mxu0 0
      %406 = vmatprep.subr.bf16.mxu0 0
      %407 = vmatpush1.bf16.msra.mxu0 0
      %408 = vmatprep.subr.bf16.mxu0 0
      %409 = vmatpush1.bf16.msra.mxu0 0
      %410 = vmatprep.subr.bf16.mxu0 0
      %411 = vmatpush1.bf16.msra.mxu0 0
      %412 = vmatprep.subr.bf16.mxu0 0
      %413 = vmatpush1.bf16.msra.mxu0 0
      %414 = vmatprep.subr.bf16.mxu0 0
      %415 = vmatpush1.bf16.msra.mxu0 %v396
      %416 = vmatprep.subr.bf16.mxu0 0
      %417 = vmatpush1.bf16.msra.mxu0 %v395
      %418 = vmatprep.subr.bf16.mxu0 0
      %419 = vmatpush2.bf16.msra.mxu0 0
      %420 = vmatprep.subr.bf16.mxu0 0
      %421 = vmatpush2.bf16.msra.mxu0 0
      %422 = vmatprep.subr.bf16.mxu0 0
      %423 = vmatpush2.bf16.msra.mxu0 0
      %424 = vmatprep.subr.bf16.mxu0 0
      %425 = vmatpush2.bf16.msra.mxu0 0
      %426 = vmatprep.subr.bf16.mxu0 0
      %427 = vmatpush2.bf16.msra.mxu0 0
      %428 = vmatprep.subr.bf16.mxu0 0
      %429 = vmatpush2.bf16.msra.mxu0 0
      %430 = vmatprep.subr.bf16.mxu0 0
      %431 = vmatpush2.bf16.msra.mxu0 0
      %432 = vmatprep.subr.bf16.mxu0 0
      %433 = vmatpush2.bf16.msra.mxu0 0
      %434 = vmatprep.mubr.bf16.mxu0 0
      %435 = vmatmul.mubr.bf16.gmra.mxu0 %v400
      %v436 = vpop.f32.mrf.mxu0
      %v437 = vadd.f32 %v385, %v436
      %v438 = vpop.f32.mrf.mxu0
      %v439 = vpop.f32.mrf.mxu0
      %v440 = vpop.f32.mrf.mxu0
      %441 = vdwg.mxu0
      %v442 = vpack.c.bf16 %v437, %v437
      %vm443 = vcmask 257024
      %444 = vst.msk [vmem:[%s327] sm:$0xf] %vm443, %v442
      %v446 = vunpack.c.l.b16 %v442
      %v447 = vpack.c.b16 %v446, %v446
      %448 = vrot.lane.b32.xlu0 %v447, 96
      %v449 = vpop.permute.xlu0 %448
      %451 = vst.msk [vmem:[%s334] sm:$0xf] %vm443, %v449
      %452 = vrot.lane.b32.xlu0 %v447, 64
      %v453 = vpop.permute.xlu0 %452
      %455 = vst.msk [vmem:[%s341] sm:$0xf] %vm443, %v453
      %p456 = scmp.lt.s32.totalorder %s23, 1
      %s457 = scalar_select %p456, %s23, 1
      %p458 = scmp.lt.s32.totalorder %s24, 0
      %s459 = scalar_select %p458, %s24, 0
      %s460 = sadd.s32 %s459, %s457
      %s461 = smul.addr %s460, 4
      %s462 = scalar_lea.vmem %s5, %s461
      %p463 = scmp.lt.s32.totalorder %s23, 1
      %s464 = scalar_select %p463, %s23, 1
      %p465 = scmp.lt.s32.totalorder %s24, 0
      %s466 = scalar_select %p465, %s24, 0
      %s467 = sadd.s32 %s466, %s464
      %s468 = smul.addr %s467, 4
      %s469 = scalar_lea.vmem %s6, %s468
      %p470 = scmp.lt.s32.totalorder %s23, 1
      %s471 = scalar_select %p470, %s23, 1
      %p472 = scmp.lt.s32.totalorder %s24, 0
      %s473 = scalar_select %p472, %s24, 0
      %s474 = sadd.s32 %s473, %s471
      %s475 = smul.addr %s474, 4
      %s476 = scalar_lea.vmem %s7, %s475
      // Predicated region
      $region41: #{paraphrase_gpt_forward.7} parent=39 // pred_check
        %p477 = pneg %p163
      $region42: #{paraphrase_gpt_forward.7} parent=39 // pred_check_branch
        %479 = sbr.rel (%p477) target = $region44
      $region43: #{paraphrase_gpt_forward.7} parent=39 // pred_region
        _
      $region44: #{paraphrase_gpt_forward.7} parent=39 // pred_fallthru
        _
      // Predicated region
      $region45: #{paraphrase_gpt_forward.7} parent=39 // pred_check
        %p480 = pneg %p191
      $region46: #{paraphrase_gpt_forward.7} parent=39 // pred_check_branch
        %482 = sbr.rel (%p480) target = $region48
      $region47: #{paraphrase_gpt_forward.7} parent=39 // pred_region
        _
      $region48: #{paraphrase_gpt_forward.7} parent=39 // pred_fallthru
        _
      // Predicated region
      $region49: #{paraphrase_gpt_forward.7} parent=39 // pred_check
        %p483 = pneg %p219
      $region50: #{paraphrase_gpt_forward.7} parent=39 // pred_check_branch
        %485 = sbr.rel (%p483) target = $region52
      $region51: #{paraphrase_gpt_forward.7} parent=39 // pred_region
        _
      $region52: #{paraphrase_gpt_forward.7} parent=39 // pred_fallthru
        _
    $region40: #{paraphrase_gpt_forward.7} parent=5 // pred_fallthru
      _
    %p486 = scmp.le.s32.totalorder 2, %s14
    // Predicated region
    $region53: #{paraphrase_gpt_forward.7} parent=5 // pred_check
      %p487 = pneg %p486
    $region54: #{paraphrase_gpt_forward.7} parent=5 // pred_check_branch
      %489 = sbr.rel (%p487) target = $region56
    $region55: #{paraphrase_gpt_forward.7} parent=5 // pred_region
      %s490 = ssub.s32 %s14, 2
      // Predicated region
      $region57: #{paraphrase_gpt_forward.7} parent=55 // pred_check
        %p491 = pneg %p169
      $region58: #{paraphrase_gpt_forward.7} parent=55 // pred_check_branch
        %493 = sbr.rel (%p491) target = $region60
      $region59: #{paraphrase_gpt_forward.7} parent=55 // pred_region
        %p494 = scmp.lt.s32.totalorder %s25, 1
        %s495 = scalar_select %p494, %s25, 1
        %p496 = scmp.lt.s32.totalorder %s26, 0
        %s497 = scalar_select %p496, %s26, 0
        %s498 = sadd.s32 %s497, %s495
        %s499 = smul.addr %s498, 4
        %s500 = scalar_lea.vmem %s5, %s499
      $region60: #{paraphrase_gpt_forward.7} parent=55 // pred_fallthru
        _
      // Predicated region
      $region61: #{paraphrase_gpt_forward.7} parent=55 // pred_check
        %p501 = pneg %p197
      $region62: #{paraphrase_gpt_forward.7} parent=55 // pred_check_branch
        %503 = sbr.rel (%p501) target = $region64
      $region63: #{paraphrase_gpt_forward.7} parent=55 // pred_region
        %p504 = scmp.lt.s32.totalorder %s25, 1
        %s505 = scalar_select %p504, %s25, 1
        %p506 = scmp.lt.s32.totalorder %s26, 0
        %s507 = scalar_select %p506, %s26, 0
        %s508 = sadd.s32 %s507, %s505
        %s509 = smul.addr %s508, 4
        %s510 = scalar_lea.vmem %s6, %s509
      $region64: #{paraphrase_gpt_forward.7} parent=55 // pred_fallthru
        _
      // Predicated region
      $region65: #{paraphrase_gpt_forward.7} parent=55 // pred_check
        %p511 = pneg %p225
      $region66: #{paraphrase_gpt_forward.7} parent=55 // pred_check_branch
        %513 = sbr.rel (%p511) target = $region68
      $region67: #{paraphrase_gpt_forward.7} parent=55 // pred_region
        %p514 = scmp.lt.s32.totalorder %s25, 1
        %s515 = scalar_select %p514, %s25, 1
        %p516 = scmp.lt.s32.totalorder %s26, 0
        %s517 = scalar_select %p516, %s26, 0
        %s518 = sadd.s32 %s517, %s515
        %s519 = smul.addr %s518, 4
        %s520 = scalar_lea.vmem %s7, %s519
      $region68: #{paraphrase_gpt_forward.7} parent=55 // pred_fallthru
        _
    $region56: #{paraphrase_gpt_forward.7} parent=5 // pred_fallthru
      _
  $region6: #{paraphrase_gpt_forward.7} parent=0 // loop_footer
    %s18 = sadd.s32 1, %s14
  $region7: #{paraphrase_gpt_forward.7} parent=0 // loop_footer_branch
    %13 = sbr.rel target = $region3
  $region8: #{paraphrase_gpt_forward.7} parent=0 // loop_exit
    _

// kernel: paraphrase_gpt_forward.9
$region0: #{paraphrase_gpt_forward.9}
  #allocation0 [shape = 'u32[]', space=smem, size = 0x4, offset = 0x4, fixed_abs, tag = 'smem constant byte address 0x4 - core index']
  #allocation1 [shape = 'u32[144,128]{1,0:T(1,128)}', space=vmem, size = 0x12000, scoped, tag = 'internal scratch']
  %s0 = inlined_call_operand.vmem [shape: bf16[2,8,32], index: 0, kind: input, shape index: {}]
  %s1 = inlined_call_operand.vmem [shape: f32[2,8,32], index: 1, kind: input, shape index: {}]
  %s2 = inlined_call_operand.vmem [shape: bf16[32,32], index: 2, kind: input, shape index: {}]
  %s3 = inlined_call_operand.vmem [shape: f32[1,32], index: 3, kind: input, shape index: {}]
  %s4 = inlined_call_operand.vmem [shape: f32[1,32], index: 4, kind: input, shape index: {}]
  %s5 = inlined_call_operand.vmem [shape: f32[1,32], index: 5, kind: input, shape index: {}]
  %s6 = inlined_call_operand.vmem [shape: bf16[32,128], index: 6, kind: input, shape index: {}]
  %s7 = inlined_call_operand.vmem [shape: f32[1,128], index: 7, kind: input, shape index: {}]
  %s8 = inlined_call_operand.vmem [shape: bf16[128,32], index: 8, kind: input, shape index: {}]
  %s9 = inlined_call_operand.vmem [shape: f32[1,32], index: 9, kind: input, shape index: {}]
  %s10 = inlined_call_operand.vmem [shape: f32[2,8,32], index: 10, kind: output, shape index: {}]
  %s11 = sld [smem:[#allocation0]]
  $region73: #{paraphrase_gpt_forward.9} parent=0
    _
  %s13 = ssub.s32 1, %s11
  %s14 = scalar_select 0, %s13, %s11
  loop: start=0, step=1, limit=4
  $region2: #{paraphrase_gpt_forward.9} parent=0 // loop_pre_header
    _
  $region3: #{paraphrase_gpt_forward.9} parent=0 // loop_header
    %s16 = sphi 0, %s20
    %p17 = scmp.ge.s32.totalorder %s16, 4
    %s23 = sphi 0, %s35
    %s24 = sphi 0, %s31
    %s25 = sphi 0, %s23
    %s26 = sphi 0, %s24
    %s27 = sphi 0, %s25
    %s28 = sphi 0, %s26
    %s40 = sphi 0, %s42
    %s43 = sphi 0, %s40
    %s44 = sphi 0, %s43
    %s60 = sphi 0, %s44
    %s68 = sphi 0, %s70
    %s71 = sphi 0, %s68
    %s72 = sphi 0, %s71
    %s88 = sphi 0, %s72
    %s92 = sphi 0, %s92
    %s94 = sphi 0, %s92
    %s95 = sphi 0, %s94
    %s109 = sphi 0, %s95
    %s113 = sphi 0, %s113
    %s115 = sphi 0, %s113
    %s116 = sphi 0, %s115
    %s130 = sphi 0, %s116
    %s134 = sphi 0, %s134
    %s136 = sphi 0, %s134
    %s137 = sphi 0, %s136
    %s151 = sphi 0, %s137
    %s155 = sphi 0, %s155
    %s157 = sphi 0, %s155
    %s158 = sphi 0, %s157
    %s172 = sphi 0, %s158
    %s176 = sphi 0, %s176
    %s178 = sphi 0, %s176
    %s179 = sphi 0, %s178
    %s193 = sphi 0, %s179
    %s197 = sphi 0, %s197
    %s199 = sphi 0, %s197
    %s200 = sphi 0, %s199
    %s214 = sphi 0, %s200
    %s218 = sphi 0, %s218
    %s220 = sphi 0, %s218
    %s221 = sphi 0, %s220
    %s235 = sphi 0, %s221
    %s239 = sphi 0, %s239
    %s241 = sphi 0, %s239
    %s242 = sphi 0, %s241
    %s256 = sphi 0, %s242
    %s264 = sphi 0, %s266
    %s267 = sphi 0, %s264
    %s268 = sphi 0, %s267
    %s284 = sphi 0, %s268
  $region4: #{paraphrase_gpt_forward.9} parent=0 // loop_header_branch
    %19 = sbr.rel (%p17) target = $region8
  $region5: #{paraphrase_gpt_forward.9} parent=0 // loop_body
    %s21 = ssub.s32 %s16, 1
    %s22 = ssub.s32 %s16, 2
    %s29 = sadd.s32 1, %s24
    %p30 = scmp.ge.s32.totalorder %s29, 1
    %s31 = scalar_select %p30, 0, %s29
    %s32 = sadd.s32 1, %s23
    %s33 = scalar_select %p30, %s32, %s23
    %p34 = scmp.ge.s32.totalorder %s33, 2
    %s35 = scalar_select %p34, 0, %s33
    %s36 = ssub.s32 %s23, %s35
    %s37 = ssub.s32 %s24, %s31
    %s38 = sor.u32 %s36, %s37
    %p39 = scmp.eq.s32.totalorder %s38, 0
    %s41 = sadd.s32 %s40, 1
    %s42 = scalar_select %p39, %s40, %s41
    %p45 = pneg %p39
    %p46 = scmp.eq.s32.totalorder %s16, 1
    %p47 = por %p45, %p46
    %p48 = scmp.ne.s32.totalorder %s40, %s43
    %p49 = scmp.eq.s32.totalorder %s16, 0
    %p50 = por %p48, %p49
    %p51 = scmp.ne.s32.totalorder %s40, %s43
    %p52 = scmp.eq.s32.totalorder %s21, 1
    %p53 = por %p51, %p52
    %p54 = scmp.ne.s32.totalorder %s43, %s44
    %p55 = scmp.eq.s32.totalorder %s21, 0
    %p56 = por %p54, %p55
    %p57 = scmp.ne.s32.totalorder %s43, %s44
    %p58 = scmp.eq.s32.totalorder %s22, 1
    %p59 = por %p57, %p58
    %p61 = scmp.ne.s32.totalorder %s44, %s60
    %p62 = scmp.eq.s32.totalorder %s22, 0
    %p63 = por %p61, %p62
    %s64 = ssub.s32 %s23, %s35
    %s65 = ssub.s32 %s24, %s31
    %s66 = sor.u32 %s64, %s65
    %p67 = scmp.eq.s32.totalorder %s66, 0
    %s69 = sadd.s32 %s68, 1
    %s70 = scalar_select %p67, %s68, %s69
    %p73 = pneg %p67
    %p74 = scmp.eq.s32.totalorder %s16, 1
    %p75 = por %p73, %p74
    %p76 = scmp.ne.s32.totalorder %s68, %s71
    %p77 = scmp.eq.s32.totalorder %s16, 0
    %p78 = por %p76, %p77
    %p79 = scmp.ne.s32.totalorder %s68, %s71
    %p80 = scmp.eq.s32.totalorder %s21, 1
    %p81 = por %p79, %p80
    %p82 = scmp.ne.s32.totalorder %s71, %s72
    %p83 = scmp.eq.s32.totalorder %s21, 0
    %p84 = por %p82, %p83
    %p85 = scmp.ne.s32.totalorder %s71, %s72
    %p86 = scmp.eq.s32.totalorder %s22, 1
    %p87 = por %p85, %p86
    %p89 = scmp.ne.s32.totalorder %s72, %s88
    %p90 = scmp.eq.s32.totalorder %s22, 0
    %p91 = por %p89, %p90
    %s93 = sadd.s32 %s92, 1
    %p96 = scmp.eq.s32.totalorder %s16, 1
    %p97 = scmp.ne.s32.totalorder %s92, %s94
    %p98 = scmp.eq.s32.totalorder %s16, 0
    %p99 = por %p97, %p98
    %p100 = scmp.ne.s32.totalorder %s92, %s94
    %p101 = scmp.eq.s32.totalorder %s21, 1
    %p102 = por %p100, %p101
    %p103 = scmp.ne.s32.totalorder %s94, %s95
    %p104 = scmp.eq.s32.totalorder %s21, 0
    %p105 = por %p103, %p104
    %p106 = scmp.ne.s32.totalorder %s94, %s95
    %p107 = scmp.eq.s32.totalorder %s22, 1
    %p108 = por %p106, %p107
    %p110 = scmp.ne.s32.totalorder %s95, %s109
    %p111 = scmp.eq.s32.totalorder %s22, 0
    %p112 = por %p110, %p111
    %s114 = sadd.s32 %s113, 1
    %p117 = scmp.eq.s32.totalorder %s16, 1
    %p118 = scmp.ne.s32.totalorder %s113, %s115
    %p119 = scmp.eq.s32.totalorder %s16, 0
    %p120 = por %p118, %p119
    %p121 = scmp.ne.s32.totalorder %s113, %s115
    %p122 = scmp.eq.s32.totalorder %s21, 1
    %p123 = por %p121, %p122
    %p124 = scmp.ne.s32.totalorder %s115, %s116
    %p125 = scmp.eq.s32.totalorder %s21, 0
    %p126 = por %p124, %p125
    %p127 = scmp.ne.s32.totalorder %s115, %s116
    %p128 = scmp.eq.s32.totalorder %s22, 1
    %p129 = por %p127, %p128
    %p131 = scmp.ne.s32.totalorder %s116, %s130
    %p132 = scmp.eq.s32.totalorder %s22, 0
    %p133 = por %p131, %p132
    %s135 = sadd.s32 %s134, 1
    %p138 = scmp.eq.s32.totalorder %s16, 1
    %p139 = scmp.ne.s32.totalorder %s134, %s136
    %p140 = scmp.eq.s32.totalorder %s16, 0
    %p141 = por %p139, %p140
    %p142 = scmp.ne.s32.totalorder %s134, %s136
    %p143 = scmp.eq.s32.totalorder %s21, 1
    %p144 = por %p142, %p143
    %p145 = scmp.ne.s32.totalorder %s136, %s137
    %p146 = scmp.eq.s32.totalorder %s21, 0
    %p147 = por %p145, %p146
    %p148 = scmp.ne.s32.totalorder %s136, %s137
    %p149 = scmp.eq.s32.totalorder %s22, 1
    %p150 = por %p148, %p149
    %p152 = scmp.ne.s32.totalorder %s137, %s151
    %p153 = scmp.eq.s32.totalorder %s22, 0
    %p154 = por %p152, %p153
    %s156 = sadd.s32 %s155, 1
    %p159 = scmp.eq.s32.totalorder %s16, 1
    %p160 = scmp.ne.s32.totalorder %s155, %s157
    %p161 = scmp.eq.s32.totalorder %s16, 0
    %p162 = por %p160, %p161
    %p163 = scmp.ne.s32.totalorder %s155, %s157
    %p164 = scmp.eq.s32.totalorder %s21, 1
    %p165 = por %p163, %p164
    %p166 = scmp.ne.s32.totalorder %s157, %s158
    %p167 = scmp.eq.s32.totalorder %s21, 0
    %p168 = por %p166, %p167
    %p169 = scmp.ne.s32.totalorder %s157, %s158
    %p170 = scmp.eq.s32.totalorder %s22, 1
    %p171 = por %p169, %p170
    %p173 = scmp.ne.s32.totalorder %s158, %s172
    %p174 = scmp.eq.s32.totalorder %s22, 0
    %p175 = por %p173, %p174
    %s177 = sadd.s32 %s176, 1
    %p180 = scmp.eq.s32.totalorder %s16, 1
    %p181 = scmp.ne.s32.totalorder %s176, %s178
    %p182 = scmp.eq.s32.totalorder %s16, 0
    %p183 = por %p181, %p182
    %p184 = scmp.ne.s32.totalorder %s176, %s178
    %p185 = scmp.eq.s32.totalorder %s21, 1
    %p186 = por %p184, %p185
    %p187 = scmp.ne.s32.totalorder %s178, %s179
    %p188 = scmp.eq.s32.totalorder %s21, 0
    %p189 = por %p187, %p188
    %p190 = scmp.ne.s32.totalorder %s178, %s179
    %p191 = scmp.eq.s32.totalorder %s22, 1
    %p192 = por %p190, %p191
    %p194 = scmp.ne.s32.totalorder %s179, %s193
    %p195 = scmp.eq.s32.totalorder %s22, 0
    %p196 = por %p194, %p195
    %s198 = sadd.s32 %s197, 1
    %p201 = scmp.eq.s32.totalorder %s16, 1
    %p202 = scmp.ne.s32.totalorder %s197, %s199
    %p203 = scmp.eq.s32.totalorder %s16, 0
    %p204 = por %p202, %p203
    %p205 = scmp.ne.s32.totalorder %s197, %s199
    %p206 = scmp.eq.s32.totalorder %s21, 1
    %p207 = por %p205, %p206
    %p208 = scmp.ne.s32.totalorder %s199, %s200
    %p209 = scmp.eq.s32.totalorder %s21, 0
    %p210 = por %p208, %p209
    %p211 = scmp.ne.s32.totalorder %s199, %s200
    %p212 = scmp.eq.s32.totalorder %s22, 1
    %p213 = por %p211, %p212
    %p215 = scmp.ne.s32.totalorder %s200, %s214
    %p216 = scmp.eq.s32.totalorder %s22, 0
    %p217 = por %p215, %p216
    %s219 = sadd.s32 %s218, 1
    %p222 = scmp.eq.s32.totalorder %s16, 1
    %p223 = scmp.ne.s32.totalorder %s218, %s220
    %p224 = scmp.eq.s32.totalorder %s16, 0
    %p225 = por %p223, %p224
    %p226 = scmp.ne.s32.totalorder %s218, %s220
    %p227 = scmp.eq.s32.totalorder %s21, 1
    %p228 = por %p226, %p227
    %p229 = scmp.ne.s32.totalorder %s220, %s221
    %p230 = scmp.eq.s32.totalorder %s21, 0
    %p231 = por %p229, %p230
    %p232 = scmp.ne.s32.totalorder %s220, %s221
    %p233 = scmp.eq.s32.totalorder %s22, 1
    %p234 = por %p232, %p233
    %p236 = scmp.ne.s32.totalorder %s221, %s235
    %p237 = scmp.eq.s32.totalorder %s22, 0
    %p238 = por %p236, %p237
    %s240 = sadd.s32 %s239, 1
    %p243 = scmp.eq.s32.totalorder %s16, 1
    %p244 = scmp.ne.s32.totalorder %s239, %s241
    %p245 = scmp.eq.s32.totalorder %s16, 0
    %p246 = por %p244, %p245
    %p247 = scmp.ne.s32.totalorder %s239, %s241
    %p248 = scmp.eq.s32.totalorder %s21, 1
    %p249 = por %p247, %p248
    %p250 = scmp.ne.s32.totalorder %s241, %s242
    %p251 = scmp.eq.s32.totalorder %s21, 0
    %p252 = por %p250, %p251
    %p253 = scmp.ne.s32.totalorder %s241, %s242
    %p254 = scmp.eq.s32.totalorder %s22, 1
    %p255 = por %p253, %p254
    %p257 = scmp.ne.s32.totalorder %s242, %s256
    %p258 = scmp.eq.s32.totalorder %s22, 0
    %p259 = por %p257, %p258
    %s260 = ssub.s32 %s23, %s35
    %s261 = ssub.s32 %s24, %s31
    %s262 = sor.u32 %s260, %s261
    %p263 = scmp.eq.s32.totalorder %s262, 0
    %s265 = sadd.s32 %s264, 1
    %s266 = scalar_select %p263, %s264, %s265
    %p269 = pneg %p263
    %p270 = scmp.eq.s32.totalorder %s16, 1
    %p271 = por %p269, %p270
    %p272 = scmp.ne.s32.totalorder %s264, %s267
    %p273 = scmp.eq.s32.totalorder %s16, 0
    %p274 = por %p272, %p273
    %p275 = scmp.ne.s32.totalorder %s264, %s267
    %p276 = scmp.eq.s32.totalorder %s21, 1
    %p277 = por %p275, %p276
    %p278 = scmp.ne.s32.totalorder %s267, %s268
    %p279 = scmp.eq.s32.totalorder %s21, 0
    %p280 = por %p278, %p279
    %p281 = scmp.ne.s32.totalorder %s267, %s268
    %p282 = scmp.eq.s32.totalorder %s22, 1
    %p283 = por %p281, %p282
    %p285 = scmp.ne.s32.totalorder %s268, %s284
    %p286 = scmp.eq.s32.totalorder %s22, 0
    %p287 = por %p285, %p286
    %p288 = scmp.le.s32.totalorder 1, %s16
    %p289 = scmp.lt.s32.totalorder %s16, 3
    %p290 = pnand %p288, %p289
    %p291 = pneg %p290
    // Predicated region
    $region9: #{paraphrase_gpt_forward.9} parent=5 // pred_check
      _
    $region10: #{paraphrase_gpt_forward.9} parent=5 // pred_check_branch
      %293 = sbr.rel (%p290) target = $region12
    $region11: #{paraphrase_gpt_forward.9} parent=5 // pred_region
      %s294 = ssub.s32 %s16, 1
      // Predicated region
      $region13: #{paraphrase_gpt_forward.9} parent=11 // pred_check
        %p295 = pneg %p105
      $region14: #{paraphrase_gpt_forward.9} parent=11 // pred_check_branch
        %297 = sbr.rel (%p295) target = $region16
      $region15: #{paraphrase_gpt_forward.9} parent=11 // pred_region
        _
      $region16: #{paraphrase_gpt_forward.9} parent=11 // pred_fallthru
        _
      // Predicated region
      $region17: #{paraphrase_gpt_forward.9} parent=11 // pred_check
        %p298 = pneg %p126
      $region18: #{paraphrase_gpt_forward.9} parent=11 // pred_check_branch
        %300 = sbr.rel (%p298) target = $region20
      $region19: #{paraphrase_gpt_forward.9} parent=11 // pred_region
        _
      $region20: #{paraphrase_gpt_forward.9} parent=11 // pred_fallthru
        _
      // Predicated region
      $region21: #{paraphrase_gpt_forward.9} parent=11 // pred_check
        %p301 = pneg %p147
      $region22: #{paraphrase_gpt_forward.9} parent=11 // pred_check_branch
        %303 = sbr.rel (%p301) target = $region24
      $region23: #{paraphrase_gpt_forward.9} parent=11 // pred_region
        _
      $region24: #{paraphrase_gpt_forward.9} parent=11 // pred_fallthru
        _
      // Predicated region
      $region25: #{paraphrase_gpt_forward.9} parent=11 // pred_check
        %p304 = pneg %p168
      $region26: #{paraphrase_gpt_forward.9} parent=11 // pred_check_branch
        %306 = sbr.rel (%p304) target = $region28
      $region27: #{paraphrase_gpt_forward.9} parent=11 // pred_region
        _
      $region28: #{paraphrase_gpt_forward.9} parent=11 // pred_fallthru
        _
      // Predicated region
      $region29: #{paraphrase_gpt_forward.9} parent=11 // pred_check
        %p307 = pneg %p189
      $region30: #{paraphrase_gpt_forward.9} parent=11 // pred_check_branch
        %309 = sbr.rel (%p307) target = $region32
      $region31: #{paraphrase_gpt_forward.9} parent=11 // pred_region
        _
      $region32: #{paraphrase_gpt_forward.9} parent=11 // pred_fallthru
        _
      // Predicated region
      $region33: #{paraphrase_gpt_forward.9} parent=11 // pred_check
        %p310 = pneg %p210
      $region34: #{paraphrase_gpt_forward.9} parent=11 // pred_check_branch
        %312 = sbr.rel (%p310) target = $region36
      $region35: #{paraphrase_gpt_forward.9} parent=11 // pred_region
        _
      $region36: #{paraphrase_gpt_forward.9} parent=11 // pred_fallthru
        _
      // Predicated region
      $region37: #{paraphrase_gpt_forward.9} parent=11 // pred_check
        %p313 = pneg %p231
      $region38: #{paraphrase_gpt_forward.9} parent=11 // pred_check_branch
        %315 = sbr.rel (%p313) target = $region40
      $region39: #{paraphrase_gpt_forward.9} parent=11 // pred_region
        _
      $region40: #{paraphrase_gpt_forward.9} parent=11 // pred_fallthru
        _
      // Predicated region
      $region41: #{paraphrase_gpt_forward.9} parent=11 // pred_check
        %p316 = pneg %p252
      $region42: #{paraphrase_gpt_forward.9} parent=11 // pred_check_branch
        %318 = sbr.rel (%p316) target = $region44
      $region43: #{paraphrase_gpt_forward.9} parent=11 // pred_region
        _
      $region44: #{paraphrase_gpt_forward.9} parent=11 // pred_fallthru
        _
    $region12: #{paraphrase_gpt_forward.9} parent=5 // pred_fallthru
      _
    %p319 = scmp.lt.s32.totalorder %s16, 2
    // Predicated region
    $region45: #{paraphrase_gpt_forward.9} parent=5 // pred_check
      %p320 = pneg %p319
    $region46: #{paraphrase_gpt_forward.9} parent=5 // pred_check_branch
      %322 = sbr.rel (%p320) target = $region48
    $region47: #{paraphrase_gpt_forward.9} parent=5 // pred_region
      // Predicated region
      $region49: #{paraphrase_gpt_forward.9} parent=47 // pred_check
        %p323 = pneg %p50
      $region50: #{paraphrase_gpt_forward.9} parent=47 // pred_check_branch
        %325 = sbr.rel (%p323) target = $region52
      $region51: #{paraphrase_gpt_forward.9} parent=47 // pred_region
        %p326 = scmp.lt.s32.totalorder %s23, 1
        %s327 = scalar_select %p326, %s23, 1
        %p328 = scmp.lt.s32.totalorder %s24, 0
        %s329 = scalar_select %p328, %s24, 0
        %s330 = sadd.s32 %s329, %s327
        %s331 = smul.addr %s330, 4
        %s332 = scalar_lea.vmem %s0, %s331
      $region52: #{paraphrase_gpt_forward.9} parent=47 // pred_fallthru
        _
      // Predicated region
      $region53: #{paraphrase_gpt_forward.9} parent=47 // pred_check
        %p333 = pneg %p78
      $region54: #{paraphrase_gpt_forward.9} parent=47 // pred_check_branch
        %335 = sbr.rel (%p333) target = $region56
      $region55: #{paraphrase_gpt_forward.9} parent=47 // pred_region
        %p336 = scmp.lt.s32.totalorder %s23, 1
        %s337 = scalar_select %p336, %s23, 1
        %p338 = scmp.lt.s32.totalorder %s24, 0
        %s339 = scalar_select %p338, %s24, 0
        %s340 = sadd.s32 %s339, %s337
        %s341 = smul.addr %s340, 8
        %s342 = scalar_lea.vmem %s1, %s341
      $region56: #{paraphrase_gpt_forward.9} parent=47 // pred_fallthru
        _
    $region48: #{paraphrase_gpt_forward.9} parent=5 // pred_fallthru
      _
    %p343 = scmp.le.s32.totalorder 1, %s16
    %p344 = scmp.lt.s32.totalorder %s16, 3
    %p345 = pnand %p343, %p344
    %p346 = pneg %p345
    // Predicated region
    $region57: #{paraphrase_gpt_forward.9} parent=5 // pred_check
      _
    $region58: #{paraphrase_gpt_forward.9} parent=5 // pred_check_branch
      %348 = sbr.rel (%p345) target = $region60
    $region59: #{paraphrase_gpt_forward.9} parent=5 // pred_region
      %s349 = ssub.s32 %s16, 1
      %p350 = scmp.lt.s32.totalorder %s25, 1
      %s351 = scalar_select %p350, %s25, 1
      %p352 = scmp.lt.s32.totalorder %s26, 0
      %s353 = scalar_select %p352, %s26, 0
      %s354 = sadd.s32 %s353, %s351
      %s355 = smul.addr %s354, 4
      %s356 = scalar_lea.vmem %s0, %s355
      %p357 = pneg %p56
      %p358 = pneg %p53
      %p359 = scmp.lt.s32.totalorder %s25, 1
      %s360 = scalar_select %p359, %s25, 1
      %p361 = scmp.lt.s32.totalorder %s26, 0
      %s362 = scalar_select %p361, %s26, 0
      %s363 = sadd.s32 %s362, %s360
      %s364 = smul.addr %s363, 8
      %s365 = scalar_lea.vmem %s1, %s364
      %p366 = pneg %p84
      %p367 = pneg %p81
      %p368 = pneg %p105
      %p369 = pneg %p102
      %p370 = pneg %p126
      %p371 = pneg %p123
      %p372 = pneg %p147
      %p373 = pneg %p144
      %p374 = pneg %p168
      %p375 = pneg %p165
      %p376 = pneg %p189
      %p377 = pneg %p186
      %p378 = pneg %p210
      %p379 = pneg %p207
      %p380 = pneg %p231
      %p381 = pneg %p228
      %p382 = pneg %p252
      %p383 = pneg %p249
      %p384 = pneg %p280
      %p385 = pneg %p277
      %p386 = scmp.lt.s32.totalorder %s25, 1
      %s387 = scalar_select %p386, %s25, 1
      %p388 = scmp.lt.s32.totalorder %s26, 0
      %s389 = scalar_select %p388, %s26, 0
      %s390 = sadd.s32 %s389, %s387
      %s391 = smul.addr %s390, 8
      %s392 = scalar_lea.vmem %s10, %s391
      %p393 = scmp.lt.s32.totalorder %s25, 1
      %s394 = scalar_select %p393, %s25, 1
      %p395 = scmp.lt.s32.totalorder %s26, 0
      %s396 = scalar_select %p395, %s26, 0
      %s397 = sadd.s32 %s396, %s394
      %s398 = smul.addr %s397, 4
      %s399 = scalar_lea.vmem %s0, %s398
      %p400 = scmp.lt.s32.totalorder %s25, 1
      %s401 = scalar_select %p400, %s25, 1
      %p402 = scmp.lt.s32.totalorder %s26, 0
      %s403 = scalar_select %p402, %s26, 0
      %s404 = sadd.s32 %s403, %s401
      %s405 = smul.addr %s404, 8
      %s406 = scalar_lea.vmem %s1, %s405
      %p407 = scmp.lt.s32.totalorder %s25, 1
      %s408 = scalar_select %p407, %s25, 1
      %p409 = scmp.lt.s32.totalorder %s26, 0
      %s410 = scalar_select %p409, %s26, 0
      %s411 = sadd.s32 %s410, %s408
      %s412 = smul.addr %s411, 8
      %s413 = scalar_lea.vmem %s10, %s412
      %v415 = vld [vmem:[%s399] sm:$0xf]
      %v416 = vld [vmem:[%s2] sm:$0xf]
      %v417 = vld [vmem:[%s2 + $0x4] sm:$0xf]
      %v418 = vld [vmem:[%s2 + $0x8] sm:$0xf]
      %v419 = vld [vmem:[%s2 + $0xc] sm:$0xf]
      %v420 = vld [vmem:[%s3] sm:$0x1]
      %v422 = vlaneseq
      %v423 = vshrl.u32 %v422, 7
      %v424 = vsub.s32 0, %v423
      %v425 = vrot.slane %v420, %v424
      %v431 = vunpack.c.l.b16 %v416
      %v432 = vunpack.c.l.b16 %v417
      %v433 = vunpack.c.l.b16 %v418
      %v434 = vunpack.c.l.b16 %v419
      %v435 = vpack.c.b16 %v432, %v431
      %v436 = vpack.c.b16 %v434, %v433
      %vm439 = vcmask 261120
      %v441 = vsel %vm439, %v415, 0
      %443 = vmatprep.subr.bf16.mxu0 0
      %444 = vmatpush1.bf16.msra.mxu0 0
      %445 = vmatprep.subr.bf16.mxu0 0
      %446 = vmatpush1.bf16.msra.mxu0 0
      %447 = vmatprep.subr.bf16.mxu0 0
      %448 = vmatpush1.bf16.msra.mxu0 0
      %449 = vmatprep.subr.bf16.mxu0 0
      %450 = vmatpush1.bf16.msra.mxu0 0
      %451 = vmatprep.subr.bf16.mxu0 0
      %452 = vmatpush1.bf16.msra.mxu0 0
      %453 = vmatprep.subr.bf16.mxu0 0
      %454 = vmatpush1.bf16.msra.mxu0 0
      %455 = vmatprep.subr.bf16.mxu0 0
      %456 = vmatpush1.bf16.msra.mxu0 %v436
      %457 = vmatprep.subr.bf16.mxu0 0
      %458 = vmatpush1.bf16.msra.mxu0 %v435
      %459 = vmatprep.subr.bf16.mxu0 0
      %460 = vmatpush2.bf16.msra.mxu0 0
      %461 = vmatprep.subr.bf16.mxu0 0
      %462 = vmatpush2.bf16.msra.mxu0 0
      %463 = vmatprep.subr.bf16.mxu0 0
      %464 = vmatpush2.bf16.msra.mxu0 0
      %465 = vmatprep.subr.bf16.mxu0 0
      %466 = vmatpush2.bf16.msra.mxu0 0
      %467 = vmatprep.subr.bf16.mxu0 0
      %468 = vmatpush2.bf16.msra.mxu0 0
      %469 = vmatprep.subr.bf16.mxu0 0
      %470 = vmatpush2.bf16.msra.mxu0 0
      %471 = vmatprep.subr.bf16.mxu0 0
      %472 = vmatpush2.bf16.msra.mxu0 0
      %473 = vmatprep.subr.bf16.mxu0 0
      %474 = vmatpush2.bf16.msra.mxu0 0
      %475 = vmatprep.mubr.bf16.mxu0 0
      %476 = vmatmul.mubr.bf16.gmra.mxu0 %v441
      %v477 = vpop.f32.mrf.mxu0
      %v478 = vadd.f32 %v425, %v477
      %v479 = vpop.f32.mrf.mxu0
      %v480 = vpop.f32.mrf.mxu0
      %v481 = vpop.f32.mrf.mxu0
      %482 = vdwg.mxu0
      %v483 = vld [vmem:[%s406] sm:$0xff]
      %v484 = vadd.f32 %v483, %v478
      %v485 = vsel %vm439, %v484, 0.0
      %486 = vadd.xlane.f32.xlu0 %v485
      %v487 = vpop.xlane.xlu0 %486
      %v488 = vrcp.pop 32.0
      %v489 = vmul.f32 %v487, %v488
      %v490 = vsub.f32 %v484, %v489
      %v491 = vmul.f32 %v490, %v490
      %v492 = vsel %vm439, %v491, 0.0
      %493 = vadd.xlane.f32.xlu0 %v492
      %v494 = vpop.xlane.xlu0 %493
      %v495 = vmul.f32 %v494, %v488
      %v496 = vadd.f32 %v495, 1e-05
      %v497 = vrsqrt.pop %v496
      %v498 = vmul.f32 %v490, %v497
      %v499 = vld [vmem:[%s4] sm:$0x1]
      %v501 = vlaneseq
      %v502 = vshrl.u32 %v501, 7
      %v503 = vsub.s32 0, %v502
      %v504 = vrot.slane %v499, %v503
      %v506 = vmul.f32 %v498, %v504
      %v507 = vld [vmem:[%s5] sm:$0x1]
      %v509 = vlaneseq
      %v510 = vshrl.u32 %v509, 7
      %v511 = vsub.s32 0, %v510
      %v512 = vrot.slane %v507, %v511
      %v514 = vadd.f32 %v506, %v512
      %v515 = vpack.c.bf16 %v514, %v514
      %v516 = vld [vmem:[%s6] sm:$0xf]
      %v517 = vld [vmem:[%s6 + $0x4] sm:$0xf]
      %v518 = vld [vmem:[%s6 + $0x8] sm:$0xf]
      %v519 = vld [vmem:[%s6 + $0xc] sm:$0xf]
      %v520 = vld [vmem:[%s7] sm:$0x1]
      %v522 = vlaneseq
      %v523 = vshrl.u32 %v522, 7
      %v524 = vsub.s32 0, %v523
      %v525 = vrot.slane %v520, %v524
      %v531 = vunpack.c.l.b16 %v516
      %v532 = vunpack.c.l.b16 %v517
      %v533 = vunpack.c.l.b16 %v518
      %v534 = vunpack.c.l.b16 %v519
      %v535 = vpack.c.b16 %v532, %v531
      %v536 = vpack.c.b16 %v534, %v533
      %v540 = vsel %vm439, %v515, 0
      %542 = vmatprep.subr.bf16.mxu0 0
      %543 = vmatpush1.bf16.msra.mxu0 0
      %544 = vmatprep.subr.bf16.mxu0 0
      %545 = vmatpush1.bf16.msra.mxu0 0
      %546 = vmatprep.subr.bf16.mxu0 0
      %547 = vmatpush1.bf16.msra.mxu0 0
      %548 = vmatprep.subr.bf16.mxu0 0
      %549 = vmatpush1.bf16.msra.mxu0 0
      %550 = vmatprep.subr.bf16.mxu0 0
      %551 = vmatpush1.bf16.msra.mxu0 0
      %552 = vmatprep.subr.bf16.mxu0 0
      %553 = vmatpush1.bf16.msra.mxu0 0
      %554 = vmatprep.subr.bf16.mxu0 0
      %555 = vmatpush1.bf16.msra.mxu0 %v536
      %556 = vmatprep.subr.bf16.mxu0 0
      %557 = vmatpush1.bf16.msra.mxu0 %v535
      %558 = vmatprep.subr.bf16.mxu0 0
      %559 = vmatpush2.bf16.msra.mxu0 0
      %560 = vmatprep.subr.bf16.mxu0 0
      %561 = vmatpush2.bf16.msra.mxu0 0
      %562 = vmatprep.subr.bf16.mxu0 0
      %563 = vmatpush2.bf16.msra.mxu0 0
      %564 = vmatprep.subr.bf16.mxu0 0
      %565 = vmatpush2.bf16.msra.mxu0 0
      %566 = vmatprep.subr.bf16.mxu0 0
      %567 = vmatpush2.bf16.msra.mxu0 0
      %568 = vmatprep.subr.bf16.mxu0 0
      %569 = vmatpush2.bf16.msra.mxu0 0
      %570 = vmatprep.subr.bf16.mxu0 0
      %571 = vmatpush2.bf16.msra.mxu0 0
      %572 = vmatprep.subr.bf16.mxu0 0
      %573 = vmatpush2.bf16.msra.mxu0 0
      %574 = vmatprep.mubr.bf16.mxu0 0
      %575 = vmatmul.mubr.bf16.gmra.mxu0 %v540
      %v576 = vpop.f32.mrf.mxu0
      %v577 = vadd.f32 %v525, %v576
      %v578 = vpop.f32.mrf.mxu0
      %v579 = vpop.f32.mrf.mxu0
      %v580 = vpop.f32.mrf.mxu0
      %581 = vdwg.mxu0
      %v582 = vmul.f32 %v577, %v577
      %v583 = vmul.f32 %v577, %v582
      %v584 = vmul.f32 %v583, 0.044715
      %v585 = vadd.f32 %v577, %v584
      %v586 = vmul.f32 %v585, 0.7978846
      %v587 = vtanh.pop %v586
      %v588 = vadd.f32 %v587, 1.0
      %v589 = vmul.f32 %v588, 0.5
      %v590 = vmul.f32 %v577, %v589
      %v591 = vpack.c.bf16 %v590, %v590
      %v592 = vld [vmem:[%s8] sm:$0xf]
      %v593 = vld [vmem:[%s8 + $0x4] sm:$0xf]
      %v594 = vld [vmem:[%s8 + $0x8] sm:$0xf]
      %v595 = vld [vmem:[%s8 + $0xc] sm:$0xf]
      %v596 = vld [vmem:[%s8 + $0x10] sm:$0xf]
      %v597 = vld [vmem:[%s8 + $0x14] sm:$0xf]
      %v598 = vld [vmem:[%s8 + $0x18] sm:$0xf]
      %v599 = vld [vmem:[%s8 + $0x1c] sm:$0xf]
      %v600 = vld [vmem:[%s8 + $0x20] sm:$0xf]
      %v601 = vld [vmem:[%s8 + $0x24] sm:$0xf]
      %v602 = vld [vmem:[%s8 + $0x28] sm:$0xf]
      %v603 = vld [vmem:[%s8 + $0x2c] sm:$0xf]
      %v604 = vld [vmem:[%s8 + $0x30] sm:$0xf]
      %v605 = vld [vmem:[%s8 + $0x34] sm:$0xf]
      %v606 = vld [vmem:[%s8 + $0x38] sm:$0xf]
      %v607 = vld [vmem:[%s8 + $0x3c] sm:$0xf]
      %v608 = vld [vmem:[%s9] sm:$0x1]
      %v610 = vlaneseq
      %v611 = vshrl.u32 %v610, 7
      %v612 = vsub.s32 0, %v611
      %v613 = vrot.slane %v608, %v612
      %v631 = vunpack.c.l.b16 %v592
      %v632 = vunpack.c.l.b16 %v593
      %v633 = vunpack.c.l.b16 %v594
      %v634 = vunpack.c.l.b16 %v595
      %v635 = vunpack.c.l.b16 %v596
      %v636 = vunpack.c.l.b16 %v597
      %v637 = vunpack.c.l.b16 %v598
      %v638 = vunpack.c.l.b16 %v599
      %v639 = vunpack.c.l.b16 %v600
      %v640 = vunpack.c.l.b16 %v601
      %v641 = vunpack.c.l.b16 %v602
      %v642 = vunpack.c.l.b16 %v603
      %v643 = vunpack.c.l.b16 %v604
      %v644 = vunpack.c.l.b16 %v605
      %v645 = vunpack.c.l.b16 %v606
      %v646 = vunpack.c.l.b16 %v607
      %v647 = vpack.c.b16 %v632, %v631
      %v648 = vpack.c.b16 %v634, %v633
      %v649 = vpack.c.b16 %v636, %v635
      %v650 = vpack.c.b16 %v638, %v637
      %v651 = vpack.c.b16 %v640, %v639
      %v652 = vpack.c.b16 %v642, %v641
      %v653 = vpack.c.b16 %v644, %v643
      %v654 = vpack.c.b16 %v646, %v645
      %663 = vmatprep.subr.bf16.mxu0 0
      %664 = vmatpush1.bf16.msra.mxu0 %v654
      %665 = vmatprep.subr.bf16.mxu0 0
      %666 = vmatpush1.bf16.msra.mxu0 %v653
      %667 = vmatprep.subr.bf16.mxu0 0
      %668 = vmatpush1.bf16.msra.mxu0 %v652
      %669 = vmatprep.subr.bf16.mxu0 0
      %670 = vmatpush1.bf16.msra.mxu0 %v651
      %671 = vmatprep.subr.bf16.mxu0 0
      %672 = vmatpush1.bf16.msra.mxu0 %v650
      %673 = vmatprep.subr.bf16.mxu0 0
      %674 = vmatpush1.bf16.msra.mxu0 %v649
      %675 = vmatprep.subr.bf16.mxu0 0
      %676 = vmatpush1.bf16.msra.mxu0 %v648
      %677 = vmatprep.subr.bf16.mxu0 0
      %678 = vmatpush1.bf16.msra.mxu0 %v647
      %679 = vmatprep.subr.bf16.mxu0 0
      %680 = vmatpush2.bf16.msra.mxu0 0
      %681 = vmatprep.subr.bf16.mxu0 0
      %682 = vmatpush2.bf16.msra.mxu0 0
      %683 = vmatprep.subr.bf16.mxu0 0
      %684 = vmatpush2.bf16.msra.mxu0 0
      %685 = vmatprep.subr.bf16.mxu0 0
      %686 = vmatpush2.bf16.msra.mxu0 0
      %687 = vmatprep.subr.bf16.mxu0 0
      %688 = vmatpush2.bf16.msra.mxu0 0
      %689 = vmatprep.subr.bf16.mxu0 0
      %690 = vmatpush2.bf16.msra.mxu0 0
      %691 = vmatprep.subr.bf16.mxu0 0
      %692 = vmatpush2.bf16.msra.mxu0 0
      %693 = vmatprep.subr.bf16.mxu0 0
      %694 = vmatpush2.bf16.msra.mxu0 0
      %695 = vmatprep.mubr.bf16.mxu0 0
      %696 = vmatmul.mubr.bf16.gmra.mxu0 %v591
      %v697 = vpop.f32.mrf.mxu0
      %v698 = vadd.f32 %v613, %v697
      %v699 = vpop.f32.mrf.mxu0
      %v700 = vpop.f32.mrf.mxu0
      %v701 = vpop.f32.mrf.mxu0
      %702 = vdwg.mxu0
      %v703 = vadd.f32 %v484, %v698
      %704 = vst.msk [vmem:[%s413] sm:$0xff] %vm439, %v703
      %p705 = scmp.lt.s32.totalorder %s25, 1
      %s706 = scalar_select %p705, %s25, 1
      %p707 = scmp.lt.s32.totalorder %s26, 0
      %s708 = scalar_select %p707, %s26, 0
      %s709 = sadd.s32 %s708, %s706
      %s710 = smul.addr %s709, 8
      %s711 = scalar_lea.vmem %s10, %s710
      // Predicated region
      $region61: #{paraphrase_gpt_forward.9} parent=59 // pred_check
        %p712 = pneg %p277
      $region62: #{paraphrase_gpt_forward.9} parent=59 // pred_check_branch
        %714 = sbr.rel (%p712) target = $region64
      $region63: #{paraphrase_gpt_forward.9} parent=59 // pred_region
        _
      $region64: #{paraphrase_gpt_forward.9} parent=59 // pred_fallthru
        _
    $region60: #{paraphrase_gpt_forward.9} parent=5 // pred_fallthru
      _
    %p715 = scmp.le.s32.totalorder 2, %s16
    // Predicated region
    $region65: #{paraphrase_gpt_forward.9} parent=5 // pred_check
      %p716 = pneg %p715
    $region66: #{paraphrase_gpt_forward.9} parent=5 // pred_check_branch
      %718 = sbr.rel (%p716) target = $region68
    $region67: #{paraphrase_gpt_forward.9} parent=5 // pred_region
      %s719 = ssub.s32 %s16, 2
      // Predicated region
      $region69: #{paraphrase_gpt_forward.9} parent=67 // pred_check
        %p720 = pneg %p283
      $region70: #{paraphrase_gpt_forward.9} parent=67 // pred_check_branch
        %722 = sbr.rel (%p720) target = $region72
      $region71: #{paraphrase_gpt_forward.9} parent=67 // pred_region
        %p723 = scmp.lt.s32.totalorder %s27, 1
        %s724 = scalar_select %p723, %s27, 1
        %p725 = scmp.lt.s32.totalorder %s28, 0
        %s726 = scalar_select %p725, %s28, 0
        %s727 = sadd.s32 %s726, %s724
        %s728 = smul.addr %s727, 8
        %s729 = scalar_lea.vmem %s10, %s728
      $region72: #{paraphrase_gpt_forward.9} parent=67 // pred_fallthru
        _
    $region68: #{paraphrase_gpt_forward.9} parent=5 // pred_fallthru
      _
  $region6: #{paraphrase_gpt_forward.9} parent=0 // loop_footer
    %s20 = sadd.s32 1, %s16
  $region7: #{paraphrase_gpt_forward.9} parent=0 // loop_footer_branch
    %15 = sbr.rel target = $region3
  $region8: #{paraphrase_gpt_forward.9} parent=0 // loop_exit
    _

// kernel: paraphrase_gpt_forward.13
$region0: #{paraphrase_gpt_forward.13}
  #allocation0 [shape = 'u32[]', space=smem, size = 0x4, offset = 0x4, fixed_abs, tag = 'smem constant byte address 0x4 - core index']
  #allocation1 [shape = 'u32[144,128]{1,0:T(1,128)}', space=vmem, size = 0x12000, scoped, tag = 'internal scratch']
  #allocation2 [shape = 'f32[1,32]{1,0:T(1,128)}', space=vmem, size = 0x200, scoped, tag = 'scratch operand']
  #allocation3 [shape = 'f32[1,1]{1,0:T(1,128)}', space=vmem, size = 0x200, scoped, tag = 'scratch operand']
  %s0 = inlined_call_operand.vmem [shape: f32[2,8,32], index: 0, kind: input, shape index: {}]
  %s1 = inlined_call_operand.vmem [shape: f32[2,8,1], index: 1, kind: input, shape index: {}]
  %s2 = inlined_call_operand.vmem [shape: f32[1,32], index: 2, kind: input, shape index: {}]
  %s3 = inlined_call_operand.vmem [shape: f32[1,32], index: 3, kind: input, shape index: {}]
  %s4 = inlined_call_operand.vmem [shape: bf16[32,2], index: 4, kind: input, shape index: {}]
  %s5 = inlined_call_operand.vmem [shape: f32[1,2], index: 5, kind: input, shape index: {}]
  %s6 = inlined_call_operand.hbm [shape: f32[2,1,2], index: 6, kind: output, shape index: {}]
  %s7 = sld [smem:[#allocation0]]
  $region65: #{paraphrase_gpt_forward.13} parent=0
    _
  %s9 = ssub.s32 1, %s7
  %s10 = scalar_select 0, %s9, %s7
  $region1: #{paraphrase_gpt_forward.13} parent=0
    #allocation4 [shape = 'u8[1024]{0}', space=vmem, size = 0x400, scoped, tag = 'output window, operand 0']
    #allocation5 [shape = 's32[2]{0}', space=sflag, size = 0x8, scoped, tag = 'scoped memory for paraphrase_gpt_forward.13']
    %11 = vsyncpa [#allocation5], 0
    %s12 = scalar_lea.sflag [#allocation5], 1
    %13 = vsyncpa %s12, 0
    loop: start=0, step=1, limit=4
    $region2: #{paraphrase_gpt_forward.13} parent=1 // loop_pre_header
      _
    $region3: #{paraphrase_gpt_forward.13} parent=1 // loop_header
      %s15 = sphi 0, %s19
      %p16 = scmp.ge.s32.totalorder %s15, 4
      %s22 = sphi 0, %s34
      %s23 = sphi 0, %s30
      %s24 = sphi 0, %s22
      %s25 = sphi 0, %s23
      %s26 = sphi 0, %s24
      %s27 = sphi 0, %s25
      %s39 = sphi 0, %s41
      %s42 = sphi 0, %s39
      %s43 = sphi 0, %s42
      %s59 = sphi 0, %s43
      %s67 = sphi 0, %s69
      %s70 = sphi 0, %s67
      %s71 = sphi 0, %s70
      %s87 = sphi 0, %s71
      %s91 = sphi 0, %s91
      %s93 = sphi 0, %s91
      %s94 = sphi 0, %s93
      %s108 = sphi 0, %s94
      %s112 = sphi 0, %s112
      %s114 = sphi 0, %s112
      %s115 = sphi 0, %s114
      %s129 = sphi 0, %s115
      %s133 = sphi 0, %s133
      %s135 = sphi 0, %s133
      %s136 = sphi 0, %s135
      %s150 = sphi 0, %s136
      %s154 = sphi 0, %s154
      %s156 = sphi 0, %s154
      %s157 = sphi 0, %s156
      %s171 = sphi 0, %s157
      %s177 = sphi 0, %s179
      %s180 = sphi 0, %s177
      %s181 = sphi 0, %s180
      %s197 = sphi 0, %s181
    $region4: #{paraphrase_gpt_forward.13} parent=1 // loop_header_branch
      %18 = sbr.rel (%p16) target = $region8
    $region5: #{paraphrase_gpt_forward.13} parent=1 // loop_body
      %s20 = ssub.s32 %s15, 1
      %s21 = ssub.s32 %s15, 2
      %s28 = sadd.s32 1, %s23
      %p29 = scmp.ge.s32.totalorder %s28, 1
      %s30 = scalar_select %p29, 0, %s28
      %s31 = sadd.s32 1, %s22
      %s32 = scalar_select %p29, %s31, %s22
      %p33 = scmp.ge.s32.totalorder %s32, 2
      %s34 = scalar_select %p33, 0, %s32
      %s35 = ssub.s32 %s22, %s34
      %s36 = ssub.s32 %s23, %s30
      %s37 = sor.u32 %s35, %s36
      %p38 = scmp.eq.s32.totalorder %s37, 0
      %s40 = sadd.s32 %s39, 1
      %s41 = scalar_select %p38, %s39, %s40
      %p44 = pneg %p38
      %p45 = scmp.eq.s32.totalorder %s15, 1
      %p46 = por %p44, %p45
      %p47 = scmp.ne.s32.totalorder %s39, %s42
      %p48 = scmp.eq.s32.totalorder %s15, 0
      %p49 = por %p47, %p48
      %p50 = scmp.ne.s32.totalorder %s39, %s42
      %p51 = scmp.eq.s32.totalorder %s20, 1
      %p52 = por %p50, %p51
      %p53 = scmp.ne.s32.totalorder %s42, %s43
      %p54 = scmp.eq.s32.totalorder %s20, 0
      %p55 = por %p53, %p54
      %p56 = scmp.ne.s32.totalorder %s42, %s43
      %p57 = scmp.eq.s32.totalorder %s21, 1
      %p58 = por %p56, %p57
      %p60 = scmp.ne.s32.totalorder %s43, %s59
      %p61 = scmp.eq.s32.totalorder %s21, 0
      %p62 = por %p60, %p61
      %s63 = ssub.s32 %s22, %s34
      %s64 = ssub.s32 %s23, %s30
      %s65 = sor.u32 %s63, %s64
      %p66 = scmp.eq.s32.totalorder %s65, 0
      %s68 = sadd.s32 %s67, 1
      %s69 = scalar_select %p66, %s67, %s68
      %p72 = pneg %p66
      %p73 = scmp.eq.s32.totalorder %s15, 1
      %p74 = por %p72, %p73
      %p75 = scmp.ne.s32.totalorder %s67, %s70
      %p76 = scmp.eq.s32.totalorder %s15, 0
      %p77 = por %p75, %p76
      %p78 = scmp.ne.s32.totalorder %s67, %s70
      %p79 = scmp.eq.s32.totalorder %s20, 1
      %p80 = por %p78, %p79
      %p81 = scmp.ne.s32.totalorder %s70, %s71
      %p82 = scmp.eq.s32.totalorder %s20, 0
      %p83 = por %p81, %p82
      %p84 = scmp.ne.s32.totalorder %s70, %s71
      %p85 = scmp.eq.s32.totalorder %s21, 1
      %p86 = por %p84, %p85
      %p88 = scmp.ne.s32.totalorder %s71, %s87
      %p89 = scmp.eq.s32.totalorder %s21, 0
      %p90 = por %p88, %p89
      %s92 = sadd.s32 %s91, 1
      %p95 = scmp.eq.s32.totalorder %s15, 1
      %p96 = scmp.ne.s32.totalorder %s91, %s93
      %p97 = scmp.eq.s32.totalorder %s15, 0
      %p98 = por %p96, %p97
      %p99 = scmp.ne.s32.totalorder %s91, %s93
      %p100 = scmp.eq.s32.totalorder %s20, 1
      %p101 = por %p99, %p100
      %p102 = scmp.ne.s32.totalorder %s93, %s94
      %p103 = scmp.eq.s32.totalorder %s20, 0
      %p104 = por %p102, %p103
      %p105 = scmp.ne.s32.totalorder %s93, %s94
      %p106 = scmp.eq.s32.totalorder %s21, 1
      %p107 = por %p105, %p106
      %p109 = scmp.ne.s32.totalorder %s94, %s108
      %p110 = scmp.eq.s32.totalorder %s21, 0
      %p111 = por %p109, %p110
      %s113 = sadd.s32 %s112, 1
      %p116 = scmp.eq.s32.totalorder %s15, 1
      %p117 = scmp.ne.s32.totalorder %s112, %s114
      %p118 = scmp.eq.s32.totalorder %s15, 0
      %p119 = por %p117, %p118
      %p120 = scmp.ne.s32.totalorder %s112, %s114
      %p121 = scmp.eq.s32.totalorder %s20, 1
      %p122 = por %p120, %p121
      %p123 = scmp.ne.s32.totalorder %s114, %s115
      %p124 = scmp.eq.s32.totalorder %s20, 0
      %p125 = por %p123, %p124
      %p126 = scmp.ne.s32.totalorder %s114, %s115
      %p127 = scmp.eq.s32.totalorder %s21, 1
      %p128 = por %p126, %p127
      %p130 = scmp.ne.s32.totalorder %s115, %s129
      %p131 = scmp.eq.s32.totalorder %s21, 0
      %p132 = por %p130, %p131
      %s134 = sadd.s32 %s133, 1
      %p137 = scmp.eq.s32.totalorder %s15, 1
      %p138 = scmp.ne.s32.totalorder %s133, %s135
      %p139 = scmp.eq.s32.totalorder %s15, 0
      %p140 = por %p138, %p139
      %p141 = scmp.ne.s32.totalorder %s133, %s135
      %p142 = scmp.eq.s32.totalorder %s20, 1
      %p143 = por %p141, %p142
      %p144 = scmp.ne.s32.totalorder %s135, %s136
      %p145 = scmp.eq.s32.totalorder %s20, 0
      %p146 = por %p144, %p145
      %p147 = scmp.ne.s32.totalorder %s135, %s136
      %p148 = scmp.eq.s32.totalorder %s21, 1
      %p149 = por %p147, %p148
      %p151 = scmp.ne.s32.totalorder %s136, %s150
      %p152 = scmp.eq.s32.totalorder %s21, 0
      %p153 = por %p151, %p152
      %s155 = sadd.s32 %s154, 1
      %p158 = scmp.eq.s32.totalorder %s15, 1
      %p159 = scmp.ne.s32.totalorder %s154, %s156
      %p160 = scmp.eq.s32.totalorder %s15, 0
      %p161 = por %p159, %p160
      %p162 = scmp.ne.s32.totalorder %s154, %s156
      %p163 = scmp.eq.s32.totalorder %s20, 1
      %p164 = por %p162, %p163
      %p165 = scmp.ne.s32.totalorder %s156, %s157
      %p166 = scmp.eq.s32.totalorder %s20, 0
      %p167 = por %p165, %p166
      %p168 = scmp.ne.s32.totalorder %s156, %s157
      %p169 = scmp.eq.s32.totalorder %s21, 1
      %p170 = por %p168, %p169
      %p172 = scmp.ne.s32.totalorder %s157, %s171
      %p173 = scmp.eq.s32.totalorder %s21, 0
      %p174 = por %p172, %p173
      %s175 = ssub.s32 %s22, %s34
      %p176 = scmp.eq.s32.totalorder %s175, 0
      %s178 = sadd.s32 %s177, 1
      %s179 = scalar_select %p176, %s177, %s178
      %p182 = pneg %p176
      %p183 = scmp.eq.s32.totalorder %s15, 1
      %p184 = por %p182, %p183
      %p185 = scmp.ne.s32.totalorder %s177, %s180
      %p186 = scmp.eq.s32.totalorder %s15, 0
      %p187 = por %p185, %p186
      %p188 = scmp.ne.s32.totalorder %s177, %s180
      %p189 = scmp.eq.s32.totalorder %s20, 1
      %p190 = por %p188, %p189
      %p191 = scmp.ne.s32.totalorder %s180, %s181
      %p192 = scmp.eq.s32.totalorder %s20, 0
      %p193 = por %p191, %p192
      %p194 = scmp.ne.s32.totalorder %s180, %s181
      %p195 = scmp.eq.s32.totalorder %s21, 1
      %p196 = por %p194, %p195
      %p198 = scmp.ne.s32.totalorder %s181, %s197
      %p199 = scmp.eq.s32.totalorder %s21, 0
      %p200 = por %p198, %p199
      %p201 = scmp.le.s32.totalorder 1, %s15
      %p202 = scmp.lt.s32.totalorder %s15, 3
      %p203 = pnand %p201, %p202
      %p204 = pneg %p203
      // Predicated region
      $region9: #{paraphrase_gpt_forward.13} parent=5 // pred_check
        _
      $region10: #{paraphrase_gpt_forward.13} parent=5 // pred_check_branch
        %206 = sbr.rel (%p203) target = $region12
      $region11: #{paraphrase_gpt_forward.13} parent=5 // pred_region
        %s207 = ssub.s32 %s15, 1
        // Predicated region
        $region13: #{paraphrase_gpt_forward.13} parent=11 // pred_check
          %p208 = pneg %p104
        $region14: #{paraphrase_gpt_forward.13} parent=11 // pred_check_branch
          %210 = sbr.rel (%p208) target = $region16
        $region15: #{paraphrase_gpt_forward.13} parent=11 // pred_region
          _
        $region16: #{paraphrase_gpt_forward.13} parent=11 // pred_fallthru
          _
        // Predicated region
        $region17: #{paraphrase_gpt_forward.13} parent=11 // pred_check
          %p211 = pneg %p125
        $region18: #{paraphrase_gpt_forward.13} parent=11 // pred_check_branch
          %213 = sbr.rel (%p211) target = $region20
        $region19: #{paraphrase_gpt_forward.13} parent=11 // pred_region
          _
        $region20: #{paraphrase_gpt_forward.13} parent=11 // pred_fallthru
          _
        // Predicated region
        $region21: #{paraphrase_gpt_forward.13} parent=11 // pred_check
          %p214 = pneg %p146
        $region22: #{paraphrase_gpt_forward.13} parent=11 // pred_check_branch
          %216 = sbr.rel (%p214) target = $region24
        $region23: #{paraphrase_gpt_forward.13} parent=11 // pred_region
          _
        $region24: #{paraphrase_gpt_forward.13} parent=11 // pred_fallthru
          _
        // Predicated region
        $region25: #{paraphrase_gpt_forward.13} parent=11 // pred_check
          %p217 = pneg %p167
        $region26: #{paraphrase_gpt_forward.13} parent=11 // pred_check_branch
          %219 = sbr.rel (%p217) target = $region28
        $region27: #{paraphrase_gpt_forward.13} parent=11 // pred_region
          _
        $region28: #{paraphrase_gpt_forward.13} parent=11 // pred_fallthru
          _
      $region12: #{paraphrase_gpt_forward.13} parent=5 // pred_fallthru
        _
      %p220 = scmp.lt.s32.totalorder %s15, 2
      // Predicated region
      $region29: #{paraphrase_gpt_forward.13} parent=5 // pred_check
        %p221 = pneg %p220
      $region30: #{paraphrase_gpt_forward.13} parent=5 // pred_check_branch
        %223 = sbr.rel (%p221) target = $region32
      $region31: #{paraphrase_gpt_forward.13} parent=5 // pred_region
        // Predicated region
        $region33: #{paraphrase_gpt_forward.13} parent=31 // pred_check
          %p224 = pneg %p49
        $region34: #{paraphrase_gpt_forward.13} parent=31 // pred_check_branch
          %226 = sbr.rel (%p224) target = $region36
        $region35: #{paraphrase_gpt_forward.13} parent=31 // pred_region
          %p227 = scmp.lt.s32.totalorder %s22, 1
          %s228 = scalar_select %p227, %s22, 1
          %p229 = scmp.lt.s32.totalorder %s23, 0
          %s230 = scalar_select %p229, %s23, 0
          %s231 = sadd.s32 %s230, %s228
          %s232 = smul.addr %s231, 8
          %s233 = scalar_lea.vmem %s0, %s232
        $region36: #{paraphrase_gpt_forward.13} parent=31 // pred_fallthru
          _
        // Predicated region
        $region37: #{paraphrase_gpt_forward.13} parent=31 // pred_check
          %p234 = pneg %p77
        $region38: #{paraphrase_gpt_forward.13} parent=31 // pred_check_branch
          %236 = sbr.rel (%p234) target = $region40
        $region39: #{paraphrase_gpt_forward.13} parent=31 // pred_region
          %p237 = scmp.lt.s32.totalorder %s22, 1
          %s238 = scalar_select %p237, %s22, 1
          %p239 = scmp.lt.s32.totalorder %s23, 0
          %s240 = scalar_select %p239, %s23, 0
          %s241 = sadd.s32 %s240, %s238
          %s242 = smul.addr %s241, 8
          %s243 = scalar_lea.vmem %s1, %s242
        $region40: #{paraphrase_gpt_forward.13} parent=31 // pred_fallthru
          _
      $region32: #{paraphrase_gpt_forward.13} parent=5 // pred_fallthru
        _
      %p244 = scmp.le.s32.totalorder 1, %s15
      %p245 = scmp.lt.s32.totalorder %s15, 3
      %p246 = pnand %p244, %p245
      %p247 = pneg %p246
      // Predicated region
      $region41: #{paraphrase_gpt_forward.13} parent=5 // pred_check
        _
      $region42: #{paraphrase_gpt_forward.13} parent=5 // pred_check_branch
        %249 = sbr.rel (%p246) target = $region44
      $region43: #{paraphrase_gpt_forward.13} parent=5 // pred_region
        %s250 = ssub.s32 %s15, 1
        %p251 = scmp.lt.s32.totalorder %s24, 1
        %s252 = scalar_select %p251, %s24, 1
        %p253 = scmp.lt.s32.totalorder %s25, 0
        %s254 = scalar_select %p253, %s25, 0
        %s255 = sadd.s32 %s254, %s252
        %s256 = smul.addr %s255, 8
        %s257 = scalar_lea.vmem %s0, %s256
        %p258 = pneg %p55
        %p259 = pneg %p52
        %p260 = scmp.lt.s32.totalorder %s24, 1
        %s261 = scalar_select %p260, %s24, 1
        %p262 = scmp.lt.s32.totalorder %s25, 0
        %s263 = scalar_select %p262, %s25, 0
        %s264 = sadd.s32 %s263, %s261
        %s265 = smul.addr %s264, 8
        %s266 = scalar_lea.vmem %s1, %s265
        %p267 = pneg %p83
        %p268 = pneg %p80
        %p269 = pneg %p104
        %p270 = pneg %p101
        %p271 = pneg %p125
        %p272 = pneg %p122
        %p273 = pneg %p146
        %p274 = pneg %p143
        %p275 = pneg %p167
        %p276 = pneg %p164
        %p277 = pneg %p193
        %p278 = pneg %p190
        %s279 = sand.u32 %s180, 1
        %s280 = scalar_lea.sflag [#allocation5], %s279
        %s281 = sand.u32 %s180, 1
        %s282 = scalar_lea.vmem [#allocation4], %s281
        %p283 = scmp.lt.s32.totalorder %s24, 1
        %s284 = scalar_select %p283, %s24, 1
        %p285 = scmp.lt.s32.totalorder %s25, 0
        %s286 = scalar_select %p285, %s25, 0
        %s287 = sadd.s32 %s286, %s284
        %s288 = smul.addr %s287, 8
        %s289 = scalar_lea.vmem %s0, %s288
        %p290 = scmp.lt.s32.totalorder %s24, 1
        %s291 = scalar_select %p290, %s24, 1
        %p292 = scmp.lt.s32.totalorder %s25, 0
        %s293 = scalar_select %p292, %s25, 0
        %s294 = sadd.s32 %s293, %s291
        %s295 = smul.addr %s294, 8
        %s296 = scalar_lea.vmem %s1, %s295
        %p298 = scmp.eq.s32.totalorder %s25, 0
        // Predicated region
        $region45: #{paraphrase_gpt_forward.13} parent=43 // pred_check
          %p299 = pneg %p298
        $region46: #{paraphrase_gpt_forward.13} parent=43 // pred_check_branch
          %301 = sbr.rel (%p299) target = $region48
        $region47: #{paraphrase_gpt_forward.13} parent=43 // pred_region
          %vm302 = vcmask 253952
          %303 = vst.msk [vmem:[#allocation2] sm:$0x1] %vm302, 0.0
          %vm304 = vcmask 0
          %305 = vst.msk [vmem:[#allocation3] sm:$0x1] %vm304, 0.0
        $region48: #{paraphrase_gpt_forward.13} parent=43 // pred_fallthru
          _
        %v306 = vld [vmem:[%s289] sm:$0xff]
        %vm307 = vcmask 261120
        %v308 = vsel %vm307, %v306, 0.0
        %309 = vadd.xlane.f32.xlu0 %v308
        %v310 = vpop.xlane.xlu0 %309
        %v311 = vrcp.pop 32.0
        %v312 = vmul.f32 %v310, %v311
        %v313 = vsub.f32 %v306, %v312
        %v314 = vmul.f32 %v313, %v313
        %v315 = vsel %vm307, %v314, 0.0
        %316 = vadd.xlane.f32.xlu0 %v315
        %v317 = vpop.xlane.xlu0 %316
        %v318 = vmul.f32 %v317, %v311
        %v319 = vadd.f32 %v318, 1e-05
        %v320 = vrsqrt.pop %v319
        %v321 = vmul.f32 %v313, %v320
        %v322 = vld [vmem:[%s2] sm:$0x1]
        %v324 = vlaneseq
        %v325 = vshrl.u32 %v324, 7
        %v326 = vsub.s32 0, %v325
        %v327 = vrot.slane %v322, %v326
        %v329 = vmul.f32 %v321, %v327
        %v330 = vld [vmem:[%s3] sm:$0x1]
        %v332 = vlaneseq
        %v333 = vshrl.u32 %v332, 7
        %v334 = vsub.s32 0, %v333
        %v335 = vrot.slane %v330, %v334
        %v337 = vadd.f32 %v329, %v335
        %v338 = vld [vmem:[%s296] sm:$0xff]
        %v339 = vld [vmem:[#allocation2] sm:$0x1]
        %341 = vset.pattern.permute.xlu0 0
        %342 = vperm.xlu0 %341, %v338
        %v343 = vpop.permute.xlu0 %342
        %v345 = vmul.f32 %v337, %v343
        %v346 = vsel %vm307, %v345, 0.0
        %v347 = vrot.slane %v346, 4
        %v348 = vadd.f32 %v346, %v347
        %v349 = vrot.slane %v348, 2
        %v350 = vadd.f32 %v348, %v349
        %v351 = vrot.slane %v350, 1
        %v352 = vadd.f32 %v350, %v351
        %v353 = vadd.f32 %v339, %v352
        %vm354 = vcmask 253952
        %355 = vst.msk [vmem:[#allocation2] sm:$0x1] %vm354, %v353
        %v356 = vld [vmem:[#allocation3] sm:$0x1]
        %vm357 = vcmask 7168
        %v358 = vsel %vm357, %v338, 0.0
        %v359 = vrot.slane %v358, 4
        %v360 = vadd.f32 %v358, %v359
        %v361 = vrot.slane %v360, 2
        %v362 = vadd.f32 %v360, %v361
        %v363 = vrot.slane %v362, 1
        %v364 = vadd.f32 %v362, %v363
        %v365 = vadd.f32 %v356, %v364
        %vm366 = vcmask 0
        %367 = vst.msk [vmem:[#allocation3] sm:$0x1] %vm366, %v365
        // Predicated region
        $region49: #{paraphrase_gpt_forward.13} parent=43 // pred_check
          %p368 = pneg %p298
        $region50: #{paraphrase_gpt_forward.13} parent=43 // pred_check_branch
          %370 = sbr.rel (%p368) target = $region52
        $region51: #{paraphrase_gpt_forward.13} parent=43 // pred_region
          %v371 = vld [vmem:[#allocation3] sm:$0x1]
          %vm372 = vcmp.eq.f32.partialorder %v371, 0.0
          %v373 = vsel %vm372, 1e-08, %v371
          %v374 = vld [vmem:[#allocation2] sm:$0x1]
          %376 = vset.pattern.permute.xlu0 0
          %377 = vperm.xlu0 %376, %v373
          %v378 = vpop.permute.xlu0 %377
          %v380 = vlaneseq
          %v381 = vshrl.u32 %v380, 7
          %v382 = vsub.s32 0, %v381
          %v383 = vrot.slane %v378, %v382
          %v384 = vrcp.pop %v383
          %v385 = vmul.f32 %v374, %v384
          %v386 = vpack.c.bf16 %v385, %v385
          %v387 = vld [vmem:[%s4] sm:$0xf]
          %v388 = vld [vmem:[%s4 + $0x4] sm:$0xf]
          %v389 = vld [vmem:[%s4 + $0x8] sm:$0xf]
          %v390 = vld [vmem:[%s4 + $0xc] sm:$0xf]
          %v391 = vld [vmem:[%s5] sm:$0x1]
          %v396 = vunpack.c.l.b16 %v387
          %v397 = vunpack.c.l.b16 %v388
          %v398 = vunpack.c.l.b16 %v389
          %v399 = vunpack.c.l.b16 %v390
          %v400 = vpack.c.b16 %v397, %v396
          %v401 = vpack.c.b16 %v399, %v398
          %v405 = vsel %vm307, %v386, 0
          %407 = vmatprep.subr.bf16.mxu0 0
          %408 = vmatpush1.bf16.msra.mxu0 0
          %409 = vmatprep.subr.bf16.mxu0 0
          %410 = vmatpush1.bf16.msra.mxu0 0
          %411 = vmatprep.subr.bf16.mxu0 0
          %412 = vmatpush1.bf16.msra.mxu0 0
          %413 = vmatprep.subr.bf16.mxu0 0
          %414 = vmatpush1.bf16.msra.mxu0 0
          %415 = vmatprep.subr.bf16.mxu0 0
          %416 = vmatpush1.bf16.msra.mxu0 0
          %417 = vmatprep.subr.bf16.mxu0 0
          %418 = vmatpush1.bf16.msra.mxu0 0
          %419 = vmatprep.subr.bf16.mxu0 0
          %420 = vmatpush1.bf16.msra.mxu0 %v401
          %421 = vmatprep.subr.bf16.mxu0 0
          %422 = vmatpush1.bf16.msra.mxu0 %v400
          %423 = vmatprep.subr.bf16.mxu0 0
          %424 = vmatpush2.bf16.msra.mxu0 0
          %425 = vmatprep.subr.bf16.mxu0 0
          %426 = vmatpush2.bf16.msra.mxu0 0
          %427 = vmatprep.subr.bf16.mxu0 0
          %428 = vmatpush2.bf16.msra.mxu0 0
          %429 = vmatprep.subr.bf16.mxu0 0
          %430 = vmatpush2.bf16.msra.mxu0 0
          %431 = vmatprep.subr.bf16.mxu0 0
          %432 = vmatpush2.bf16.msra.mxu0 0
          %433 = vmatprep.subr.bf16.mxu0 0
          %434 = vmatpush2.bf16.msra.mxu0 0
          %435 = vmatprep.subr.bf16.mxu0 0
          %436 = vmatpush2.bf16.msra.mxu0 0
          %437 = vmatprep.subr.bf16.mxu0 0
          %438 = vmatpush2.bf16.msra.mxu0 0
          %439 = vmatprep.mubr.bf16.mxu0 0
          %440 = vmatmul.mubr.bf16.gmra.mxu0 %v405
          %v441 = vpop.f32.mrf.mxu0
          %v442 = vadd.f32 %v391, %v441
          %v443 = vpop.f32.mrf.mxu0
          %v444 = vpop.f32.mrf.mxu0
          %v445 = vpop.f32.mrf.mxu0
          %446 = vdwg.mxu0
          %vm447 = vcmask 8192
          %448 = vst.msk [vmem:[%s282] sm:$0x1] %vm447, %v442
        $region52: #{paraphrase_gpt_forward.13} parent=43 // pred_fallthru
          _
        %s449 = sand.u32 %s180, 1
        %s450 = scalar_lea.sflag [#allocation5], %s449
        %s451 = sand.u32 %s180, 1
        %s452 = scalar_lea.vmem [#allocation4], %s451
        // Predicated region
        $region53: #{paraphrase_gpt_forward.13} parent=43 // pred_check
          %p453 = pneg %p190
        $region54: #{paraphrase_gpt_forward.13} parent=43 // pred_check_branch
          %455 = sbr.rel (%p453) target = $region56
        $region55: #{paraphrase_gpt_forward.13} parent=43 // pred_region
          %s457 = ssub.s32 16, 16
          %458 = vsyncadd %s450, %s457
          %s459 = smul.addr %s24, 16
          %s460 = scalar_lea.hbm %s6, %s459
          %s462 = sshll.u32 %s452, 4
          %s463 = int_to_ptr.vmem [resolvable:$true] %s462
          %465 = dma.vmem_to_hbm [thread:$0]  %s463, 16, %s460, %s450
        $region56: #{paraphrase_gpt_forward.13} parent=43 // pred_fallthru
          _
      $region44: #{paraphrase_gpt_forward.13} parent=5 // pred_fallthru
        _
      %p466 = scmp.le.s32.totalorder 2, %s15
      // Predicated region
      $region57: #{paraphrase_gpt_forward.13} parent=5 // pred_check
        %p467 = pneg %p466
      $region58: #{paraphrase_gpt_forward.13} parent=5 // pred_check_branch
        %469 = sbr.rel (%p467) target = $region60
      $region59: #{paraphrase_gpt_forward.13} parent=5 // pred_region
        %s470 = ssub.s32 %s15, 2
        // Predicated region
        $region61: #{paraphrase_gpt_forward.13} parent=59 // pred_check
          %p471 = pneg %p196
        $region62: #{paraphrase_gpt_forward.13} parent=59 // pred_check_branch
          %473 = sbr.rel (%p471) target = $region64
        $region63: #{paraphrase_gpt_forward.13} parent=59 // pred_region
          %s474 = sand.u32 %s181, 1
          %s475 = scalar_lea.sflag [#allocation5], %s474
          %s476 = sand.u32 %s181, 1
          %s477 = scalar_lea.vmem [#allocation4], %s476
          %478 = dma.done %s475, 16
        $region64: #{paraphrase_gpt_forward.13} parent=59 // pred_fallthru
          _
      $region60: #{paraphrase_gpt_forward.13} parent=5 // pred_fallthru
        _
    $region6: #{paraphrase_gpt_forward.13} parent=1 // loop_footer
      %s19 = sadd.s32 1, %s15
    $region7: #{paraphrase_gpt_forward.13} parent=1 // loop_footer_branch
      %14 = sbr.rel target = $region3
    $region8: #{paraphrase_gpt_forward.13} parent=1 // loop_exit
      _
    %479 = vsyncpa [#allocation5], 1
    %s480 = scalar_lea.sflag [#allocation5], 1
    %481 = vsyncpa %s480, 1

// kernel: paraphrase_gpt_forward.8
$region0: #{paraphrase_gpt_forward.8}
  #allocation0 [shape = 'u32[]', space=smem, size = 0x4, offset = 0x4, fixed_abs, tag = 'smem constant byte address 0x4 - core index']
  #allocation1 [shape = 'u32[144,128]{1,0:T(1,128)}', space=vmem, size = 0x12000, scoped, tag = 'internal scratch']
  #allocation2 [shape = 'f32[2,8,1]{2,1,0:T(8,128)}', space=vmem, size = 0x2000, scoped, tag = 'scratch operand']
  #allocation3 [shape = 'f32[2,8,1]{2,1,0:T(8,128)}', space=vmem, size = 0x2000, scoped, tag = 'scratch operand']
  #allocation4 [shape = 'f32[2,8,16]{2,1,0:T(8,128)}', space=vmem, size = 0x2000, scoped, tag = 'scratch operand']
  #allocation5 [shape = 's32[1]{0}', space=sflag, size = 0x4, scoped, tag = 'scoped memory for paraphrase_gpt_forward.8']
  #allocation6 [shape = 's32[1]{0:T(128)S(6)}', space=smem, size = 0x200, scoped, tag = 'prefetched SMEM operand 0']
  #allocation7 [shape = 's32[1]{0:T(128)S(6)}', space=smem, size = 0x200, scoped, tag = 'prefetched SMEM operand 1']
  #allocation8 [shape = 's32[1]{0:T(128)S(6)}', space=smem, size = 0x200, scoped, tag = 'prefetched SMEM operand 2']
  #allocation9 [shape = 'u8[512]{0}', space=smem, size = 0x200, scoped, tag = 'prefetched SMEM operand 3']
  %s0 = inlined_call_operand.<no memory space> [shape: s32[1], index: 0, kind: input, shape index: {}, may-alias: {0,1}]
  %s1 = inlined_call_operand.<no memory space> [shape: s32[1], index: 1, kind: input, shape index: {}, may-alias: {0,1}]
  %s2 = inlined_call_operand.<no memory space> [shape: s32[1], index: 2, kind: input, shape index: {}]
  %s3 = inlined_call_operand.vmem [shape: s32[2], index: 3, kind: input, shape index: {}]
  %s4 = inlined_call_operand.vmem [shape: bf16[2,8,32], index: 4, kind: input, shape index: {}]
  %s5 = inlined_call_operand.vmem [shape: bf16[2,8,32], index: 5, kind: input, shape index: {}]
  %s6 = inlined_call_operand.vmem [shape: bf16[2,8,32], index: 6, kind: input, shape index: {}]
  %s7 = inlined_call_operand.vmem [shape: f32[2,1,8], index: 7, kind: input, shape index: {}]
  %s8 = inlined_call_operand.vmem [shape: bf16[2,8,32], index: 8, kind: output, shape index: {}]
  %s9 = sld [smem:[#allocation0]]
  $region65: #{paraphrase_gpt_forward.8} parent=0
    _
  %s11 = ssub.s32 1, %s9
  %s12 = scalar_select 0, %s11, %s9
  %13 = sst [smem:[#allocation6]] %s0
  %14 = sst [smem:[#allocation7]] %s1
  %15 = sst [smem:[#allocation8]] %s2
  %s16 = sshll.u32 %s3, 4
  %s17 = int_to_ptr.vmem [resolvable:$true] %s16
  %19 = dma.vmem_to_smem %s17, 16, [#allocation9], [#allocation5]
  %20 = dma.done [#allocation5], 16
  %21 = sfence
  loop: start=0, step=1, limit=4
  $region2: #{paraphrase_gpt_forward.8} parent=0 // loop_pre_header
    _
  $region3: #{paraphrase_gpt_forward.8} parent=0 // loop_header
    %s23 = sphi 0, %s27
    %p24 = scmp.ge.s32.totalorder %s23, 4
    %s30 = sphi 0, %s42
    %s31 = sphi 0, %s38
    %s32 = sphi 0, %s30
    %s33 = sphi 0, %s31
    %s34 = sphi 0, %s32
    %s35 = sphi 0, %s33
    %s49 = sphi 0, %s51
    %s52 = sphi 0, %s49
    %s53 = sphi 0, %s52
    %s69 = sphi 0, %s53
    %s79 = sphi 0, %s81
    %s82 = sphi 0, %s79
    %s83 = sphi 0, %s82
    %s99 = sphi 0, %s83
    %s109 = sphi 0, %s111
    %s112 = sphi 0, %s109
    %s113 = sphi 0, %s112
    %s129 = sphi 0, %s113
    %s139 = sphi 0, %s141
    %s142 = sphi 0, %s139
    %s143 = sphi 0, %s142
    %s159 = sphi 0, %s143
    %s169 = sphi 0, %s171
    %s172 = sphi 0, %s169
    %s173 = sphi 0, %s172
    %s189 = sphi 0, %s173
  $region4: #{paraphrase_gpt_forward.8} parent=0 // loop_header_branch
    %26 = sbr.rel (%p24) target = $region8
  $region5: #{paraphrase_gpt_forward.8} parent=0 // loop_body
    %s28 = ssub.s32 %s23, 1
    %s29 = ssub.s32 %s23, 2
    %s36 = sadd.s32 1, %s31
    %p37 = scmp.ge.s32.totalorder %s36, 1
    %s38 = scalar_select %p37, 0, %s36
    %s39 = sadd.s32 1, %s30
    %s40 = scalar_select %p37, %s39, %s30
    %p41 = scmp.ge.s32.totalorder %s40, 2
    %s42 = scalar_select %p41, 0, %s40
    %s43 = sld [smem:[#allocation6 + %s31]]
    %s44 = sld [smem:[#allocation6 + %s38]]
    %s45 = ssub.s32 %s30, %s42
    %s46 = ssub.s32 %s43, %s44
    %s47 = sor.u32 %s45, %s46
    %p48 = scmp.eq.s32.totalorder %s47, 0
    %s50 = sadd.s32 %s49, 1
    %s51 = scalar_select %p48, %s49, %s50
    %p54 = pneg %p48
    %p55 = scmp.eq.s32.totalorder %s23, 1
    %p56 = por %p54, %p55
    %p57 = scmp.ne.s32.totalorder %s49, %s52
    %p58 = scmp.eq.s32.totalorder %s23, 0
    %p59 = por %p57, %p58
    %p60 = scmp.ne.s32.totalorder %s49, %s52
    %p61 = scmp.eq.s32.totalorder %s28, 1
    %p62 = por %p60, %p61
    %p63 = scmp.ne.s32.totalorder %s52, %s53
    %p64 = scmp.eq.s32.totalorder %s28, 0
    %p65 = por %p63, %p64
    %p66 = scmp.ne.s32.totalorder %s52, %s53
    %p67 = scmp.eq.s32.totalorder %s29, 1
    %p68 = por %p66, %p67
    %p70 = scmp.ne.s32.totalorder %s53, %s69
    %p71 = scmp.eq.s32.totalorder %s29, 0
    %p72 = por %p70, %p71
    %s73 = sld [smem:[#allocation7 + %s31]]
    %s74 = sld [smem:[#allocation7 + %s38]]
    %s75 = ssub.s32 %s30, %s42
    %s76 = ssub.s32 %s73, %s74
    %s77 = sor.u32 %s75, %s76
    %p78 = scmp.eq.s32.totalorder %s77, 0
    %s80 = sadd.s32 %s79, 1
    %s81 = scalar_select %p78, %s79, %s80
    %p84 = pneg %p78
    %p85 = scmp.eq.s32.totalorder %s23, 1
    %p86 = por %p84, %p85
    %p87 = scmp.ne.s32.totalorder %s79, %s82
    %p88 = scmp.eq.s32.totalorder %s23, 0
    %p89 = por %p87, %p88
    %p90 = scmp.ne.s32.totalorder %s79, %s82
    %p91 = scmp.eq.s32.totalorder %s28, 1
    %p92 = por %p90, %p91
    %p93 = scmp.ne.s32.totalorder %s82, %s83
    %p94 = scmp.eq.s32.totalorder %s28, 0
    %p95 = por %p93, %p94
    %p96 = scmp.ne.s32.totalorder %s82, %s83
    %p97 = scmp.eq.s32.totalorder %s29, 1
    %p98 = por %p96, %p97
    %p100 = scmp.ne.s32.totalorder %s83, %s99
    %p101 = scmp.eq.s32.totalorder %s29, 0
    %p102 = por %p100, %p101
    %s103 = sld [smem:[#allocation7 + %s31]]
    %s104 = sld [smem:[#allocation7 + %s38]]
    %s105 = ssub.s32 %s30, %s42
    %s106 = ssub.s32 %s103, %s104
    %s107 = sor.u32 %s105, %s106
    %p108 = scmp.eq.s32.totalorder %s107, 0
    %s110 = sadd.s32 %s109, 1
    %s111 = scalar_select %p108, %s109, %s110
    %p114 = pneg %p108
    %p115 = scmp.eq.s32.totalorder %s23, 1
    %p116 = por %p114, %p115
    %p117 = scmp.ne.s32.totalorder %s109, %s112
    %p118 = scmp.eq.s32.totalorder %s23, 0
    %p119 = por %p117, %p118
    %p120 = scmp.ne.s32.totalorder %s109, %s112
    %p121 = scmp.eq.s32.totalorder %s28, 1
    %p122 = por %p120, %p121
    %p123 = scmp.ne.s32.totalorder %s112, %s113
    %p124 = scmp.eq.s32.totalorder %s28, 0
    %p125 = por %p123, %p124
    %p126 = scmp.ne.s32.totalorder %s112, %s113
    %p127 = scmp.eq.s32.totalorder %s29, 1
    %p128 = por %p126, %p127
    %p130 = scmp.ne.s32.totalorder %s113, %s129
    %p131 = scmp.eq.s32.totalorder %s29, 0
    %p132 = por %p130, %p131
    %s133 = sld [smem:[#allocation7 + %s31]]
    %s134 = sld [smem:[#allocation7 + %s38]]
    %s135 = ssub.s32 %s30, %s42
    %s136 = ssub.s32 %s133, %s134
    %s137 = sor.u32 %s135, %s136
    %p138 = scmp.eq.s32.totalorder %s137, 0
    %s140 = sadd.s32 %s139, 1
    %s141 = scalar_select %p138, %s139, %s140
    %p144 = pneg %p138
    %p145 = scmp.eq.s32.totalorder %s23, 1
    %p146 = por %p144, %p145
    %p147 = scmp.ne.s32.totalorder %s139, %s142
    %p148 = scmp.eq.s32.totalorder %s23, 0
    %p149 = por %p147, %p148
    %p150 = scmp.ne.s32.totalorder %s139, %s142
    %p151 = scmp.eq.s32.totalorder %s28, 1
    %p152 = por %p150, %p151
    %p153 = scmp.ne.s32.totalorder %s142, %s143
    %p154 = scmp.eq.s32.totalorder %s28, 0
    %p155 = por %p153, %p154
    %p156 = scmp.ne.s32.totalorder %s142, %s143
    %p157 = scmp.eq.s32.totalorder %s29, 1
    %p158 = por %p156, %p157
    %p160 = scmp.ne.s32.totalorder %s143, %s159
    %p161 = scmp.eq.s32.totalorder %s29, 0
    %p162 = por %p160, %p161
    %s163 = sld [smem:[#allocation6 + %s31]]
    %s164 = sld [smem:[#allocation6 + %s38]]
    %s165 = ssub.s32 %s30, %s42
    %s166 = ssub.s32 %s163, %s164
    %s167 = sor.u32 %s165, %s166
    %p168 = scmp.eq.s32.totalorder %s167, 0
    %s170 = sadd.s32 %s169, 1
    %s171 = scalar_select %p168, %s169, %s170
    %p174 = pneg %p168
    %p175 = scmp.eq.s32.totalorder %s23, 1
    %p176 = por %p174, %p175
    %p177 = scmp.ne.s32.totalorder %s169, %s172
    %p178 = scmp.eq.s32.totalorder %s23, 0
    %p179 = por %p177, %p178
    %p180 = scmp.ne.s32.totalorder %s169, %s172
    %p181 = scmp.eq.s32.totalorder %s28, 1
    %p182 = por %p180, %p181
    %p183 = scmp.ne.s32.totalorder %s172, %s173
    %p184 = scmp.eq.s32.totalorder %s28, 0
    %p185 = por %p183, %p184
    %p186 = scmp.ne.s32.totalorder %s172, %s173
    %p187 = scmp.eq.s32.totalorder %s29, 1
    %p188 = por %p186, %p187
    %p190 = scmp.ne.s32.totalorder %s173, %s189
    %p191 = scmp.eq.s32.totalorder %s29, 0
    %p192 = por %p190, %p191
    %p193 = scmp.le.s32.totalorder 1, %s23
    %p194 = scmp.lt.s32.totalorder %s23, 3
    %p195 = pnand %p193, %p194
    %p196 = pneg %p195
    // Predicated region
    $region9: #{paraphrase_gpt_forward.8} parent=5 // pred_check
      _
    $region10: #{paraphrase_gpt_forward.8} parent=5 // pred_check_branch
      %198 = sbr.rel (%p195) target = $region12
    $region11: #{paraphrase_gpt_forward.8} parent=5 // pred_region
      %s199 = ssub.s32 %s23, 1
    $region12: #{paraphrase_gpt_forward.8} parent=5 // pred_fallthru
      _
    %p200 = scmp.lt.s32.totalorder %s23, 2
    // Predicated region
    $region13: #{paraphrase_gpt_forward.8} parent=5 // pred_check
      %p201 = pneg %p200
    $region14: #{paraphrase_gpt_forward.8} parent=5 // pred_check_branch
      %203 = sbr.rel (%p201) target = $region16
    $region15: #{paraphrase_gpt_forward.8} parent=5 // pred_region
      // Predicated region
      $region17: #{paraphrase_gpt_forward.8} parent=15 // pred_check
        %p204 = pneg %p59
      $region18: #{paraphrase_gpt_forward.8} parent=15 // pred_check_branch
        %206 = sbr.rel (%p204) target = $region20
      $region19: #{paraphrase_gpt_forward.8} parent=15 // pred_region
        %s207 = sld [smem:[#allocation6 + %s31]]
        %p208 = scmp.lt.s32.totalorder %s30, 1
        %s209 = scalar_select %p208, %s30, 1
        %p210 = scmp.lt.s32.totalorder %s207, 0
        %s211 = scalar_select %p210, %s207, 0
        %s212 = sadd.s32 %s211, %s209
        %s213 = smul.addr %s212, 4
        %s214 = scalar_lea.vmem %s4, %s213
        %s215 = sld [smem:[#allocation6 + %s31]]
      $region20: #{paraphrase_gpt_forward.8} parent=15 // pred_fallthru
        _
      // Predicated region
      $region21: #{paraphrase_gpt_forward.8} parent=15 // pred_check
        %p216 = pneg %p89
      $region22: #{paraphrase_gpt_forward.8} parent=15 // pred_check_branch
        %218 = sbr.rel (%p216) target = $region24
      $region23: #{paraphrase_gpt_forward.8} parent=15 // pred_region
        %s219 = sld [smem:[#allocation7 + %s31]]
        %p220 = scmp.lt.s32.totalorder %s30, 1
        %s221 = scalar_select %p220, %s30, 1
        %p222 = scmp.lt.s32.totalorder %s219, 0
        %s223 = scalar_select %p222, %s219, 0
        %s224 = sadd.s32 %s223, %s221
        %s225 = smul.addr %s224, 4
        %s226 = scalar_lea.vmem %s5, %s225
        %s227 = sld [smem:[#allocation7 + %s31]]
      $region24: #{paraphrase_gpt_forward.8} parent=15 // pred_fallthru
        _
      // Predicated region
      $region25: #{paraphrase_gpt_forward.8} parent=15 // pred_check
        %p228 = pneg %p119
      $region26: #{paraphrase_gpt_forward.8} parent=15 // pred_check_branch
        %230 = sbr.rel (%p228) target = $region28
      $region27: #{paraphrase_gpt_forward.8} parent=15 // pred_region
        %s231 = sld [smem:[#allocation7 + %s31]]
        %p232 = scmp.lt.s32.totalorder %s30, 1
        %s233 = scalar_select %p232, %s30, 1
        %p234 = scmp.lt.s32.totalorder %s231, 0
        %s235 = scalar_select %p234, %s231, 0
        %s236 = sadd.s32 %s235, %s233
        %s237 = smul.addr %s236, 4
        %s238 = scalar_lea.vmem %s6, %s237
        %s239 = sld [smem:[#allocation7 + %s31]]
      $region28: #{paraphrase_gpt_forward.8} parent=15 // pred_fallthru
        _
      // Predicated region
      $region29: #{paraphrase_gpt_forward.8} parent=15 // pred_check
        %p240 = pneg %p149
      $region30: #{paraphrase_gpt_forward.8} parent=15 // pred_check_branch
        %242 = sbr.rel (%p240) target = $region32
      $region31: #{paraphrase_gpt_forward.8} parent=15 // pred_region
        %s243 = sld [smem:[#allocation7 + %s31]]
        %p244 = scmp.lt.s32.totalorder %s30, 1
        %s245 = scalar_select %p244, %s30, 1
        %p246 = scmp.lt.s32.totalorder %s243, 0
        %s247 = scalar_select %p246, %s243, 0
        %s248 = sadd.s32 %s247, %s245
        %s249 = scalar_lea.vmem %s7, %s248
        %s250 = sld [smem:[#allocation7 + %s31]]
      $region32: #{paraphrase_gpt_forward.8} parent=15 // pred_fallthru
        _
    $region16: #{paraphrase_gpt_forward.8} parent=5 // pred_fallthru
      _
    %p251 = scmp.le.s32.totalorder 1, %s23
    %p252 = scmp.lt.s32.totalorder %s23, 3
    %p253 = pnand %p251, %p252
    %p254 = pneg %p253
    // Predicated region
    $region33: #{paraphrase_gpt_forward.8} parent=5 // pred_check
      _
    $region34: #{paraphrase_gpt_forward.8} parent=5 // pred_check_branch
      %256 = sbr.rel (%p253) target = $region36
    $region35: #{paraphrase_gpt_forward.8} parent=5 // pred_region
      %s257 = ssub.s32 %s23, 1
      %s258 = sld [smem:[#allocation6 + %s33]]
      %p259 = scmp.lt.s32.totalorder %s32, 1
      %s260 = scalar_select %p259, %s32, 1
      %p261 = scmp.lt.s32.totalorder %s258, 0
      %s262 = scalar_select %p261, %s258, 0
      %s263 = sadd.s32 %s262, %s260
      %s264 = smul.addr %s263, 4
      %s265 = scalar_lea.vmem %s4, %s264
      %p266 = pneg %p65
      %p267 = pneg %p62
      %s268 = sld [smem:[#allocation7 + %s33]]
      %p269 = scmp.lt.s32.totalorder %s32, 1
      %s270 = scalar_select %p269, %s32, 1
      %p271 = scmp.lt.s32.totalorder %s268, 0
      %s272 = scalar_select %p271, %s268, 0
      %s273 = sadd.s32 %s272, %s270
      %s274 = smul.addr %s273, 4
      %s275 = scalar_lea.vmem %s5, %s274
      %p276 = pneg %p95
      %p277 = pneg %p92
      %s278 = sld [smem:[#allocation7 + %s33]]
      %p279 = scmp.lt.s32.totalorder %s32, 1
      %s280 = scalar_select %p279, %s32, 1
      %p281 = scmp.lt.s32.totalorder %s278, 0
      %s282 = scalar_select %p281, %s278, 0
      %s283 = sadd.s32 %s282, %s280
      %s284 = smul.addr %s283, 4
      %s285 = scalar_lea.vmem %s6, %s284
      %p286 = pneg %p125
      %p287 = pneg %p122
      %s288 = sld [smem:[#allocation7 + %s33]]
      %p289 = scmp.lt.s32.totalorder %s32, 1
      %s290 = scalar_select %p289, %s32, 1
      %p291 = scmp.lt.s32.totalorder %s288, 0
      %s292 = scalar_select %p291, %s288, 0
      %s293 = sadd.s32 %s292, %s290
      %s294 = scalar_lea.vmem %s7, %s293
      %p295 = pneg %p155
      %p296 = pneg %p152
      %p297 = pneg %p185
      %p298 = pneg %p182
      %s299 = sld [smem:[#allocation6 + %s33]]
      %p300 = scmp.lt.s32.totalorder %s32, 1
      %s301 = scalar_select %p300, %s32, 1
      %p302 = scmp.lt.s32.totalorder %s299, 0
      %s303 = scalar_select %p302, %s299, 0
      %s304 = sadd.s32 %s303, %s301
      %s305 = smul.addr %s304, 4
      %s306 = scalar_lea.vmem %s8, %s305
      %s307 = sld [smem:[#allocation6 + %s33]]
      %p308 = scmp.lt.s32.totalorder %s32, 1
      %s309 = scalar_select %p308, %s32, 1
      %p310 = scmp.lt.s32.totalorder %s307, 0
      %s311 = scalar_select %p310, %s307, 0
      %s312 = sadd.s32 %s311, %s309
      %s313 = smul.addr %s312, 4
      %s314 = scalar_lea.vmem %s4, %s313
      %s315 = sld [smem:[#allocation6 + %s33]]
      %s316 = sld [smem:[#allocation7 + %s33]]
      %p317 = scmp.lt.s32.totalorder %s32, 1
      %s318 = scalar_select %p317, %s32, 1
      %p319 = scmp.lt.s32.totalorder %s316, 0
      %s320 = scalar_select %p319, %s316, 0
      %s321 = sadd.s32 %s320, %s318
      %s322 = smul.addr %s321, 4
      %s323 = scalar_lea.vmem %s5, %s322
      %s324 = sld [smem:[#allocation7 + %s33]]
      %s325 = sld [smem:[#allocation7 + %s33]]
      %p326 = scmp.lt.s32.totalorder %s32, 1
      %s327 = scalar_select %p326, %s32, 1
      %p328 = scmp.lt.s32.totalorder %s325, 0
      %s329 = scalar_select %p328, %s325, 0
      %s330 = sadd.s32 %s329, %s327
      %s331 = smul.addr %s330, 4
      %s332 = scalar_lea.vmem %s6, %s331
      %s333 = sld [smem:[#allocation7 + %s33]]
      %s334 = sld [smem:[#allocation7 + %s33]]
      %p335 = scmp.lt.s32.totalorder %s32, 1
      %s336 = scalar_select %p335, %s32, 1
      %p337 = scmp.lt.s32.totalorder %s334, 0
      %s338 = scalar_select %p337, %s334, 0
      %s339 = sadd.s32 %s338, %s336
      %s340 = scalar_lea.vmem %s7, %s339
      %s341 = sld [smem:[#allocation7 + %s33]]
      %s342 = sld [smem:[#allocation6 + %s33]]
      %p343 = scmp.lt.s32.totalorder %s32, 1
      %s344 = scalar_select %p343, %s32, 1
      %p345 = scmp.lt.s32.totalorder %s342, 0
      %s346 = scalar_select %p345, %s342, 0
      %s347 = sadd.s32 %s346, %s344
      %s348 = smul.addr %s347, 4
      %s349 = scalar_lea.vmem %s8, %s348
      %s350 = sld [smem:[#allocation6 + %s33]]
      %s352 = sld [smem:[#allocation6 + %s33]]
      %s353 = sld [smem:[#allocation7 + %s33]]
      %p354 = scmp.eq.s32.totalorder %s353, 0
      // Predicated region
      $region37: #{paraphrase_gpt_forward.8} parent=35 // pred_check
        %p355 = pneg %p354
      $region38: #{paraphrase_gpt_forward.8} parent=35 // pred_check_branch
        %357 = sbr.rel (%p355) target = $region40
      $region39: #{paraphrase_gpt_forward.8} parent=35 // pred_region
        %vm358 = vcmask 7168
        %359 = vst.msk [vmem:[#allocation2] sm:$0xff] %vm358, -inf
        %360 = vst.msk [vmem:[#allocation2 + $0x8] sm:$0xff] %vm358, -inf
        %361 = vst.msk [vmem:[#allocation3] sm:$0xff] %vm358, 0.0
        %362 = vst.msk [vmem:[#allocation3 + $0x8] sm:$0xff] %vm358, 0.0
        %vm363 = vcmask 130048
        %364 = vst.msk [vmem:[#allocation4] sm:$0xff] %vm363, 0.0
        %365 = vst.msk [vmem:[#allocation4 + $0x8] sm:$0xff] %vm363, 0.0
      $region40: #{paraphrase_gpt_forward.8} parent=35 // pred_fallthru
        _
      %s366 = smul.u32 %s353, 8
      %s367 = sadd.s32 %s366, 7
      %s368 = smul.u32 %s352, 8
      %p369 = scmp.le.s32.totalorder %s367, %s368
      %s370 = sadd.s32 %s32, %s353
      %s371 = sld [smem:[#allocation9 + %s370]]
      %p372 = scmp.eq.s32.totalorder %s371, 1
      %p373 = pnand %p369, %p372
      %p374 = pneg %p373
      // Predicated region
      $region41: #{paraphrase_gpt_forward.8} parent=35 // pred_check
        _
      $region42: #{paraphrase_gpt_forward.8} parent=35 // pred_check_branch
        %376 = sbr.rel (%p373) target = $region44
      $region43: #{paraphrase_gpt_forward.8} parent=35 // pred_region
        %v377 = vld [vmem:[%s314] sm:$0xf]
        %v378 = vld [vmem:[%s323] sm:$0xf]
        %v379 = vld [vmem:[%s332] sm:$0xf]
        %vm380 = vcmask 130048
        %v382 = vsel %vm380, %v377, 0
        %v385 = vsel %vm380, %v378, 0
        %387 = vmatprep.subr.bf16.mxu0 0
        %388 = vmatpush1.bf16.xpose.msra.mxu0 0
        %389 = vmatprep.subr.bf16.mxu0 0
        %390 = vmatpush1.bf16.xpose.msra.mxu0 0
        %391 = vmatprep.subr.bf16.mxu0 0
        %392 = vmatpush1.bf16.xpose.msra.mxu0 0
        %393 = vmatprep.subr.bf16.mxu0 0
        %394 = vmatpush1.bf16.xpose.msra.mxu0 0
        %395 = vmatprep.subr.bf16.mxu0 0
        %396 = vmatpush1.bf16.xpose.msra.mxu0 0
        %397 = vmatprep.subr.bf16.mxu0 0
        %398 = vmatpush1.bf16.xpose.msra.mxu0 0
        %399 = vmatprep.subr.bf16.mxu0 0
        %400 = vmatpush1.bf16.xpose.msra.mxu0 0
        %401 = vmatprep.subr.bf16.mxu0 0
        %402 = vmatpush1.bf16.xpose.msra.mxu0 %v385
        %403 = vmatprep.subr.bf16.mxu0 0
        %404 = vmatpush2.bf16.xpose.msra.mxu0 0
        %405 = vmatprep.subr.bf16.mxu0 0
        %406 = vmatpush2.bf16.xpose.msra.mxu0 0
        %407 = vmatprep.subr.bf16.mxu0 0
        %408 = vmatpush2.bf16.xpose.msra.mxu0 0
        %409 = vmatprep.subr.bf16.mxu0 0
        %410 = vmatpush2.bf16.xpose.msra.mxu0 0
        %411 = vmatprep.subr.bf16.mxu0 0
        %412 = vmatpush2.bf16.xpose.msra.mxu0 0
        %413 = vmatprep.subr.bf16.mxu0 0
        %414 = vmatpush2.bf16.xpose.msra.mxu0 0
        %415 = vmatprep.subr.bf16.mxu0 0
        %416 = vmatpush2.bf16.xpose.msra.mxu0 0
        %417 = vmatprep.subr.bf16.mxu0 0
        %418 = vmatpush2.bf16.xpose.msra.mxu0 0
        %419 = vmatprep.mubr.bf16.mxu0 0
        %420 = vmatmul.mubr.bf16.gmra.mxu0 %v382
        %v421 = vpop.f32.mrf.mxu0
        %v422 = vadd.f32 0.0, %v421
        %v423 = vpop.f32.mrf.mxu0
        %v424 = vpop.f32.mrf.mxu0
        %v425 = vpop.f32.mrf.mxu0
        %426 = vdwg.mxu0
        %v427 = vld [vmem:[#allocation2] sm:$0xff]
        %vm428 = vcmask 64512
        %v429 = vsel %vm428, %v422, -inf
        %430 = vmax.xlane.f32.xlu0 %v429
        %v431 = vpop.xlane.xlu0 %430
        %v432 = vmax.f32 %v427, %v431
        %v433 = vsub.f32 %v427, %v432
        %v434 = vmul.f32 %v433, 1.442695
        %v435 = vpow.pop %v434
        %437 = vset.pattern.permute.xlu0 0
        %438 = vperm.xlu0 %437, %v432
        %v439 = vpop.permute.xlu0 %438
        %v441 = vsub.f32 %v422, %v439
        %v442 = vmul.f32 %v441, 1.442695
        %v443 = vpow.pop %v442
        %v444 = vld [vmem:[#allocation3] sm:$0xff]
        %v445 = vmul.f32 %v435, %v444
        %v446 = vsel %vm428, %v443, 0.0
        %447 = vadd.xlane.f32.xlu0 %v446
        %v448 = vpop.xlane.xlu0 %447
        %v449 = vadd.f32 %v445, %v448
        %vm450 = vcmask 7168
        %451 = vst.msk [vmem:[#allocation3] sm:$0xff] %vm450, %v449
        %v452 = vld [vmem:[#allocation4] sm:$0xff]
        %454 = vset.pattern.permute.xlu0 0
        %455 = vperm.xlu0 %454, %v435
        %v456 = vpop.permute.xlu0 %455
        %v458 = vmul.f32 %v456, %v452
        %v459 = vpack.c.bf16 %v443, %v443
        %v461 = vsel %vm428, %v459, 0
        %vm463 = vcmask 1043456
        %v465 = vsel %vm463, %v379, 0
        %467 = vmatprep.subr.bf16.mxu0 0
        %468 = vmatpush1.bf16.msra.mxu0 0
        %469 = vmatprep.subr.bf16.mxu0 0
        %470 = vmatpush1.bf16.msra.mxu0 0
        %471 = vmatprep.subr.bf16.mxu0 0
        %472 = vmatpush1.bf16.msra.mxu0 0
        %473 = vmatprep.subr.bf16.mxu0 0
        %474 = vmatpush1.bf16.msra.mxu0 0
        %475 = vmatprep.subr.bf16.mxu0 0
        %476 = vmatpush1.bf16.msra.mxu0 0
        %477 = vmatprep.subr.bf16.mxu0 0
        %478 = vmatpush1.bf16.msra.mxu0 0
        %479 = vmatprep.subr.bf16.mxu0 0
        %480 = vmatpush1.bf16.msra.mxu0 0
        %481 = vmatprep.subr.bf16.mxu0 0
        %482 = vmatpush1.bf16.msra.mxu0 %v465
        %483 = vmatprep.subr.bf16.mxu0 0
        %484 = vmatpush2.bf16.msra.mxu0 0
        %485 = vmatprep.subr.bf16.mxu0 0
        %486 = vmatpush2.bf16.msra.mxu0 0
        %487 = vmatprep.subr.bf16.mxu0 0
        %488 = vmatpush2.bf16.msra.mxu0 0
        %489 = vmatprep.subr.bf16.mxu0 0
        %490 = vmatpush2.bf16.msra.mxu0 0
        %491 = vmatprep.subr.bf16.mxu0 0
        %492 = vmatpush2.bf16.msra.mxu0 0
        %493 = vmatprep.subr.bf16.mxu0 0
        %494 = vmatpush2.bf16.msra.mxu0 0
        %495 = vmatprep.subr.bf16.mxu0 0
        %496 = vmatpush2.bf16.msra.mxu0 0
        %497 = vmatprep.subr.bf16.mxu0 0
        %498 = vmatpush2.bf16.msra.mxu0 0
        %499 = vmatprep.mubr.bf16.mxu0 0
        %500 = vmatmul.mubr.bf16.gmra.mxu0 %v461
        %v501 = vpop.f32.mrf.mxu0
        %v502 = vadd.f32 0.0, %v501
        %v503 = vpop.f32.mrf.mxu0
        %v504 = vpop.f32.mrf.mxu0
        %v505 = vpop.f32.mrf.mxu0
        %506 = vdwg.mxu0
        %v507 = vadd.f32 %v458, %v502
        %508 = vst.msk [vmem:[#allocation4] sm:$0xff] %vm380, %v507
        %509 = vst.msk [vmem:[#allocation2] sm:$0xff] %vm450, %v432
        %v511 = vunpack.c.l.b16 %v377
        %v512 = vpack.c.b16 %v511, %v511
        %513 = vrot.lane.b32.xlu0 %v512, 112
        %v514 = vpop.permute.xlu0 %513
        %v516 = vunpack.c.l.b16 %v378
        %v517 = vpack.c.b16 %v516, %v516
        %518 = vrot.lane.b32.xlu0 %v517, 112
        %v519 = vpop.permute.xlu0 %518
        %v521 = vsel %vm380, %v514, 0
        %v524 = vsel %vm380, %v519, 0
        %526 = vmatprep.subr.bf16.mxu0 0
        %527 = vmatpush1.bf16.xpose.msra.mxu0 0
        %528 = vmatprep.subr.bf16.mxu0 0
        %529 = vmatpush1.bf16.xpose.msra.mxu0 0
        %530 = vmatprep.subr.bf16.mxu0 0
        %531 = vmatpush1.bf16.xpose.msra.mxu0 0
        %532 = vmatprep.subr.bf16.mxu0 0
        %533 = vmatpush1.bf16.xpose.msra.mxu0 0
        %534 = vmatprep.subr.bf16.mxu0 0
        %535 = vmatpush1.bf16.xpose.msra.mxu0 0
        %536 = vmatprep.subr.bf16.mxu0 0
        %537 = vmatpush1.bf16.xpose.msra.mxu0 0
        %538 = vmatprep.subr.bf16.mxu0 0
        %539 = vmatpush1.bf16.xpose.msra.mxu0 0
        %540 = vmatprep.subr.bf16.mxu0 0
        %541 = vmatpush1.bf16.xpose.msra.mxu0 %v524
        %542 = vmatprep.subr.bf16.mxu0 0
        %543 = vmatpush2.bf16.xpose.msra.mxu0 0
        %544 = vmatprep.subr.bf16.mxu0 0
        %545 = vmatpush2.bf16.xpose.msra.mxu0 0
        %546 = vmatprep.subr.bf16.mxu0 0
        %547 = vmatpush2.bf16.xpose.msra.mxu0 0
        %548 = vmatprep.subr.bf16.mxu0 0
        %549 = vmatpush2.bf16.xpose.msra.mxu0 0
        %550 = vmatprep.subr.bf16.mxu0 0
        %551 = vmatpush2.bf16.xpose.msra.mxu0 0
        %552 = vmatprep.subr.bf16.mxu0 0
        %553 = vmatpush2.bf16.xpose.msra.mxu0 0
        %554 = vmatprep.subr.bf16.mxu0 0
        %555 = vmatpush2.bf16.xpose.msra.mxu0 0
        %556 = vmatprep.subr.bf16.mxu0 0
        %557 = vmatpush2.bf16.xpose.msra.mxu0 0
        %558 = vmatprep.mubr.bf16.mxu0 0
        %559 = vmatmul.mubr.bf16.gmra.mxu0 %v521
        %v560 = vpop.f32.mrf.mxu0
        %v561 = vadd.f32 0.0, %v560
        %v562 = vpop.f32.mrf.mxu0
        %v563 = vpop.f32.mrf.mxu0
        %v564 = vpop.f32.mrf.mxu0
        %565 = vdwg.mxu0
        %s566 = scalar_lea.vmem [#allocation2], 8
        %v567 = vld [vmem:[%s566] sm:$0xff]
        %v568 = vsel %vm428, %v561, -inf
        %569 = vmax.xlane.f32.xlu0 %v568
        %v570 = vpop.xlane.xlu0 %569
        %v571 = vmax.f32 %v567, %v570
        %v572 = vsub.f32 %v567, %v571
        %v573 = vmul.f32 %v572, 1.442695
        %v574 = vpow.pop %v573
        %576 = vset.pattern.permute.xlu0 0
        %577 = vperm.xlu0 %576, %v571
        %v578 = vpop.permute.xlu0 %577
        %v580 = vsub.f32 %v561, %v578
        %v581 = vmul.f32 %v580, 1.442695
        %v582 = vpow.pop %v581
        %s583 = scalar_lea.vmem [#allocation3], 8
        %v584 = vld [vmem:[%s583] sm:$0xff]
        %v585 = vmul.f32 %v574, %v584
        %v586 = vsel %vm428, %v582, 0.0
        %587 = vadd.xlane.f32.xlu0 %v586
        %v588 = vpop.xlane.xlu0 %587
        %v589 = vadd.f32 %v585, %v588
        %590 = vst.msk [vmem:[%s583] sm:$0xff] %vm450, %v589
        %s591 = scalar_lea.vmem [#allocation4], 8
        %v592 = vld [vmem:[%s591] sm:$0xff]
        %594 = vset.pattern.permute.xlu0 0
        %595 = vperm.xlu0 %594, %v574
        %v596 = vpop.permute.xlu0 %595
        %v598 = vmul.f32 %v596, %v592
        %v599 = vpack.c.bf16 %v582, %v582
        %v601 = vunpack.c.l.b16 %v379
        %v602 = vpack.c.b16 %v601, %v601
        %603 = vrot.lane.b32.xlu0 %v602, 112
        %v604 = vpop.permute.xlu0 %603
        %v606 = vsel %vm428, %v599, 0
        %v609 = vsel %vm463, %v604, 0
        %611 = vmatprep.subr.bf16.mxu0 0
        %612 = vmatpush1.bf16.msra.mxu0 0
        %613 = vmatprep.subr.bf16.mxu0 0
        %614 = vmatpush1.bf16.msra.mxu0 0
        %615 = vmatprep.subr.bf16.mxu0 0
        %616 = vmatpush1.bf16.msra.mxu0 0
        %617 = vmatprep.subr.bf16.mxu0 0
        %618 = vmatpush1.bf16.msra.mxu0 0
        %619 = vmatprep.subr.bf16.mxu0 0
        %620 = vmatpush1.bf16.msra.mxu0 0
        %621 = vmatprep.subr.bf16.mxu0 0
        %622 = vmatpush1.bf16.msra.mxu0 0
        %623 = vmatprep.subr.bf16.mxu0 0
        %624 = vmatpush1.bf16.msra.mxu0 0
        %625 = vmatprep.subr.bf16.mxu0 0
        %626 = vmatpush1.bf16.msra.mxu0 %v609
        %627 = vmatprep.subr.bf16.mxu0 0
        %628 = vmatpush2.bf16.msra.mxu0 0
        %629 = vmatprep.subr.bf16.mxu0 0
        %630 = vmatpush2.bf16.msra.mxu0 0
        %631 = vmatprep.subr.bf16.mxu0 0
        %632 = vmatpush2.bf16.msra.mxu0 0
        %633 = vmatprep.subr.bf16.mxu0 0
        %634 = vmatpush2.bf16.msra.mxu0 0
        %635 = vmatprep.subr.bf16.mxu0 0
        %636 = vmatpush2.bf16.msra.mxu0 0
        %637 = vmatprep.subr.bf16.mxu0 0
        %638 = vmatpush2.bf16.msra.mxu0 0
        %639 = vmatprep.subr.bf16.mxu0 0
        %640 = vmatpush2.bf16.msra.mxu0 0
        %641 = vmatprep.subr.bf16.mxu0 0
        %642 = vmatpush2.bf16.msra.mxu0 0
        %643 = vmatprep.mubr.bf16.mxu0 0
        %644 = vmatmul.mubr.bf16.gmra.mxu0 %v606
        %v645 = vpop.f32.mrf.mxu0
        %v646 = vadd.f32 0.0, %v645
        %v647 = vpop.f32.mrf.mxu0
        %v648 = vpop.f32.mrf.mxu0
        %v649 = vpop.f32.mrf.mxu0
        %650 = vdwg.mxu0
        %v651 = vadd.f32 %v598, %v646
        %652 = vst.msk [vmem:[%s591] sm:$0xff] %vm380, %v651
        %653 = vst.msk [vmem:[%s566] sm:$0xff] %vm450, %v571
      $region44: #{paraphrase_gpt_forward.8} parent=35 // pred_fallthru
        _
      %p654 = pneg %p374
      // Predicated region
      $region45: #{paraphrase_gpt_forward.8} parent=35 // pred_check
        _
      $region46: #{paraphrase_gpt_forward.8} parent=35 // pred_check_branch
        %656 = sbr.rel (%p374) target = $region48
      $region47: #{paraphrase_gpt_forward.8} parent=35 // pred_region
        %v657 = vld [vmem:[%s314] sm:$0xf]
        %v658 = vld [vmem:[%s323] sm:$0xf]
        %v659 = vld [vmem:[%s332] sm:$0xf]
        %v660 = vlaneseq
        %v661 = vshrl.u32 %v660, 7
        %v662 = vstv %s368
        %v663 = vadd.s32 %v662, %v661
        %v664 = vlaneseq
        %v665 = vand.u32 %v664, 127
        %v666 = vstv %s366
        %v667 = vadd.s32 %v666, %v665
        %vm668 = vcmp.le.s32.totalorder %v667, %v663
        %v669 = vld [vmem:[%s340] sm:$0x1]
        %vm670 = vcmp.gt.f32.partialorder %v669, 0.5
        %v671 = vsel %vm670, 1, 0
        %v672 = vlaneseq
        %v673 = vshrl.u32 %v672, 7
        %v674 = vsub.s32 0, %v673
        %v675 = vrot.slane %v671, %v674
        %vm676 = vcmp.eq.s32.totalorder %v675, 1
        %vm677 = vmand %vm668, %vm676
        %vm678 = vcmask 130048
        %v680 = vsel %vm678, %v657, 0
        %v683 = vsel %vm678, %v658, 0
        %685 = vmatprep.subr.bf16.mxu0 0
        %686 = vmatpush1.bf16.xpose.msra.mxu0 0
        %687 = vmatprep.subr.bf16.mxu0 0
        %688 = vmatpush1.bf16.xpose.msra.mxu0 0
        %689 = vmatprep.subr.bf16.mxu0 0
        %690 = vmatpush1.bf16.xpose.msra.mxu0 0
        %691 = vmatprep.subr.bf16.mxu0 0
        %692 = vmatpush1.bf16.xpose.msra.mxu0 0
        %693 = vmatprep.subr.bf16.mxu0 0
        %694 = vmatpush1.bf16.xpose.msra.mxu0 0
        %695 = vmatprep.subr.bf16.mxu0 0
        %696 = vmatpush1.bf16.xpose.msra.mxu0 0
        %697 = vmatprep.subr.bf16.mxu0 0
        %698 = vmatpush1.bf16.xpose.msra.mxu0 0
        %699 = vmatprep.subr.bf16.mxu0 0
        %700 = vmatpush1.bf16.xpose.msra.mxu0 %v683
        %701 = vmatprep.subr.bf16.mxu0 0
        %702 = vmatpush2.bf16.xpose.msra.mxu0 0
        %703 = vmatprep.subr.bf16.mxu0 0
        %704 = vmatpush2.bf16.xpose.msra.mxu0 0
        %705 = vmatprep.subr.bf16.mxu0 0
        %706 = vmatpush2.bf16.xpose.msra.mxu0 0
        %707 = vmatprep.subr.bf16.mxu0 0
        %708 = vmatpush2.bf16.xpose.msra.mxu0 0
        %709 = vmatprep.subr.bf16.mxu0 0
        %710 = vmatpush2.bf16.xpose.msra.mxu0 0
        %711 = vmatprep.subr.bf16.mxu0 0
        %712 = vmatpush2.bf16.xpose.msra.mxu0 0
        %713 = vmatprep.subr.bf16.mxu0 0
        %714 = vmatpush2.bf16.xpose.msra.mxu0 0
        %715 = vmatprep.subr.bf16.mxu0 0
        %716 = vmatpush2.bf16.xpose.msra.mxu0 0
        %717 = vmatprep.mubr.bf16.mxu0 0
        %718 = vmatmul.mubr.bf16.gmra.mxu0 %v680
        %v719 = vpop.f32.mrf.mxu0
        %v720 = vadd.f32 0.0, %v719
        %v721 = vpop.f32.mrf.mxu0
        %v722 = vpop.f32.mrf.mxu0
        %v723 = vpop.f32.mrf.mxu0
        %724 = vdwg.mxu0
        %v725 = vsel %vm677, %v720, -1e+09
        %v726 = vld [vmem:[#allocation2] sm:$0xff]
        %vm727 = vcmask 64512
        %v728 = vsel %vm727, %v725, -inf
        %729 = vmax.xlane.f32.xlu0 %v728
        %v730 = vpop.xlane.xlu0 %729
        %v731 = vmax.f32 %v726, %v730
        %v732 = vsub.f32 %v726, %v731
        %v733 = vmul.f32 %v732, 1.442695
        %v734 = vpow.pop %v733
        %736 = vset.pattern.permute.xlu0 0
        %737 = vperm.xlu0 %736, %v731
        %v738 = vpop.permute.xlu0 %737
        %v740 = vsub.f32 %v725, %v738
        %v741 = vmul.f32 %v740, 1.442695
        %v742 = vpow.pop %v741
        %v743 = vld [vmem:[#allocation3] sm:$0xff]
        %v744 = vmul.f32 %v734, %v743
        %v745 = vsel %vm727, %v742, 0.0
        %746 = vadd.xlane.f32.xlu0 %v745
        %v747 = vpop.xlane.xlu0 %746
        %v748 = vadd.f32 %v744, %v747
        %vm749 = vcmask 7168
        %750 = vst.msk [vmem:[#allocation3] sm:$0xff] %vm749, %v748
        %v751 = vld [vmem:[#allocation4] sm:$0xff]
        %753 = vset.pattern.permute.xlu0 0
        %754 = vperm.xlu0 %753, %v734
        %v755 = vpop.permute.xlu0 %754
        %v757 = vmul.f32 %v755, %v751
        %v758 = vpack.c.bf16 %v742, %v742
        %v760 = vsel %vm727, %v758, 0
        %vm762 = vcmask 1043456
        %v764 = vsel %vm762, %v659, 0
        %766 = vmatprep.subr.bf16.mxu0 0
        %767 = vmatpush1.bf16.msra.mxu0 0
        %768 = vmatprep.subr.bf16.mxu0 0
        %769 = vmatpush1.bf16.msra.mxu0 0
        %770 = vmatprep.subr.bf16.mxu0 0
        %771 = vmatpush1.bf16.msra.mxu0 0
        %772 = vmatprep.subr.bf16.mxu0 0
        %773 = vmatpush1.bf16.msra.mxu0 0
        %774 = vmatprep.subr.bf16.mxu0 0
        %775 = vmatpush1.bf16.msra.mxu0 0
        %776 = vmatprep.subr.bf16.mxu0 0
        %777 = vmatpush1.bf16.msra.mxu0 0
        %778 = vmatprep.subr.bf16.mxu0 0
        %779 = vmatpush1.bf16.msra.mxu0 0
        %780 = vmatprep.subr.bf16.mxu0 0
        %781 = vmatpush1.bf16.msra.mxu0 %v764
        %782 = vmatprep.subr.bf16.mxu0 0
        %783 = vmatpush2.bf16.msra.mxu0 0
        %784 = vmatprep.subr.bf16.mxu0 0
        %785 = vmatpush2.bf16.msra.mxu0 0
        %786 = vmatprep.subr.bf16.mxu0 0
        %787 = vmatpush2.bf16.msra.mxu0 0
        %788 = vmatprep.subr.bf16.mxu0 0
        %789 = vmatpush2.bf16.msra.mxu0 0
        %790 = vmatprep.subr.bf16.mxu0 0
        %791 = vmatpush2.bf16.msra.mxu0 0
        %792 = vmatprep.subr.bf16.mxu0 0
        %793 = vmatpush2.bf16.msra.mxu0 0
        %794 = vmatprep.subr.bf16.mxu0 0
        %795 = vmatpush2.bf16.msra.mxu0 0
        %796 = vmatprep.subr.bf16.mxu0 0
        %797 = vmatpush2.bf16.msra.mxu0 0
        %798 = vmatprep.mubr.bf16.mxu0 0
        %799 = vmatmul.mubr.bf16.gmra.mxu0 %v760
        %v800 = vpop.f32.mrf.mxu0
        %v801 = vadd.f32 0.0, %v800
        %v802 = vpop.f32.mrf.mxu0
        %v803 = vpop.f32.mrf.mxu0
        %v804 = vpop.f32.mrf.mxu0
        %805 = vdwg.mxu0
        %v806 = vadd.f32 %v757, %v801
        %807 = vst.msk [vmem:[#allocation4] sm:$0xff] %vm678, %v806
        %808 = vst.msk [vmem:[#allocation2] sm:$0xff] %vm749, %v731
        %v810 = vunpack.c.l.b16 %v657
        %v811 = vpack.c.b16 %v810, %v810
        %812 = vrot.lane.b32.xlu0 %v811, 112
        %v813 = vpop.permute.xlu0 %812
        %v815 = vunpack.c.l.b16 %v658
        %v816 = vpack.c.b16 %v815, %v815
        %817 = vrot.lane.b32.xlu0 %v816, 112
        %v818 = vpop.permute.xlu0 %817
        %v820 = vsel %vm678, %v813, 0
        %v823 = vsel %vm678, %v818, 0
        %825 = vmatprep.subr.bf16.mxu0 0
        %826 = vmatpush1.bf16.xpose.msra.mxu0 0
        %827 = vmatprep.subr.bf16.mxu0 0
        %828 = vmatpush1.bf16.xpose.msra.mxu0 0
        %829 = vmatprep.subr.bf16.mxu0 0
        %830 = vmatpush1.bf16.xpose.msra.mxu0 0
        %831 = vmatprep.subr.bf16.mxu0 0
        %832 = vmatpush1.bf16.xpose.msra.mxu0 0
        %833 = vmatprep.subr.bf16.mxu0 0
        %834 = vmatpush1.bf16.xpose.msra.mxu0 0
        %835 = vmatprep.subr.bf16.mxu0 0
        %836 = vmatpush1.bf16.xpose.msra.mxu0 0
        %837 = vmatprep.subr.bf16.mxu0 0
        %838 = vmatpush1.bf16.xpose.msra.mxu0 0
        %839 = vmatprep.subr.bf16.mxu0 0
        %840 = vmatpush1.bf16.xpose.msra.mxu0 %v823
        %841 = vmatprep.subr.bf16.mxu0 0
        %842 = vmatpush2.bf16.xpose.msra.mxu0 0
        %843 = vmatprep.subr.bf16.mxu0 0
        %844 = vmatpush2.bf16.xpose.msra.mxu0 0
        %845 = vmatprep.subr.bf16.mxu0 0
        %846 = vmatpush2.bf16.xpose.msra.mxu0 0
        %847 = vmatprep.subr.bf16.mxu0 0
        %848 = vmatpush2.bf16.xpose.msra.mxu0 0
        %849 = vmatprep.subr.bf16.mxu0 0
        %850 = vmatpush2.bf16.xpose.msra.mxu0 0
        %851 = vmatprep.subr.bf16.mxu0 0
        %852 = vmatpush2.bf16.xpose.msra.mxu0 0
        %853 = vmatprep.subr.bf16.mxu0 0
        %854 = vmatpush2.bf16.xpose.msra.mxu0 0
        %855 = vmatprep.subr.bf16.mxu0 0
        %856 = vmatpush2.bf16.xpose.msra.mxu0 0
        %857 = vmatprep.mubr.bf16.mxu0 0
        %858 = vmatmul.mubr.bf16.gmra.mxu0 %v820
        %v859 = vpop.f32.mrf.mxu0
        %v860 = vadd.f32 0.0, %v859
        %v861 = vpop.f32.mrf.mxu0
        %v862 = vpop.f32.mrf.mxu0
        %v863 = vpop.f32.mrf.mxu0
        %864 = vdwg.mxu0
        %v865 = vsel %vm677, %v860, -1e+09
        %s866 = scalar_lea.vmem [#allocation2], 8
        %v867 = vld [vmem:[%s866] sm:$0xff]
        %v868 = vsel %vm727, %v865, -inf
        %869 = vmax.xlane.f32.xlu0 %v868
        %v870 = vpop.xlane.xlu0 %869
        %v871 = vmax.f32 %v867, %v870
        %v872 = vsub.f32 %v867, %v871
        %v873 = vmul.f32 %v872, 1.442695
        %v874 = vpow.pop %v873
        %876 = vset.pattern.permute.xlu0 0
        %877 = vperm.xlu0 %876, %v871
        %v878 = vpop.permute.xlu0 %877
        %v880 = vsub.f32 %v865, %v878
        %v881 = vmul.f32 %v880, 1.442695
        %v882 = vpow.pop %v881
        %s883 = scalar_lea.vmem [#allocation3], 8
        %v884 = vld [vmem:[%s883] sm:$0xff]
        %v885 = vmul.f32 %v874, %v884
        %v886 = vsel %vm727, %v882, 0.0
        %887 = vadd.xlane.f32.xlu0 %v886
        %v888 = vpop.xlane.xlu0 %887
        %v889 = vadd.f32 %v885, %v888
        %890 = vst.msk [vmem:[%s883] sm:$0xff] %vm749, %v889
        %s891 = scalar_lea.vmem [#allocation4], 8
        %v892 = vld [vmem:[%s891] sm:$0xff]
        %894 = vset.pattern.permute.xlu0 0
        %895 = vperm.xlu0 %894, %v874
        %v896 = vpop.permute.xlu0 %895
        %v898 = vmul.f32 %v896, %v892
        %v899 = vpack.c.bf16 %v882, %v882
        %v901 = vunpack.c.l.b16 %v659
        %v902 = vpack.c.b16 %v901, %v901
        %903 = vrot.lane.b32.xlu0 %v902, 112
        %v904 = vpop.permute.xlu0 %903
        %v906 = vsel %vm727, %v899, 0
        %v909 = vsel %vm762, %v904, 0
        %911 = vmatprep.subr.bf16.mxu0 0
        %912 = vmatpush1.bf16.msra.mxu0 0
        %913 = vmatprep.subr.bf16.mxu0 0
        %914 = vmatpush1.bf16.msra.mxu0 0
        %915 = vmatprep.subr.bf16.mxu0 0
        %916 = vmatpush1.bf16.msra.mxu0 0
        %917 = vmatprep.subr.bf16.mxu0 0
        %918 = vmatpush1.bf16.msra.mxu0 0
        %919 = vmatprep.subr.bf16.mxu0 0
        %920 = vmatpush1.bf16.msra.mxu0 0
        %921 = vmatprep.subr.bf16.mxu0 0
        %922 = vmatpush1.bf16.msra.mxu0 0
        %923 = vmatprep.subr.bf16.mxu0 0
        %924 = vmatpush1.bf16.msra.mxu0 0
        %925 = vmatprep.subr.bf16.mxu0 0
        %926 = vmatpush1.bf16.msra.mxu0 %v909
        %927 = vmatprep.subr.bf16.mxu0 0
        %928 = vmatpush2.bf16.msra.mxu0 0
        %929 = vmatprep.subr.bf16.mxu0 0
        %930 = vmatpush2.bf16.msra.mxu0 0
        %931 = vmatprep.subr.bf16.mxu0 0
        %932 = vmatpush2.bf16.msra.mxu0 0
        %933 = vmatprep.subr.bf16.mxu0 0
        %934 = vmatpush2.bf16.msra.mxu0 0
        %935 = vmatprep.subr.bf16.mxu0 0
        %936 = vmatpush2.bf16.msra.mxu0 0
        %937 = vmatprep.subr.bf16.mxu0 0
        %938 = vmatpush2.bf16.msra.mxu0 0
        %939 = vmatprep.subr.bf16.mxu0 0
        %940 = vmatpush2.bf16.msra.mxu0 0
        %941 = vmatprep.subr.bf16.mxu0 0
        %942 = vmatpush2.bf16.msra.mxu0 0
        %943 = vmatprep.mubr.bf16.mxu0 0
        %944 = vmatmul.mubr.bf16.gmra.mxu0 %v906
        %v945 = vpop.f32.mrf.mxu0
        %v946 = vadd.f32 0.0, %v945
        %v947 = vpop.f32.mrf.mxu0
        %v948 = vpop.f32.mrf.mxu0
        %v949 = vpop.f32.mrf.mxu0
        %950 = vdwg.mxu0
        %v951 = vadd.f32 %v898, %v946
        %952 = vst.msk [vmem:[%s891] sm:$0xff] %vm678, %v951
        %953 = vst.msk [vmem:[%s866] sm:$0xff] %vm749, %v871
      $region48: #{paraphrase_gpt_forward.8} parent=35 // pred_fallthru
        _
      %s954 = sld [smem:[#allocation8 + %s33]]
      %p955 = scmp.eq.s32.totalorder %s954, 1
      // Predicated region
      $region49: #{paraphrase_gpt_forward.8} parent=35 // pred_check
        %p956 = pneg %p955
      $region50: #{paraphrase_gpt_forward.8} parent=35 // pred_check_branch
        %958 = sbr.rel (%p956) target = $region52
      $region51: #{paraphrase_gpt_forward.8} parent=35 // pred_region
        %v959 = vld [vmem:[#allocation4] sm:$0xff]
        %v960 = vld [vmem:[#allocation3] sm:$0xff]
        %962 = vset.pattern.permute.xlu0 0
        %963 = vperm.xlu0 %962, %v960
        %v964 = vpop.permute.xlu0 %963
        %v966 = vrcp.pop %v964
        %v967 = vmul.f32 %v959, %v966
        %s968 = scalar_lea.vmem [#allocation4], 8
        %v969 = vld [vmem:[%s968] sm:$0xff]
        %s970 = scalar_lea.vmem [#allocation3], 8
        %v971 = vld [vmem:[%s970] sm:$0xff]
        %973 = vset.pattern.permute.xlu0 0
        %974 = vperm.xlu0 %973, %v971
        %v975 = vpop.permute.xlu0 %974
        %v977 = vrcp.pop %v975
        %v978 = vmul.f32 %v969, %v977
        %980 = vrot.lane.b32.xlu0 %v978, 16
        %v981 = vpop.permute.xlu0 %980
        %vm983 = vcmask 130048
        %v984 = vsel %vm983, %v967, %v981
        %v985 = vpack.c.bf16 %v984, %v984
        %vm986 = vcmask 257024
        %987 = vst.msk [vmem:[%s349] sm:$0xf] %vm986, %v985
      $region52: #{paraphrase_gpt_forward.8} parent=35 // pred_fallthru
        _
      %s988 = sld [smem:[#allocation6 + %s33]]
      %p989 = scmp.lt.s32.totalorder %s32, 1
      %s990 = scalar_select %p989, %s32, 1
      %p991 = scmp.lt.s32.totalorder %s988, 0
      %s992 = scalar_select %p991, %s988, 0
      %s993 = sadd.s32 %s992, %s990
      %s994 = smul.addr %s993, 4
      %s995 = scalar_lea.vmem %s8, %s994
      // Predicated region
      $region53: #{paraphrase_gpt_forward.8} parent=35 // pred_check
        %p996 = pneg %p182
      $region54: #{paraphrase_gpt_forward.8} parent=35 // pred_check_branch
        %998 = sbr.rel (%p996) target = $region56
      $region55: #{paraphrase_gpt_forward.8} parent=35 // pred_region
        %s999 = sld [smem:[#allocation6 + %s33]]
      $region56: #{paraphrase_gpt_forward.8} parent=35 // pred_fallthru
        _
    $region36: #{paraphrase_gpt_forward.8} parent=5 // pred_fallthru
      _
    %p1000 = scmp.le.s32.totalorder 2, %s23
    // Predicated region
    $region57: #{paraphrase_gpt_forward.8} parent=5 // pred_check
      %p1001 = pneg %p1000
    $region58: #{paraphrase_gpt_forward.8} parent=5 // pred_check_branch
      %1003 = sbr.rel (%p1001) target = $region60
    $region59: #{paraphrase_gpt_forward.8} parent=5 // pred_region
      %s1004 = ssub.s32 %s23, 2
      // Predicated region
      $region61: #{paraphrase_gpt_forward.8} parent=59 // pred_check
        %p1005 = pneg %p188
      $region62: #{paraphrase_gpt_forward.8} parent=59 // pred_check_branch
        %1007 = sbr.rel (%p1005) target = $region64
      $region63: #{paraphrase_gpt_forward.8} parent=59 // pred_region
        %s1008 = sld [smem:[#allocation6 + %s35]]
        %p1009 = scmp.lt.s32.totalorder %s34, 1
        %s1010 = scalar_select %p1009, %s34, 1
        %p1011 = scmp.lt.s32.totalorder %s1008, 0
        %s1012 = scalar_select %p1011, %s1008, 0
        %s1013 = sadd.s32 %s1012, %s1010
        %s1014 = smul.addr %s1013, 4
        %s1015 = scalar_lea.vmem %s8, %s1014
      $region64: #{paraphrase_gpt_forward.8} parent=59 // pred_fallthru
        _
    $region60: #{paraphrase_gpt_forward.8} parent=5 // pred_fallthru
      _
  $region6: #{paraphrase_gpt_forward.8} parent=0 // loop_footer
    %s27 = sadd.s32 1, %s23
  $region7: #{paraphrase_gpt_forward.8} parent=0 // loop_footer_branch
    %22 = sbr.rel target = $region3
  $region8: #{paraphrase_gpt_forward.8} parent=0 // loop_exit
    _

</llo_original>
